<compile_context>
chip_gen: v7x
topology: tpu7x:2x2x1
jax: 0.10.0
libtpu: 0.0.40
codegen_flags: <defaults>
</compile_context>

<pallas_src>
import jax
import jax.numpy as jnp
from jax import lax
from jax.experimental import pallas as pl
from jax.experimental.pallas import tpu as pltpu

LANE = 128  # TPU lane width


def fold_params(embed_table, w1, b1, w2, b2):
    """One-time weight transform (would be precomputed offline in deployment).

    embed_table: (V, E) f32
    w1: (S*E, H) f32  (PyTorch Linear weight transposed), b1: (H,)
    w2: (H, C)  f32,                                       b2: (C,)
    Returns:
      p2      : (VP, S*C) f32, VP = V rounded up to 128.  p2[v, s*C + c] is the
                contribution of token v at position s to logit c.
      b_fused : (1, C) f32
    """
    V, E = embed_table.shape
    SE, H = w1.shape
    C = w2.shape[1]
    S = SE // E

    # Fold the two bias-Linears (no activation between them in BasicModel.forward).
    w_fused = w1 @ w2                              # (S*E, C)
    b_fused = b1 @ w2 + b2                         # (C,)

    # Fold the embedding table in, per position.
    wf3 = w_fused.reshape(S, E, C)                 # (S, E, C)
    p = jnp.einsum("ve,sec->vsc", embed_table, wf3)  # (V, S, C)

    vp = ((V + LANE - 1) // LANE) * LANE
    p = jnp.pad(p, ((0, vp - V), (0, 0), (0, 0)))  # (VP, S, C), zero rows for pad ids
    p2 = p.reshape(vp, S * C)                      # (VP, S*C) — lane-friendly 2D layout
    return p2, b_fused.reshape(1, C)


def _make_kernel(B, S, C, VP):
    def kernel(tok_ref, p_ref, b_ref, o_ref):
        # tok_ref: (B, S) int32 | p_ref: (VP, S*C) f32 | b_ref: (1, C) f32 | o_ref: (B, C)
        lane_idx = lax.broadcasted_iota(jnp.int32, (B, VP), 1)   # (B, VP)
        acc = jnp.zeros((B, C), dtype=jnp.float32)
        for s in range(S):  # unrolled: S small, each step is one tiny MXU matmul
            tok_s = tok_ref[:, s:s + 1]                          # (B, 1) int32
            onehot = (tok_s == lane_idx).astype(jnp.float32)     # (B, VP) one-hot gather
            p_s = p_ref[:, s * C:(s + 1) * C]                    # (VP, C)
            acc = acc + jnp.dot(onehot, p_s,
                                preferred_element_type=jnp.float32)
        o_ref[...] = (acc + b_ref[...]).astype(o_ref.dtype)
    return kernel


def basic_model_forward(tokens, p2, b_fused):
    """tokens: (B, S) int32; p2/b_fused from fold_params. Returns logits (B, C) f32."""
    B, S = tokens.shape
    VP, SC = p2.shape
    C = b_fused.shape[1]
    assert SC == S * C

    kernel = _make_kernel(B, S, C, VP)
    vmem = pl.BlockSpec(memory_space=pltpu.MemorySpace.VMEM)
    return pl.pallas_call(
        kernel,
        out_shape=jax.ShapeDtypeStruct((B, C), jnp.float32),
        in_specs=[vmem, vmem, vmem],     # whole arrays in VMEM, no grid / no pipeline
        out_specs=vmem,
    )(tokens, p2, b_fused)


if __name__ == "__main__":
    # Small, deterministic configuration consistent with the module
    # (forward implies seq_len = 50 via embed_dim * 50).
    n_vocab = 100
    embed_dim = 32
    seq_len = 50
    hidden_dim = 128
    n_classes = 2
    batch = 8

    key = jax.random.PRNGKey(0)
    k_tok, k_emb, k_w1, k_b1, k_w2, k_b2 = jax.random.split(key, 6)

    tokens = jax.random.randint(k_tok, (batch, seq_len), 0, n_vocab, dtype=jnp.int32)
    embed_table = jax.random.normal(k_emb, (n_vocab, embed_dim), dtype=jnp.float32) * 0.1
    w1 = jax.random.normal(k_w1, (embed_dim * seq_len, hidden_dim), dtype=jnp.float32) * 0.02
    b1 = jax.random.normal(k_b1, (hidden_dim,), dtype=jnp.float32) * 0.01
    w2 = jax.random.normal(k_w2, (hidden_dim, n_classes), dtype=jnp.float32) * 0.02
    b2 = jax.random.normal(k_b2, (n_classes,), dtype=jnp.float32) * 0.01

    # One-time weight folding, then the fused Pallas forward.
    p2, b_fused = fold_params(embed_table, w1, b1, w2, b2)
    logits = basic_model_forward(tokens, p2, b_fused)
    jax.block_until_ready(logits)

    # Pure-JAX reference with the ORIGINAL (unfused) forward semantics.
    ref = jnp.take(embed_table, tokens, axis=0).reshape(batch, -1)
    ref = ref @ w1 + b1
    ref = ref @ w2 + b2

    assert logits.shape == (batch, n_classes)
    max_err = float(jnp.max(jnp.abs(logits - ref)))
    assert jnp.allclose(logits, ref, atol=1e-4, rtol=1e-4), max_err

    print("KERNEL_OK")
</pallas_src>

<mosaic_0001>
module attributes {stable_mosaic.version = 11 : i64} {
  func.func @kernel(%arg0: memref<8x50xi32, #tpu.memory_space<vmem>>, %arg1: memref<128x100xf32, #tpu.memory_space<vmem>>, %arg2: memref<1x2xf32, #tpu.memory_space<vmem>>, %arg3: memref<8x2xf32, #tpu.memory_space<vmem>>) attributes {dimension_semantics = [], scalar_prefetch = 0 : i64, scratch_operands = 0 : i64, tpu.core_type = #tpu.core_type<tc>} {
    %0 = tpu.iota {dimensions = array<i32: 1>} : vector<8x128xi32>
    %cst = arith.constant 0.000000e+00 : f32
    %1 = vector.broadcast %cst : f32 to vector<8x2xf32>
    %c0 = arith.constant 0 : index
    %c0_0 = arith.constant 0 : index
    %2 = vector.load %arg0[%c0, %c0_0] : memref<8x50xi32, #tpu.memory_space<vmem>>, vector<8x1xi32>
    %3 = vector.broadcast %2 : vector<8x1xi32> to vector<8x128xi32>
    %4 = arith.cmpi eq, %3, %0 : vector<8x128xi32>
    %5 = arith.extui %4 : vector<8x128xi1> to vector<8x128xi32>
    %6 = arith.sitofp %5 : vector<8x128xi32> to vector<8x128xf32>
    %c0_1 = arith.constant 0 : index
    %c0_2 = arith.constant 0 : index
    %7 = vector.load %arg1[%c0_1, %c0_2] : memref<128x100xf32, #tpu.memory_space<vmem>>, vector<128x2xf32>
    %cst_3 = arith.constant dense<0.000000e+00> : vector<8x2xf32>
    %8 = tpu.matmul %6, %7, %cst_3 {dimension_numbers = #tpu.dot_dimension_numbers<[1], [0], [0], [1], [0, 0, 1, 1], [], []>} : vector<8x128xf32>, vector<128x2xf32>, vector<8x2xf32> -> vector<8x2xf32>
    %9 = arith.addf %1, %8 : vector<8x2xf32>
    %c0_4 = arith.constant 0 : index
    %c1 = arith.constant 1 : index
    %10 = vector.load %arg0[%c0_4, %c1] : memref<8x50xi32, #tpu.memory_space<vmem>>, vector<8x1xi32>
    %11 = vector.broadcast %10 : vector<8x1xi32> to vector<8x128xi32>
    %12 = arith.cmpi eq, %11, %0 : vector<8x128xi32>
    %13 = arith.extui %12 : vector<8x128xi1> to vector<8x128xi32>
    %14 = arith.sitofp %13 : vector<8x128xi32> to vector<8x128xf32>
    %c0_5 = arith.constant 0 : index
    %c2 = arith.constant 2 : index
    %15 = vector.load %arg1[%c0_5, %c2] : memref<128x100xf32, #tpu.memory_space<vmem>>, vector<128x2xf32>
    %cst_6 = arith.constant dense<0.000000e+00> : vector<8x2xf32>
    %16 = tpu.matmul %14, %15, %cst_6 {dimension_numbers = #tpu.dot_dimension_numbers<[1], [0], [0], [1], [0, 0, 1, 1], [], []>} : vector<8x128xf32>, vector<128x2xf32>, vector<8x2xf32> -> vector<8x2xf32>
    %17 = arith.addf %9, %16 : vector<8x2xf32>
    %c0_7 = arith.constant 0 : index
    %c2_8 = arith.constant 2 : index
    %18 = vector.load %arg0[%c0_7, %c2_8] : memref<8x50xi32, #tpu.memory_space<vmem>>, vector<8x1xi32>
    %19 = vector.broadcast %18 : vector<8x1xi32> to vector<8x128xi32>
    %20 = arith.cmpi eq, %19, %0 : vector<8x128xi32>
    %21 = arith.extui %20 : vector<8x128xi1> to vector<8x128xi32>
    %22 = arith.sitofp %21 : vector<8x128xi32> to vector<8x128xf32>
    %c0_9 = arith.constant 0 : index
    %c4 = arith.constant 4 : index
    %23 = vector.load %arg1[%c0_9, %c4] : memref<128x100xf32, #tpu.memory_space<vmem>>, vector<128x2xf32>
    %cst_10 = arith.constant dense<0.000000e+00> : vector<8x2xf32>
    %24 = tpu.matmul %22, %23, %cst_10 {dimension_numbers = #tpu.dot_dimension_numbers<[1], [0], [0], [1], [0, 0, 1, 1], [], []>} : vector<8x128xf32>, vector<128x2xf32>, vector<8x2xf32> -> vector<8x2xf32>
    %25 = arith.addf %17, %24 : vector<8x2xf32>
    %c0_11 = arith.constant 0 : index
    %c3 = arith.constant 3 : index
    %26 = vector.load %arg0[%c0_11, %c3] : memref<8x50xi32, #tpu.memory_space<vmem>>, vector<8x1xi32>
    %27 = vector.broadcast %26 : vector<8x1xi32> to vector<8x128xi32>
    %28 = arith.cmpi eq, %27, %0 : vector<8x128xi32>
    %29 = arith.extui %28 : vector<8x128xi1> to vector<8x128xi32>
    %30 = arith.sitofp %29 : vector<8x128xi32> to vector<8x128xf32>
    %c0_12 = arith.constant 0 : index
    %c6 = arith.constant 6 : index
    %31 = vector.load %arg1[%c0_12, %c6] : memref<128x100xf32, #tpu.memory_space<vmem>>, vector<128x2xf32>
    %cst_13 = arith.constant dense<0.000000e+00> : vector<8x2xf32>
    %32 = tpu.matmul %30, %31, %cst_13 {dimension_numbers = #tpu.dot_dimension_numbers<[1], [0], [0], [1], [0, 0, 1, 1], [], []>} : vector<8x128xf32>, vector<128x2xf32>, vector<8x2xf32> -> vector<8x2xf32>
    %33 = arith.addf %25, %32 : vector<8x2xf32>
    %c0_14 = arith.constant 0 : index
    %c4_15 = arith.constant 4 : index
    %34 = vector.load %arg0[%c0_14, %c4_15] : memref<8x50xi32, #tpu.memory_space<vmem>>, vector<8x1xi32>
    %35 = vector.broadcast %34 : vector<8x1xi32> to vector<8x128xi32>
    %36 = arith.cmpi eq, %35, %0 : vector<8x128xi32>
    %37 = arith.extui %36 : vector<8x128xi1> to vector<8x128xi32>
    %38 = arith.sitofp %37 : vector<8x128xi32> to vector<8x128xf32>
    %c0_16 = arith.constant 0 : index
    %c8 = arith.constant 8 : index
    %39 = vector.load %arg1[%c0_16, %c8] : memref<128x100xf32, #tpu.memory_space<vmem>>, vector<128x2xf32>
    %cst_17 = arith.constant dense<0.000000e+00> : vector<8x2xf32>
    %40 = tpu.matmul %38, %39, %cst_17 {dimension_numbers = #tpu.dot_dimension_numbers<[1], [0], [0], [1], [0, 0, 1, 1], [], []>} : vector<8x128xf32>, vector<128x2xf32>, vector<8x2xf32> -> vector<8x2xf32>
    %41 = arith.addf %33, %40 : vector<8x2xf32>
    %c0_18 = arith.constant 0 : index
    %c5 = arith.constant 5 : index
    %42 = vector.load %arg0[%c0_18, %c5] : memref<8x50xi32, #tpu.memory_space<vmem>>, vector<8x1xi32>
    %43 = vector.broadcast %42 : vector<8x1xi32> to vector<8x128xi32>
    %44 = arith.cmpi eq, %43, %0 : vector<8x128xi32>
    %45 = arith.extui %44 : vector<8x128xi1> to vector<8x128xi32>
    %46 = arith.sitofp %45 : vector<8x128xi32> to vector<8x128xf32>
    %c0_19 = arith.constant 0 : index
    %c10 = arith.constant 10 : index
    %47 = vector.load %arg1[%c0_19, %c10] : memref<128x100xf32, #tpu.memory_space<vmem>>, vector<128x2xf32>
    %cst_20 = arith.constant dense<0.000000e+00> : vector<8x2xf32>
    %48 = tpu.matmul %46, %47, %cst_20 {dimension_numbers = #tpu.dot_dimension_numbers<[1], [0], [0], [1], [0, 0, 1, 1], [], []>} : vector<8x128xf32>, vector<128x2xf32>, vector<8x2xf32> -> vector<8x2xf32>
    %49 = arith.addf %41, %48 : vector<8x2xf32>
    %c0_21 = arith.constant 0 : index
    %c6_22 = arith.constant 6 : index
    %50 = vector.load %arg0[%c0_21, %c6_22] : memref<8x50xi32, #tpu.memory_space<vmem>>, vector<8x1xi32>
    %51 = vector.broadcast %50 : vector<8x1xi32> to vector<8x128xi32>
    %52 = arith.cmpi eq, %51, %0 : vector<8x128xi32>
    %53 = arith.extui %52 : vector<8x128xi1> to vector<8x128xi32>
    %54 = arith.sitofp %53 : vector<8x128xi32> to vector<8x128xf32>
    %c0_23 = arith.constant 0 : index
    %c12 = arith.constant 12 : index
    %55 = vector.load %arg1[%c0_23, %c12] : memref<128x100xf32, #tpu.memory_space<vmem>>, vector<128x2xf32>
    %cst_24 = arith.constant dense<0.000000e+00> : vector<8x2xf32>
    %56 = tpu.matmul %54, %55, %cst_24 {dimension_numbers = #tpu.dot_dimension_numbers<[1], [0], [0], [1], [0, 0, 1, 1], [], []>} : vector<8x128xf32>, vector<128x2xf32>, vector<8x2xf32> -> vector<8x2xf32>
    %57 = arith.addf %49, %56 : vector<8x2xf32>
    %c0_25 = arith.constant 0 : index
    %c7 = arith.constant 7 : index
    %58 = vector.load %arg0[%c0_25, %c7] : memref<8x50xi32, #tpu.memory_space<vmem>>, vector<8x1xi32>
    %59 = vector.broadcast %58 : vector<8x1xi32> to vector<8x128xi32>
    %60 = arith.cmpi eq, %59, %0 : vector<8x128xi32>
    %61 = arith.extui %60 : vector<8x128xi1> to vector<8x128xi32>
    %62 = arith.sitofp %61 : vector<8x128xi32> to vector<8x128xf32>
    %c0_26 = arith.constant 0 : index
    %c14 = arith.constant 14 : index
    %63 = vector.load %arg1[%c0_26, %c14] : memref<128x100xf32, #tpu.memory_space<vmem>>, vector<128x2xf32>
    %cst_27 = arith.constant dense<0.000000e+00> : vector<8x2xf32>
    %64 = tpu.matmul %62, %63, %cst_27 {dimension_numbers = #tpu.dot_dimension_numbers<[1], [0], [0], [1], [0, 0, 1, 1], [], []>} : vector<8x128xf32>, vector<128x2xf32>, vector<8x2xf32> -> vector<8x2xf32>
    %65 = arith.addf %57, %64 : vector<8x2xf32>
    %c0_28 = arith.constant 0 : index
    %c8_29 = arith.constant 8 : index
    %66 = vector.load %arg0[%c0_28, %c8_29] : memref<8x50xi32, #tpu.memory_space<vmem>>, vector<8x1xi32>
    %67 = vector.broadcast %66 : vector<8x1xi32> to vector<8x128xi32>
    %68 = arith.cmpi eq, %67, %0 : vector<8x128xi32>
    %69 = arith.extui %68 : vector<8x128xi1> to vector<8x128xi32>
    %70 = arith.sitofp %69 : vector<8x128xi32> to vector<8x128xf32>
    %c0_30 = arith.constant 0 : index
    %c16 = arith.constant 16 : index
    %71 = vector.load %arg1[%c0_30, %c16] : memref<128x100xf32, #tpu.memory_space<vmem>>, vector<128x2xf32>
    %cst_31 = arith.constant dense<0.000000e+00> : vector<8x2xf32>
    %72 = tpu.matmul %70, %71, %cst_31 {dimension_numbers = #tpu.dot_dimension_numbers<[1], [0], [0], [1], [0, 0, 1, 1], [], []>} : vector<8x128xf32>, vector<128x2xf32>, vector<8x2xf32> -> vector<8x2xf32>
    %73 = arith.addf %65, %72 : vector<8x2xf32>
    %c0_32 = arith.constant 0 : index
    %c9 = arith.constant 9 : index
    %74 = vector.load %arg0[%c0_32, %c9] : memref<8x50xi32, #tpu.memory_space<vmem>>, vector<8x1xi32>
    %75 = vector.broadcast %74 : vector<8x1xi32> to vector<8x128xi32>
    %76 = arith.cmpi eq, %75, %0 : vector<8x128xi32>
    %77 = arith.extui %76 : vector<8x128xi1> to vector<8x128xi32>
    %78 = arith.sitofp %77 : vector<8x128xi32> to vector<8x128xf32>
    %c0_33 = arith.constant 0 : index
    %c18 = arith.constant 18 : index
    %79 = vector.load %arg1[%c0_33, %c18] : memref<128x100xf32, #tpu.memory_space<vmem>>, vector<128x2xf32>
    %cst_34 = arith.constant dense<0.000000e+00> : vector<8x2xf32>
    %80 = tpu.matmul %78, %79, %cst_34 {dimension_numbers = #tpu.dot_dimension_numbers<[1], [0], [0], [1], [0, 0, 1, 1], [], []>} : vector<8x128xf32>, vector<128x2xf32>, vector<8x2xf32> -> vector<8x2xf32>
    %81 = arith.addf %73, %80 : vector<8x2xf32>
    %c0_35 = arith.constant 0 : index
    %c10_36 = arith.constant 10 : index
    %82 = vector.load %arg0[%c0_35, %c10_36] : memref<8x50xi32, #tpu.memory_space<vmem>>, vector<8x1xi32>
    %83 = vector.broadcast %82 : vector<8x1xi32> to vector<8x128xi32>
    %84 = arith.cmpi eq, %83, %0 : vector<8x128xi32>
    %85 = arith.extui %84 : vector<8x128xi1> to vector<8x128xi32>
    %86 = arith.sitofp %85 : vector<8x128xi32> to vector<8x128xf32>
    %c0_37 = arith.constant 0 : index
    %c20 = arith.constant 20 : index
    %87 = vector.load %arg1[%c0_37, %c20] : memref<128x100xf32, #tpu.memory_space<vmem>>, vector<128x2xf32>
    %cst_38 = arith.constant dense<0.000000e+00> : vector<8x2xf32>
    %88 = tpu.matmul %86, %87, %cst_38 {dimension_numbers = #tpu.dot_dimension_numbers<[1], [0], [0], [1], [0, 0, 1, 1], [], []>} : vector<8x128xf32>, vector<128x2xf32>, vector<8x2xf32> -> vector<8x2xf32>
    %89 = arith.addf %81, %88 : vector<8x2xf32>
    %c0_39 = arith.constant 0 : index
    %c11 = arith.constant 11 : index
    %90 = vector.load %arg0[%c0_39, %c11] : memref<8x50xi32, #tpu.memory_space<vmem>>, vector<8x1xi32>
    %91 = vector.broadcast %90 : vector<8x1xi32> to vector<8x128xi32>
    %92 = arith.cmpi eq, %91, %0 : vector<8x128xi32>
    %93 = arith.extui %92 : vector<8x128xi1> to vector<8x128xi32>
    %94 = arith.sitofp %93 : vector<8x128xi32> to vector<8x128xf32>
    %c0_40 = arith.constant 0 : index
    %c22 = arith.constant 22 : index
    %95 = vector.load %arg1[%c0_40, %c22] : memref<128x100xf32, #tpu.memory_space<vmem>>, vector<128x2xf32>
    %cst_41 = arith.constant dense<0.000000e+00> : vector<8x2xf32>
    %96 = tpu.matmul %94, %95, %cst_41 {dimension_numbers = #tpu.dot_dimension_numbers<[1], [0], [0], [1], [0, 0, 1, 1], [], []>} : vector<8x128xf32>, vector<128x2xf32>, vector<8x2xf32> -> vector<8x2xf32>
    %97 = arith.addf %89, %96 : vector<8x2xf32>
    %c0_42 = arith.constant 0 : index
    %c12_43 = arith.constant 12 : index
    %98 = vector.load %arg0[%c0_42, %c12_43] : memref<8x50xi32, #tpu.memory_space<vmem>>, vector<8x1xi32>
    %99 = vector.broadcast %98 : vector<8x1xi32> to vector<8x128xi32>
    %100 = arith.cmpi eq, %99, %0 : vector<8x128xi32>
    %101 = arith.extui %100 : vector<8x128xi1> to vector<8x128xi32>
    %102 = arith.sitofp %101 : vector<8x128xi32> to vector<8x128xf32>
    %c0_44 = arith.constant 0 : index
    %c24 = arith.constant 24 : index
    %103 = vector.load %arg1[%c0_44, %c24] : memref<128x100xf32, #tpu.memory_space<vmem>>, vector<128x2xf32>
    %cst_45 = arith.constant dense<0.000000e+00> : vector<8x2xf32>
    %104 = tpu.matmul %102, %103, %cst_45 {dimension_numbers = #tpu.dot_dimension_numbers<[1], [0], [0], [1], [0, 0, 1, 1], [], []>} : vector<8x128xf32>, vector<128x2xf32>, vector<8x2xf32> -> vector<8x2xf32>
    %105 = arith.addf %97, %104 : vector<8x2xf32>
    %c0_46 = arith.constant 0 : index
    %c13 = arith.constant 13 : index
    %106 = vector.load %arg0[%c0_46, %c13] : memref<8x50xi32, #tpu.memory_space<vmem>>, vector<8x1xi32>
    %107 = vector.broadcast %106 : vector<8x1xi32> to vector<8x128xi32>
    %108 = arith.cmpi eq, %107, %0 : vector<8x128xi32>
    %109 = arith.extui %108 : vector<8x128xi1> to vector<8x128xi32>
    %110 = arith.sitofp %109 : vector<8x128xi32> to vector<8x128xf32>
    %c0_47 = arith.constant 0 : index
    %c26 = arith.constant 26 : index
    %111 = vector.load %arg1[%c0_47, %c26] : memref<128x100xf32, #tpu.memory_space<vmem>>, vector<128x2xf32>
    %cst_48 = arith.constant dense<0.000000e+00> : vector<8x2xf32>
    %112 = tpu.matmul %110, %111, %cst_48 {dimension_numbers = #tpu.dot_dimension_numbers<[1], [0], [0], [1], [0, 0, 1, 1], [], []>} : vector<8x128xf32>, vector<128x2xf32>, vector<8x2xf32> -> vector<8x2xf32>
    %113 = arith.addf %105, %112 : vector<8x2xf32>
    %c0_49 = arith.constant 0 : index
    %c14_50 = arith.constant 14 : index
    %114 = vector.load %arg0[%c0_49, %c14_50] : memref<8x50xi32, #tpu.memory_space<vmem>>, vector<8x1xi32>
    %115 = vector.broadcast %114 : vector<8x1xi32> to vector<8x128xi32>
    %116 = arith.cmpi eq, %115, %0 : vector<8x128xi32>
    %117 = arith.extui %116 : vector<8x128xi1> to vector<8x128xi32>
    %118 = arith.sitofp %117 : vector<8x128xi32> to vector<8x128xf32>
    %c0_51 = arith.constant 0 : index
    %c28 = arith.constant 28 : index
    %119 = vector.load %arg1[%c0_51, %c28] : memref<128x100xf32, #tpu.memory_space<vmem>>, vector<128x2xf32>
    %cst_52 = arith.constant dense<0.000000e+00> : vector<8x2xf32>
    %120 = tpu.matmul %118, %119, %cst_52 {dimension_numbers = #tpu.dot_dimension_numbers<[1], [0], [0], [1], [0, 0, 1, 1], [], []>} : vector<8x128xf32>, vector<128x2xf32>, vector<8x2xf32> -> vector<8x2xf32>
    %121 = arith.addf %113, %120 : vector<8x2xf32>
    %c0_53 = arith.constant 0 : index
    %c15 = arith.constant 15 : index
    %122 = vector.load %arg0[%c0_53, %c15] : memref<8x50xi32, #tpu.memory_space<vmem>>, vector<8x1xi32>
    %123 = vector.broadcast %122 : vector<8x1xi32> to vector<8x128xi32>
    %124 = arith.cmpi eq, %123, %0 : vector<8x128xi32>
    %125 = arith.extui %124 : vector<8x128xi1> to vector<8x128xi32>
    %126 = arith.sitofp %125 : vector<8x128xi32> to vector<8x128xf32>
    %c0_54 = arith.constant 0 : index
    %c30 = arith.constant 30 : index
    %127 = vector.load %arg1[%c0_54, %c30] : memref<128x100xf32, #tpu.memory_space<vmem>>, vector<128x2xf32>
    %cst_55 = arith.constant dense<0.000000e+00> : vector<8x2xf32>
    %128 = tpu.matmul %126, %127, %cst_55 {dimension_numbers = #tpu.dot_dimension_numbers<[1], [0], [0], [1], [0, 0, 1, 1], [], []>} : vector<8x128xf32>, vector<128x2xf32>, vector<8x2xf32> -> vector<8x2xf32>
    %129 = arith.addf %121, %128 : vector<8x2xf32>
    %c0_56 = arith.constant 0 : index
    %c16_57 = arith.constant 16 : index
    %130 = vector.load %arg0[%c0_56, %c16_57] : memref<8x50xi32, #tpu.memory_space<vmem>>, vector<8x1xi32>
    %131 = vector.broadcast %130 : vector<8x1xi32> to vector<8x128xi32>
    %132 = arith.cmpi eq, %131, %0 : vector<8x128xi32>
    %133 = arith.extui %132 : vector<8x128xi1> to vector<8x128xi32>
    %134 = arith.sitofp %133 : vector<8x128xi32> to vector<8x128xf32>
    %c0_58 = arith.constant 0 : index
    %c32 = arith.constant 32 : index
    %135 = vector.load %arg1[%c0_58, %c32] : memref<128x100xf32, #tpu.memory_space<vmem>>, vector<128x2xf32>
    %cst_59 = arith.constant dense<0.000000e+00> : vector<8x2xf32>
    %136 = tpu.matmul %134, %135, %cst_59 {dimension_numbers = #tpu.dot_dimension_numbers<[1], [0], [0], [1], [0, 0, 1, 1], [], []>} : vector<8x128xf32>, vector<128x2xf32>, vector<8x2xf32> -> vector<8x2xf32>
    %137 = arith.addf %129, %136 : vector<8x2xf32>
    %c0_60 = arith.constant 0 : index
    %c17 = arith.constant 17 : index
    %138 = vector.load %arg0[%c0_60, %c17] : memref<8x50xi32, #tpu.memory_space<vmem>>, vector<8x1xi32>
    %139 = vector.broadcast %138 : vector<8x1xi32> to vector<8x128xi32>
    %140 = arith.cmpi eq, %139, %0 : vector<8x128xi32>
    %141 = arith.extui %140 : vector<8x128xi1> to vector<8x128xi32>
    %142 = arith.sitofp %141 : vector<8x128xi32> to vector<8x128xf32>
    %c0_61 = arith.constant 0 : index
    %c34 = arith.constant 34 : index
    %143 = vector.load %arg1[%c0_61, %c34] : memref<128x100xf32, #tpu.memory_space<vmem>>, vector<128x2xf32>
    %cst_62 = arith.constant dense<0.000000e+00> : vector<8x2xf32>
    %144 = tpu.matmul %142, %143, %cst_62 {dimension_numbers = #tpu.dot_dimension_numbers<[1], [0], [0], [1], [0, 0, 1, 1], [], []>} : vector<8x128xf32>, vector<128x2xf32>, vector<8x2xf32> -> vector<8x2xf32>
    %145 = arith.addf %137, %144 : vector<8x2xf32>
    %c0_63 = arith.constant 0 : index
    %c18_64 = arith.constant 18 : index
    %146 = vector.load %arg0[%c0_63, %c18_64] : memref<8x50xi32, #tpu.memory_space<vmem>>, vector<8x1xi32>
    %147 = vector.broadcast %146 : vector<8x1xi32> to vector<8x128xi32>
    %148 = arith.cmpi eq, %147, %0 : vector<8x128xi32>
    %149 = arith.extui %148 : vector<8x128xi1> to vector<8x128xi32>
    %150 = arith.sitofp %149 : vector<8x128xi32> to vector<8x128xf32>
    %c0_65 = arith.constant 0 : index
    %c36 = arith.constant 36 : index
    %151 = vector.load %arg1[%c0_65, %c36] : memref<128x100xf32, #tpu.memory_space<vmem>>, vector<128x2xf32>
    %cst_66 = arith.constant dense<0.000000e+00> : vector<8x2xf32>
    %152 = tpu.matmul %150, %151, %cst_66 {dimension_numbers = #tpu.dot_dimension_numbers<[1], [0], [0], [1], [0, 0, 1, 1], [], []>} : vector<8x128xf32>, vector<128x2xf32>, vector<8x2xf32> -> vector<8x2xf32>
    %153 = arith.addf %145, %152 : vector<8x2xf32>
    %c0_67 = arith.constant 0 : index
    %c19 = arith.constant 19 : index
    %154 = vector.load %arg0[%c0_67, %c19] : memref<8x50xi32, #tpu.memory_space<vmem>>, vector<8x1xi32>
    %155 = vector.broadcast %154 : vector<8x1xi32> to vector<8x128xi32>
    %156 = arith.cmpi eq, %155, %0 : vector<8x128xi32>
    %157 = arith.extui %156 : vector<8x128xi1> to vector<8x128xi32>
    %158 = arith.sitofp %157 : vector<8x128xi32> to vector<8x128xf32>
    %c0_68 = arith.constant 0 : index
    %c38 = arith.constant 38 : index
    %159 = vector.load %arg1[%c0_68, %c38] : memref<128x100xf32, #tpu.memory_space<vmem>>, vector<128x2xf32>
    %cst_69 = arith.constant dense<0.000000e+00> : vector<8x2xf32>
    %160 = tpu.matmul %158, %159, %cst_69 {dimension_numbers = #tpu.dot_dimension_numbers<[1], [0], [0], [1], [0, 0, 1, 1], [], []>} : vector<8x128xf32>, vector<128x2xf32>, vector<8x2xf32> -> vector<8x2xf32>
    %161 = arith.addf %153, %160 : vector<8x2xf32>
    %c0_70 = arith.constant 0 : index
    %c20_71 = arith.constant 20 : index
    %162 = vector.load %arg0[%c0_70, %c20_71] : memref<8x50xi32, #tpu.memory_space<vmem>>, vector<8x1xi32>
    %163 = vector.broadcast %162 : vector<8x1xi32> to vector<8x128xi32>
    %164 = arith.cmpi eq, %163, %0 : vector<8x128xi32>
    %165 = arith.extui %164 : vector<8x128xi1> to vector<8x128xi32>
    %166 = arith.sitofp %165 : vector<8x128xi32> to vector<8x128xf32>
    %c0_72 = arith.constant 0 : index
    %c40 = arith.constant 40 : index
    %167 = vector.load %arg1[%c0_72, %c40] : memref<128x100xf32, #tpu.memory_space<vmem>>, vector<128x2xf32>
    %cst_73 = arith.constant dense<0.000000e+00> : vector<8x2xf32>
    %168 = tpu.matmul %166, %167, %cst_73 {dimension_numbers = #tpu.dot_dimension_numbers<[1], [0], [0], [1], [0, 0, 1, 1], [], []>} : vector<8x128xf32>, vector<128x2xf32>, vector<8x2xf32> -> vector<8x2xf32>
    %169 = arith.addf %161, %168 : vector<8x2xf32>
    %c0_74 = arith.constant 0 : index
    %c21 = arith.constant 21 : index
    %170 = vector.load %arg0[%c0_74, %c21] : memref<8x50xi32, #tpu.memory_space<vmem>>, vector<8x1xi32>
    %171 = vector.broadcast %170 : vector<8x1xi32> to vector<8x128xi32>
    %172 = arith.cmpi eq, %171, %0 : vector<8x128xi32>
    %173 = arith.extui %172 : vector<8x128xi1> to vector<8x128xi32>
    %174 = arith.sitofp %173 : vector<8x128xi32> to vector<8x128xf32>
    %c0_75 = arith.constant 0 : index
    %c42 = arith.constant 42 : index
    %175 = vector.load %arg1[%c0_75, %c42] : memref<128x100xf32, #tpu.memory_space<vmem>>, vector<128x2xf32>
    %cst_76 = arith.constant dense<0.000000e+00> : vector<8x2xf32>
    %176 = tpu.matmul %174, %175, %cst_76 {dimension_numbers = #tpu.dot_dimension_numbers<[1], [0], [0], [1], [0, 0, 1, 1], [], []>} : vector<8x128xf32>, vector<128x2xf32>, vector<8x2xf32> -> vector<8x2xf32>
    %177 = arith.addf %169, %176 : vector<8x2xf32>
    %c0_77 = arith.constant 0 : index
    %c22_78 = arith.constant 22 : index
    %178 = vector.load %arg0[%c0_77, %c22_78] : memref<8x50xi32, #tpu.memory_space<vmem>>, vector<8x1xi32>
    %179 = vector.broadcast %178 : vector<8x1xi32> to vector<8x128xi32>
    %180 = arith.cmpi eq, %179, %0 : vector<8x128xi32>
    %181 = arith.extui %180 : vector<8x128xi1> to vector<8x128xi32>
    %182 = arith.sitofp %181 : vector<8x128xi32> to vector<8x128xf32>
    %c0_79 = arith.constant 0 : index
    %c44 = arith.constant 44 : index
    %183 = vector.load %arg1[%c0_79, %c44] : memref<128x100xf32, #tpu.memory_space<vmem>>, vector<128x2xf32>
    %cst_80 = arith.constant dense<0.000000e+00> : vector<8x2xf32>
    %184 = tpu.matmul %182, %183, %cst_80 {dimension_numbers = #tpu.dot_dimension_numbers<[1], [0], [0], [1], [0, 0, 1, 1], [], []>} : vector<8x128xf32>, vector<128x2xf32>, vector<8x2xf32> -> vector<8x2xf32>
    %185 = arith.addf %177, %184 : vector<8x2xf32>
    %c0_81 = arith.constant 0 : index
    %c23 = arith.constant 23 : index
    %186 = vector.load %arg0[%c0_81, %c23] : memref<8x50xi32, #tpu.memory_space<vmem>>, vector<8x1xi32>
    %187 = vector.broadcast %186 : vector<8x1xi32> to vector<8x128xi32>
    %188 = arith.cmpi eq, %187, %0 : vector<8x128xi32>
    %189 = arith.extui %188 : vector<8x128xi1> to vector<8x128xi32>
    %190 = arith.sitofp %189 : vector<8x128xi32> to vector<8x128xf32>
    %c0_82 = arith.constant 0 : index
    %c46 = arith.constant 46 : index
    %191 = vector.load %arg1[%c0_82, %c46] : memref<128x100xf32, #tpu.memory_space<vmem>>, vector<128x2xf32>
    %cst_83 = arith.constant dense<0.000000e+00> : vector<8x2xf32>
    %192 = tpu.matmul %190, %191, %cst_83 {dimension_numbers = #tpu.dot_dimension_numbers<[1], [0], [0], [1], [0, 0, 1, 1], [], []>} : vector<8x128xf32>, vector<128x2xf32>, vector<8x2xf32> -> vector<8x2xf32>
    %193 = arith.addf %185, %192 : vector<8x2xf32>
    %c0_84 = arith.constant 0 : index
    %c24_85 = arith.constant 24 : index
    %194 = vector.load %arg0[%c0_84, %c24_85] : memref<8x50xi32, #tpu.memory_space<vmem>>, vector<8x1xi32>
    %195 = vector.broadcast %194 : vector<8x1xi32> to vector<8x128xi32>
    %196 = arith.cmpi eq, %195, %0 : vector<8x128xi32>
    %197 = arith.extui %196 : vector<8x128xi1> to vector<8x128xi32>
    %198 = arith.sitofp %197 : vector<8x128xi32> to vector<8x128xf32>
    %c0_86 = arith.constant 0 : index
    %c48 = arith.constant 48 : index
    %199 = vector.load %arg1[%c0_86, %c48] : memref<128x100xf32, #tpu.memory_space<vmem>>, vector<128x2xf32>
    %cst_87 = arith.constant dense<0.000000e+00> : vector<8x2xf32>
    %200 = tpu.matmul %198, %199, %cst_87 {dimension_numbers = #tpu.dot_dimension_numbers<[1], [0], [0], [1], [0, 0, 1, 1], [], []>} : vector<8x128xf32>, vector<128x2xf32>, vector<8x2xf32> -> vector<8x2xf32>
    %201 = arith.addf %193, %200 : vector<8x2xf32>
    %c0_88 = arith.constant 0 : index
    %c25 = arith.constant 25 : index
    %202 = vector.load %arg0[%c0_88, %c25] : memref<8x50xi32, #tpu.memory_space<vmem>>, vector<8x1xi32>
    %203 = vector.broadcast %202 : vector<8x1xi32> to vector<8x128xi32>
    %204 = arith.cmpi eq, %203, %0 : vector<8x128xi32>
    %205 = arith.extui %204 : vector<8x128xi1> to vector<8x128xi32>
    %206 = arith.sitofp %205 : vector<8x128xi32> to vector<8x128xf32>
    %c0_89 = arith.constant 0 : index
    %c50 = arith.constant 50 : index
    %207 = vector.load %arg1[%c0_89, %c50] : memref<128x100xf32, #tpu.memory_space<vmem>>, vector<128x2xf32>
    %cst_90 = arith.constant dense<0.000000e+00> : vector<8x2xf32>
    %208 = tpu.matmul %206, %207, %cst_90 {dimension_numbers = #tpu.dot_dimension_numbers<[1], [0], [0], [1], [0, 0, 1, 1], [], []>} : vector<8x128xf32>, vector<128x2xf32>, vector<8x2xf32> -> vector<8x2xf32>
    %209 = arith.addf %201, %208 : vector<8x2xf32>
    %c0_91 = arith.constant 0 : index
    %c26_92 = arith.constant 26 : index
    %210 = vector.load %arg0[%c0_91, %c26_92] : memref<8x50xi32, #tpu.memory_space<vmem>>, vector<8x1xi32>
    %211 = vector.broadcast %210 : vector<8x1xi32> to vector<8x128xi32>
    %212 = arith.cmpi eq, %211, %0 : vector<8x128xi32>
    %213 = arith.extui %212 : vector<8x128xi1> to vector<8x128xi32>
    %214 = arith.sitofp %213 : vector<8x128xi32> to vector<8x128xf32>
    %c0_93 = arith.constant 0 : index
    %c52 = arith.constant 52 : index
    %215 = vector.load %arg1[%c0_93, %c52] : memref<128x100xf32, #tpu.memory_space<vmem>>, vector<128x2xf32>
    %cst_94 = arith.constant dense<0.000000e+00> : vector<8x2xf32>
    %216 = tpu.matmul %214, %215, %cst_94 {dimension_numbers = #tpu.dot_dimension_numbers<[1], [0], [0], [1], [0, 0, 1, 1], [], []>} : vector<8x128xf32>, vector<128x2xf32>, vector<8x2xf32> -> vector<8x2xf32>
    %217 = arith.addf %209, %216 : vector<8x2xf32>
    %c0_95 = arith.constant 0 : index
    %c27 = arith.constant 27 : index
    %218 = vector.load %arg0[%c0_95, %c27] : memref<8x50xi32, #tpu.memory_space<vmem>>, vector<8x1xi32>
    %219 = vector.broadcast %218 : vector<8x1xi32> to vector<8x128xi32>
    %220 = arith.cmpi eq, %219, %0 : vector<8x128xi32>
    %221 = arith.extui %220 : vector<8x128xi1> to vector<8x128xi32>
    %222 = arith.sitofp %221 : vector<8x128xi32> to vector<8x128xf32>
    %c0_96 = arith.constant 0 : index
    %c54 = arith.constant 54 : index
    %223 = vector.load %arg1[%c0_96, %c54] : memref<128x100xf32, #tpu.memory_space<vmem>>, vector<128x2xf32>
    %cst_97 = arith.constant dense<0.000000e+00> : vector<8x2xf32>
    %224 = tpu.matmul %222, %223, %cst_97 {dimension_numbers = #tpu.dot_dimension_numbers<[1], [0], [0], [1], [0, 0, 1, 1], [], []>} : vector<8x128xf32>, vector<128x2xf32>, vector<8x2xf32> -> vector<8x2xf32>
    %225 = arith.addf %217, %224 : vector<8x2xf32>
    %c0_98 = arith.constant 0 : index
    %c28_99 = arith.constant 28 : index
    %226 = vector.load %arg0[%c0_98, %c28_99] : memref<8x50xi32, #tpu.memory_space<vmem>>, vector<8x1xi32>
    %227 = vector.broadcast %226 : vector<8x1xi32> to vector<8x128xi32>
    %228 = arith.cmpi eq, %227, %0 : vector<8x128xi32>
    %229 = arith.extui %228 : vector<8x128xi1> to vector<8x128xi32>
    %230 = arith.sitofp %229 : vector<8x128xi32> to vector<8x128xf32>
    %c0_100 = arith.constant 0 : index
    %c56 = arith.constant 56 : index
    %231 = vector.load %arg1[%c0_100, %c56] : memref<128x100xf32, #tpu.memory_space<vmem>>, vector<128x2xf32>
    %cst_101 = arith.constant dense<0.000000e+00> : vector<8x2xf32>
    %232 = tpu.matmul %230, %231, %cst_101 {dimension_numbers = #tpu.dot_dimension_numbers<[1], [0], [0], [1], [0, 0, 1, 1], [], []>} : vector<8x128xf32>, vector<128x2xf32>, vector<8x2xf32> -> vector<8x2xf32>
    %233 = arith.addf %225, %232 : vector<8x2xf32>
    %c0_102 = arith.constant 0 : index
    %c29 = arith.constant 29 : index
    %234 = vector.load %arg0[%c0_102, %c29] : memref<8x50xi32, #tpu.memory_space<vmem>>, vector<8x1xi32>
    %235 = vector.broadcast %234 : vector<8x1xi32> to vector<8x128xi32>
    %236 = arith.cmpi eq, %235, %0 : vector<8x128xi32>
    %237 = arith.extui %236 : vector<8x128xi1> to vector<8x128xi32>
    %238 = arith.sitofp %237 : vector<8x128xi32> to vector<8x128xf32>
    %c0_103 = arith.constant 0 : index
    %c58 = arith.constant 58 : index
    %239 = vector.load %arg1[%c0_103, %c58] : memref<128x100xf32, #tpu.memory_space<vmem>>, vector<128x2xf32>
    %cst_104 = arith.constant dense<0.000000e+00> : vector<8x2xf32>
    %240 = tpu.matmul %238, %239, %cst_104 {dimension_numbers = #tpu.dot_dimension_numbers<[1], [0], [0], [1], [0, 0, 1, 1], [], []>} : vector<8x128xf32>, vector<128x2xf32>, vector<8x2xf32> -> vector<8x2xf32>
    %241 = arith.addf %233, %240 : vector<8x2xf32>
    %c0_105 = arith.constant 0 : index
    %c30_106 = arith.constant 30 : index
    %242 = vector.load %arg0[%c0_105, %c30_106] : memref<8x50xi32, #tpu.memory_space<vmem>>, vector<8x1xi32>
    %243 = vector.broadcast %242 : vector<8x1xi32> to vector<8x128xi32>
    %244 = arith.cmpi eq, %243, %0 : vector<8x128xi32>
    %245 = arith.extui %244 : vector<8x128xi1> to vector<8x128xi32>
    %246 = arith.sitofp %245 : vector<8x128xi32> to vector<8x128xf32>
    %c0_107 = arith.constant 0 : index
    %c60 = arith.constant 60 : index
    %247 = vector.load %arg1[%c0_107, %c60] : memref<128x100xf32, #tpu.memory_space<vmem>>, vector<128x2xf32>
    %cst_108 = arith.constant dense<0.000000e+00> : vector<8x2xf32>
    %248 = tpu.matmul %246, %247, %cst_108 {dimension_numbers = #tpu.dot_dimension_numbers<[1], [0], [0], [1], [0, 0, 1, 1], [], []>} : vector<8x128xf32>, vector<128x2xf32>, vector<8x2xf32> -> vector<8x2xf32>
    %249 = arith.addf %241, %248 : vector<8x2xf32>
    %c0_109 = arith.constant 0 : index
    %c31 = arith.constant 31 : index
    %250 = vector.load %arg0[%c0_109, %c31] : memref<8x50xi32, #tpu.memory_space<vmem>>, vector<8x1xi32>
    %251 = vector.broadcast %250 : vector<8x1xi32> to vector<8x128xi32>
    %252 = arith.cmpi eq, %251, %0 : vector<8x128xi32>
    %253 = arith.extui %252 : vector<8x128xi1> to vector<8x128xi32>
    %254 = arith.sitofp %253 : vector<8x128xi32> to vector<8x128xf32>
    %c0_110 = arith.constant 0 : index
    %c62 = arith.constant 62 : index
    %255 = vector.load %arg1[%c0_110, %c62] : memref<128x100xf32, #tpu.memory_space<vmem>>, vector<128x2xf32>
    %cst_111 = arith.constant dense<0.000000e+00> : vector<8x2xf32>
    %256 = tpu.matmul %254, %255, %cst_111 {dimension_numbers = #tpu.dot_dimension_numbers<[1], [0], [0], [1], [0, 0, 1, 1], [], []>} : vector<8x128xf32>, vector<128x2xf32>, vector<8x2xf32> -> vector<8x2xf32>
    %257 = arith.addf %249, %256 : vector<8x2xf32>
    %c0_112 = arith.constant 0 : index
    %c32_113 = arith.constant 32 : index
    %258 = vector.load %arg0[%c0_112, %c32_113] : memref<8x50xi32, #tpu.memory_space<vmem>>, vector<8x1xi32>
    %259 = vector.broadcast %258 : vector<8x1xi32> to vector<8x128xi32>
    %260 = arith.cmpi eq, %259, %0 : vector<8x128xi32>
    %261 = arith.extui %260 : vector<8x128xi1> to vector<8x128xi32>
    %262 = arith.sitofp %261 : vector<8x128xi32> to vector<8x128xf32>
    %c0_114 = arith.constant 0 : index
    %c64 = arith.constant 64 : index
    %263 = vector.load %arg1[%c0_114, %c64] : memref<128x100xf32, #tpu.memory_space<vmem>>, vector<128x2xf32>
    %cst_115 = arith.constant dense<0.000000e+00> : vector<8x2xf32>
    %264 = tpu.matmul %262, %263, %cst_115 {dimension_numbers = #tpu.dot_dimension_numbers<[1], [0], [0], [1], [0, 0, 1, 1], [], []>} : vector<8x128xf32>, vector<128x2xf32>, vector<8x2xf32> -> vector<8x2xf32>
    %265 = arith.addf %257, %264 : vector<8x2xf32>
    %c0_116 = arith.constant 0 : index
    %c33 = arith.constant 33 : index
    %266 = vector.load %arg0[%c0_116, %c33] : memref<8x50xi32, #tpu.memory_space<vmem>>, vector<8x1xi32>
    %267 = vector.broadcast %266 : vector<8x1xi32> to vector<8x128xi32>
    %268 = arith.cmpi eq, %267, %0 : vector<8x128xi32>
    %269 = arith.extui %268 : vector<8x128xi1> to vector<8x128xi32>
    %270 = arith.sitofp %269 : vector<8x128xi32> to vector<8x128xf32>
    %c0_117 = arith.constant 0 : index
    %c66 = arith.constant 66 : index
    %271 = vector.load %arg1[%c0_117, %c66] : memref<128x100xf32, #tpu.memory_space<vmem>>, vector<128x2xf32>
    %cst_118 = arith.constant dense<0.000000e+00> : vector<8x2xf32>
    %272 = tpu.matmul %270, %271, %cst_118 {dimension_numbers = #tpu.dot_dimension_numbers<[1], [0], [0], [1], [0, 0, 1, 1], [], []>} : vector<8x128xf32>, vector<128x2xf32>, vector<8x2xf32> -> vector<8x2xf32>
    %273 = arith.addf %265, %272 : vector<8x2xf32>
    %c0_119 = arith.constant 0 : index
    %c34_120 = arith.constant 34 : index
    %274 = vector.load %arg0[%c0_119, %c34_120] : memref<8x50xi32, #tpu.memory_space<vmem>>, vector<8x1xi32>
    %275 = vector.broadcast %274 : vector<8x1xi32> to vector<8x128xi32>
    %276 = arith.cmpi eq, %275, %0 : vector<8x128xi32>
    %277 = arith.extui %276 : vector<8x128xi1> to vector<8x128xi32>
    %278 = arith.sitofp %277 : vector<8x128xi32> to vector<8x128xf32>
    %c0_121 = arith.constant 0 : index
    %c68 = arith.constant 68 : index
    %279 = vector.load %arg1[%c0_121, %c68] : memref<128x100xf32, #tpu.memory_space<vmem>>, vector<128x2xf32>
    %cst_122 = arith.constant dense<0.000000e+00> : vector<8x2xf32>
    %280 = tpu.matmul %278, %279, %cst_122 {dimension_numbers = #tpu.dot_dimension_numbers<[1], [0], [0], [1], [0, 0, 1, 1], [], []>} : vector<8x128xf32>, vector<128x2xf32>, vector<8x2xf32> -> vector<8x2xf32>
    %281 = arith.addf %273, %280 : vector<8x2xf32>
    %c0_123 = arith.constant 0 : index
    %c35 = arith.constant 35 : index
    %282 = vector.load %arg0[%c0_123, %c35] : memref<8x50xi32, #tpu.memory_space<vmem>>, vector<8x1xi32>
    %283 = vector.broadcast %282 : vector<8x1xi32> to vector<8x128xi32>
    %284 = arith.cmpi eq, %283, %0 : vector<8x128xi32>
    %285 = arith.extui %284 : vector<8x128xi1> to vector<8x128xi32>
    %286 = arith.sitofp %285 : vector<8x128xi32> to vector<8x128xf32>
    %c0_124 = arith.constant 0 : index
    %c70 = arith.constant 70 : index
    %287 = vector.load %arg1[%c0_124, %c70] : memref<128x100xf32, #tpu.memory_space<vmem>>, vector<128x2xf32>
    %cst_125 = arith.constant dense<0.000000e+00> : vector<8x2xf32>
    %288 = tpu.matmul %286, %287, %cst_125 {dimension_numbers = #tpu.dot_dimension_numbers<[1], [0], [0], [1], [0, 0, 1, 1], [], []>} : vector<8x128xf32>, vector<128x2xf32>, vector<8x2xf32> -> vector<8x2xf32>
    %289 = arith.addf %281, %288 : vector<8x2xf32>
    %c0_126 = arith.constant 0 : index
    %c36_127 = arith.constant 36 : index
    %290 = vector.load %arg0[%c0_126, %c36_127] : memref<8x50xi32, #tpu.memory_space<vmem>>, vector<8x1xi32>
    %291 = vector.broadcast %290 : vector<8x1xi32> to vector<8x128xi32>
    %292 = arith.cmpi eq, %291, %0 : vector<8x128xi32>
    %293 = arith.extui %292 : vector<8x128xi1> to vector<8x128xi32>
    %294 = arith.sitofp %293 : vector<8x128xi32> to vector<8x128xf32>
    %c0_128 = arith.constant 0 : index
    %c72 = arith.constant 72 : index
    %295 = vector.load %arg1[%c0_128, %c72] : memref<128x100xf32, #tpu.memory_space<vmem>>, vector<128x2xf32>
    %cst_129 = arith.constant dense<0.000000e+00> : vector<8x2xf32>
    %296 = tpu.matmul %294, %295, %cst_129 {dimension_numbers = #tpu.dot_dimension_numbers<[1], [0], [0], [1], [0, 0, 1, 1], [], []>} : vector<8x128xf32>, vector<128x2xf32>, vector<8x2xf32> -> vector<8x2xf32>
    %297 = arith.addf %289, %296 : vector<8x2xf32>
    %c0_130 = arith.constant 0 : index
    %c37 = arith.constant 37 : index
    %298 = vector.load %arg0[%c0_130, %c37] : memref<8x50xi32, #tpu.memory_space<vmem>>, vector<8x1xi32>
    %299 = vector.broadcast %298 : vector<8x1xi32> to vector<8x128xi32>
    %300 = arith.cmpi eq, %299, %0 : vector<8x128xi32>
    %301 = arith.extui %300 : vector<8x128xi1> to vector<8x128xi32>
    %302 = arith.sitofp %301 : vector<8x128xi32> to vector<8x128xf32>
    %c0_131 = arith.constant 0 : index
    %c74 = arith.constant 74 : index
    %303 = vector.load %arg1[%c0_131, %c74] : memref<128x100xf32, #tpu.memory_space<vmem>>, vector<128x2xf32>
    %cst_132 = arith.constant dense<0.000000e+00> : vector<8x2xf32>
    %304 = tpu.matmul %302, %303, %cst_132 {dimension_numbers = #tpu.dot_dimension_numbers<[1], [0], [0], [1], [0, 0, 1, 1], [], []>} : vector<8x128xf32>, vector<128x2xf32>, vector<8x2xf32> -> vector<8x2xf32>
    %305 = arith.addf %297, %304 : vector<8x2xf32>
    %c0_133 = arith.constant 0 : index
    %c38_134 = arith.constant 38 : index
    %306 = vector.load %arg0[%c0_133, %c38_134] : memref<8x50xi32, #tpu.memory_space<vmem>>, vector<8x1xi32>
    %307 = vector.broadcast %306 : vector<8x1xi32> to vector<8x128xi32>
    %308 = arith.cmpi eq, %307, %0 : vector<8x128xi32>
    %309 = arith.extui %308 : vector<8x128xi1> to vector<8x128xi32>
    %310 = arith.sitofp %309 : vector<8x128xi32> to vector<8x128xf32>
    %c0_135 = arith.constant 0 : index
    %c76 = arith.constant 76 : index
    %311 = vector.load %arg1[%c0_135, %c76] : memref<128x100xf32, #tpu.memory_space<vmem>>, vector<128x2xf32>
    %cst_136 = arith.constant dense<0.000000e+00> : vector<8x2xf32>
    %312 = tpu.matmul %310, %311, %cst_136 {dimension_numbers = #tpu.dot_dimension_numbers<[1], [0], [0], [1], [0, 0, 1, 1], [], []>} : vector<8x128xf32>, vector<128x2xf32>, vector<8x2xf32> -> vector<8x2xf32>
    %313 = arith.addf %305, %312 : vector<8x2xf32>
    %c0_137 = arith.constant 0 : index
    %c39 = arith.constant 39 : index
    %314 = vector.load %arg0[%c0_137, %c39] : memref<8x50xi32, #tpu.memory_space<vmem>>, vector<8x1xi32>
    %315 = vector.broadcast %314 : vector<8x1xi32> to vector<8x128xi32>
    %316 = arith.cmpi eq, %315, %0 : vector<8x128xi32>
    %317 = arith.extui %316 : vector<8x128xi1> to vector<8x128xi32>
    %318 = arith.sitofp %317 : vector<8x128xi32> to vector<8x128xf32>
    %c0_138 = arith.constant 0 : index
    %c78 = arith.constant 78 : index
    %319 = vector.load %arg1[%c0_138, %c78] : memref<128x100xf32, #tpu.memory_space<vmem>>, vector<128x2xf32>
    %cst_139 = arith.constant dense<0.000000e+00> : vector<8x2xf32>
    %320 = tpu.matmul %318, %319, %cst_139 {dimension_numbers = #tpu.dot_dimension_numbers<[1], [0], [0], [1], [0, 0, 1, 1], [], []>} : vector<8x128xf32>, vector<128x2xf32>, vector<8x2xf32> -> vector<8x2xf32>
    %321 = arith.addf %313, %320 : vector<8x2xf32>
    %c0_140 = arith.constant 0 : index
    %c40_141 = arith.constant 40 : index
    %322 = vector.load %arg0[%c0_140, %c40_141] : memref<8x50xi32, #tpu.memory_space<vmem>>, vector<8x1xi32>
    %323 = vector.broadcast %322 : vector<8x1xi32> to vector<8x128xi32>
    %324 = arith.cmpi eq, %323, %0 : vector<8x128xi32>
    %325 = arith.extui %324 : vector<8x128xi1> to vector<8x128xi32>
    %326 = arith.sitofp %325 : vector<8x128xi32> to vector<8x128xf32>
    %c0_142 = arith.constant 0 : index
    %c80 = arith.constant 80 : index
    %327 = vector.load %arg1[%c0_142, %c80] : memref<128x100xf32, #tpu.memory_space<vmem>>, vector<128x2xf32>
    %cst_143 = arith.constant dense<0.000000e+00> : vector<8x2xf32>
    %328 = tpu.matmul %326, %327, %cst_143 {dimension_numbers = #tpu.dot_dimension_numbers<[1], [0], [0], [1], [0, 0, 1, 1], [], []>} : vector<8x128xf32>, vector<128x2xf32>, vector<8x2xf32> -> vector<8x2xf32>
    %329 = arith.addf %321, %328 : vector<8x2xf32>
    %c0_144 = arith.constant 0 : index
    %c41 = arith.constant 41 : index
    %330 = vector.load %arg0[%c0_144, %c41] : memref<8x50xi32, #tpu.memory_space<vmem>>, vector<8x1xi32>
    %331 = vector.broadcast %330 : vector<8x1xi32> to vector<8x128xi32>
    %332 = arith.cmpi eq, %331, %0 : vector<8x128xi32>
    %333 = arith.extui %332 : vector<8x128xi1> to vector<8x128xi32>
    %334 = arith.sitofp %333 : vector<8x128xi32> to vector<8x128xf32>
    %c0_145 = arith.constant 0 : index
    %c82 = arith.constant 82 : index
    %335 = vector.load %arg1[%c0_145, %c82] : memref<128x100xf32, #tpu.memory_space<vmem>>, vector<128x2xf32>
    %cst_146 = arith.constant dense<0.000000e+00> : vector<8x2xf32>
    %336 = tpu.matmul %334, %335, %cst_146 {dimension_numbers = #tpu.dot_dimension_numbers<[1], [0], [0], [1], [0, 0, 1, 1], [], []>} : vector<8x128xf32>, vector<128x2xf32>, vector<8x2xf32> -> vector<8x2xf32>
    %337 = arith.addf %329, %336 : vector<8x2xf32>
    %c0_147 = arith.constant 0 : index
    %c42_148 = arith.constant 42 : index
    %338 = vector.load %arg0[%c0_147, %c42_148] : memref<8x50xi32, #tpu.memory_space<vmem>>, vector<8x1xi32>
    %339 = vector.broadcast %338 : vector<8x1xi32> to vector<8x128xi32>
    %340 = arith.cmpi eq, %339, %0 : vector<8x128xi32>
    %341 = arith.extui %340 : vector<8x128xi1> to vector<8x128xi32>
    %342 = arith.sitofp %341 : vector<8x128xi32> to vector<8x128xf32>
    %c0_149 = arith.constant 0 : index
    %c84 = arith.constant 84 : index
    %343 = vector.load %arg1[%c0_149, %c84] : memref<128x100xf32, #tpu.memory_space<vmem>>, vector<128x2xf32>
    %cst_150 = arith.constant dense<0.000000e+00> : vector<8x2xf32>
    %344 = tpu.matmul %342, %343, %cst_150 {dimension_numbers = #tpu.dot_dimension_numbers<[1], [0], [0], [1], [0, 0, 1, 1], [], []>} : vector<8x128xf32>, vector<128x2xf32>, vector<8x2xf32> -> vector<8x2xf32>
    %345 = arith.addf %337, %344 : vector<8x2xf32>
    %c0_151 = arith.constant 0 : index
    %c43 = arith.constant 43 : index
    %346 = vector.load %arg0[%c0_151, %c43] : memref<8x50xi32, #tpu.memory_space<vmem>>, vector<8x1xi32>
    %347 = vector.broadcast %346 : vector<8x1xi32> to vector<8x128xi32>
    %348 = arith.cmpi eq, %347, %0 : vector<8x128xi32>
    %349 = arith.extui %348 : vector<8x128xi1> to vector<8x128xi32>
    %350 = arith.sitofp %349 : vector<8x128xi32> to vector<8x128xf32>
    %c0_152 = arith.constant 0 : index
    %c86 = arith.constant 86 : index
    %351 = vector.load %arg1[%c0_152, %c86] : memref<128x100xf32, #tpu.memory_space<vmem>>, vector<128x2xf32>
    %cst_153 = arith.constant dense<0.000000e+00> : vector<8x2xf32>
    %352 = tpu.matmul %350, %351, %cst_153 {dimension_numbers = #tpu.dot_dimension_numbers<[1], [0], [0], [1], [0, 0, 1, 1], [], []>} : vector<8x128xf32>, vector<128x2xf32>, vector<8x2xf32> -> vector<8x2xf32>
    %353 = arith.addf %345, %352 : vector<8x2xf32>
    %c0_154 = arith.constant 0 : index
    %c44_155 = arith.constant 44 : index
    %354 = vector.load %arg0[%c0_154, %c44_155] : memref<8x50xi32, #tpu.memory_space<vmem>>, vector<8x1xi32>
    %355 = vector.broadcast %354 : vector<8x1xi32> to vector<8x128xi32>
    %356 = arith.cmpi eq, %355, %0 : vector<8x128xi32>
    %357 = arith.extui %356 : vector<8x128xi1> to vector<8x128xi32>
    %358 = arith.sitofp %357 : vector<8x128xi32> to vector<8x128xf32>
    %c0_156 = arith.constant 0 : index
    %c88 = arith.constant 88 : index
    %359 = vector.load %arg1[%c0_156, %c88] : memref<128x100xf32, #tpu.memory_space<vmem>>, vector<128x2xf32>
    %cst_157 = arith.constant dense<0.000000e+00> : vector<8x2xf32>
    %360 = tpu.matmul %358, %359, %cst_157 {dimension_numbers = #tpu.dot_dimension_numbers<[1], [0], [0], [1], [0, 0, 1, 1], [], []>} : vector<8x128xf32>, vector<128x2xf32>, vector<8x2xf32> -> vector<8x2xf32>
    %361 = arith.addf %353, %360 : vector<8x2xf32>
    %c0_158 = arith.constant 0 : index
    %c45 = arith.constant 45 : index
    %362 = vector.load %arg0[%c0_158, %c45] : memref<8x50xi32, #tpu.memory_space<vmem>>, vector<8x1xi32>
    %363 = vector.broadcast %362 : vector<8x1xi32> to vector<8x128xi32>
    %364 = arith.cmpi eq, %363, %0 : vector<8x128xi32>
    %365 = arith.extui %364 : vector<8x128xi1> to vector<8x128xi32>
    %366 = arith.sitofp %365 : vector<8x128xi32> to vector<8x128xf32>
    %c0_159 = arith.constant 0 : index
    %c90 = arith.constant 90 : index
    %367 = vector.load %arg1[%c0_159, %c90] : memref<128x100xf32, #tpu.memory_space<vmem>>, vector<128x2xf32>
    %cst_160 = arith.constant dense<0.000000e+00> : vector<8x2xf32>
    %368 = tpu.matmul %366, %367, %cst_160 {dimension_numbers = #tpu.dot_dimension_numbers<[1], [0], [0], [1], [0, 0, 1, 1], [], []>} : vector<8x128xf32>, vector<128x2xf32>, vector<8x2xf32> -> vector<8x2xf32>
    %369 = arith.addf %361, %368 : vector<8x2xf32>
    %c0_161 = arith.constant 0 : index
    %c46_162 = arith.constant 46 : index
    %370 = vector.load %arg0[%c0_161, %c46_162] : memref<8x50xi32, #tpu.memory_space<vmem>>, vector<8x1xi32>
    %371 = vector.broadcast %370 : vector<8x1xi32> to vector<8x128xi32>
    %372 = arith.cmpi eq, %371, %0 : vector<8x128xi32>
    %373 = arith.extui %372 : vector<8x128xi1> to vector<8x128xi32>
    %374 = arith.sitofp %373 : vector<8x128xi32> to vector<8x128xf32>
    %c0_163 = arith.constant 0 : index
    %c92 = arith.constant 92 : index
    %375 = vector.load %arg1[%c0_163, %c92] : memref<128x100xf32, #tpu.memory_space<vmem>>, vector<128x2xf32>
    %cst_164 = arith.constant dense<0.000000e+00> : vector<8x2xf32>
    %376 = tpu.matmul %374, %375, %cst_164 {dimension_numbers = #tpu.dot_dimension_numbers<[1], [0], [0], [1], [0, 0, 1, 1], [], []>} : vector<8x128xf32>, vector<128x2xf32>, vector<8x2xf32> -> vector<8x2xf32>
    %377 = arith.addf %369, %376 : vector<8x2xf32>
    %c0_165 = arith.constant 0 : index
    %c47 = arith.constant 47 : index
    %378 = vector.load %arg0[%c0_165, %c47] : memref<8x50xi32, #tpu.memory_space<vmem>>, vector<8x1xi32>
    %379 = vector.broadcast %378 : vector<8x1xi32> to vector<8x128xi32>
    %380 = arith.cmpi eq, %379, %0 : vector<8x128xi32>
    %381 = arith.extui %380 : vector<8x128xi1> to vector<8x128xi32>
    %382 = arith.sitofp %381 : vector<8x128xi32> to vector<8x128xf32>
    %c0_166 = arith.constant 0 : index
    %c94 = arith.constant 94 : index
    %383 = vector.load %arg1[%c0_166, %c94] : memref<128x100xf32, #tpu.memory_space<vmem>>, vector<128x2xf32>
    %cst_167 = arith.constant dense<0.000000e+00> : vector<8x2xf32>
    %384 = tpu.matmul %382, %383, %cst_167 {dimension_numbers = #tpu.dot_dimension_numbers<[1], [0], [0], [1], [0, 0, 1, 1], [], []>} : vector<8x128xf32>, vector<128x2xf32>, vector<8x2xf32> -> vector<8x2xf32>
    %385 = arith.addf %377, %384 : vector<8x2xf32>
    %c0_168 = arith.constant 0 : index
    %c48_169 = arith.constant 48 : index
    %386 = vector.load %arg0[%c0_168, %c48_169] : memref<8x50xi32, #tpu.memory_space<vmem>>, vector<8x1xi32>
    %387 = vector.broadcast %386 : vector<8x1xi32> to vector<8x128xi32>
    %388 = arith.cmpi eq, %387, %0 : vector<8x128xi32>
    %389 = arith.extui %388 : vector<8x128xi1> to vector<8x128xi32>
    %390 = arith.sitofp %389 : vector<8x128xi32> to vector<8x128xf32>
    %c0_170 = arith.constant 0 : index
    %c96 = arith.constant 96 : index
    %391 = vector.load %arg1[%c0_170, %c96] : memref<128x100xf32, #tpu.memory_space<vmem>>, vector<128x2xf32>
    %cst_171 = arith.constant dense<0.000000e+00> : vector<8x2xf32>
    %392 = tpu.matmul %390, %391, %cst_171 {dimension_numbers = #tpu.dot_dimension_numbers<[1], [0], [0], [1], [0, 0, 1, 1], [], []>} : vector<8x128xf32>, vector<128x2xf32>, vector<8x2xf32> -> vector<8x2xf32>
    %393 = arith.addf %385, %392 : vector<8x2xf32>
    %c0_172 = arith.constant 0 : index
    %c49 = arith.constant 49 : index
    %394 = vector.load %arg0[%c0_172, %c49] : memref<8x50xi32, #tpu.memory_space<vmem>>, vector<8x1xi32>
    %395 = vector.broadcast %394 : vector<8x1xi32> to vector<8x128xi32>
    %396 = arith.cmpi eq, %395, %0 : vector<8x128xi32>
    %397 = arith.extui %396 : vector<8x128xi1> to vector<8x128xi32>
    %398 = arith.sitofp %397 : vector<8x128xi32> to vector<8x128xf32>
    %c0_173 = arith.constant 0 : index
    %c98 = arith.constant 98 : index
    %399 = vector.load %arg1[%c0_173, %c98] : memref<128x100xf32, #tpu.memory_space<vmem>>, vector<128x2xf32>
    %cst_174 = arith.constant dense<0.000000e+00> : vector<8x2xf32>
    %400 = tpu.matmul %398, %399, %cst_174 {dimension_numbers = #tpu.dot_dimension_numbers<[1], [0], [0], [1], [0, 0, 1, 1], [], []>} : vector<8x128xf32>, vector<128x2xf32>, vector<8x2xf32> -> vector<8x2xf32>
    %401 = arith.addf %393, %400 : vector<8x2xf32>
    %c0_175 = arith.constant 0 : index
    %c0_176 = arith.constant 0 : index
    %402 = vector.load %arg2[%c0_175, %c0_176] : memref<1x2xf32, #tpu.memory_space<vmem>>, vector<1x2xf32>
    %403 = vector.broadcast %402 : vector<1x2xf32> to vector<8x2xf32>
    %404 = arith.addf %401, %403 : vector<8x2xf32>
    %c0_177 = arith.constant 0 : index
    %c0_178 = arith.constant 0 : index
    %405 = vector.load %arg3[%c0_177, %c0_178] : memref<8x2xf32, #tpu.memory_space<vmem>>, vector<8x2xf32>
    tpu.vector_store %arg3[%c0_177, %c0_178], %404 {strides = array<i32>} : memref<8x2xf32, #tpu.memory_space<vmem>>, vector<8x2xf32>,
    return
  }
}

</mosaic_0001>

<llo_original>
// kernel: tpu_custom_call.1
$region0: #{tpu_custom_call.1}
  #allocation0 [shape = 'u32[]', space=smem, size = 0x4, offset = 0x4, fixed_abs, tag = 'smem constant byte address 0x4 - core index']
  #allocation1 [shape = 'u32[144,128]{1,0:T(1,128)}', space=vmem, size = 0x12000, scoped, tag = 'internal scratch']
  %s0 = inlined_call_operand.vmem [shape: s32[8,50], index: 0, kind: input, shape index: {}]
  %s1 = inlined_call_operand.vmem [shape: f32[128,100], index: 1, kind: input, shape index: {}]
  %s2 = inlined_call_operand.vmem [shape: f32[1,2], index: 2, kind: input, shape index: {}]
  %s3 = inlined_call_operand.vmem [shape: f32[8,2], index: 3, kind: output, shape index: {}]
  %s4 = sld [smem:[#allocation0]]
  $region22: #{tpu_custom_call.1} parent=0
    _
  %s6 = ssub.s32 1, %s4
  %s7 = scalar_select 0, %s6, %s4
  // Predicated region
  $region2: #{tpu_custom_call.1} parent=0 // pred_check
    _
  $region3: #{tpu_custom_call.1} parent=0 // pred_check_branch
    %9 = sbr.rel (0) target = $region5
  $region4: #{tpu_custom_call.1} parent=0 // pred_region
    _
  $region5: #{tpu_custom_call.1} parent=0 // pred_fallthru
    _
  // Predicated region
  $region6: #{tpu_custom_call.1} parent=0 // pred_check
    _
  $region7: #{tpu_custom_call.1} parent=0 // pred_check_branch
    %11 = sbr.rel (0) target = $region9
  $region8: #{tpu_custom_call.1} parent=0 // pred_region
    _
  $region9: #{tpu_custom_call.1} parent=0 // pred_fallthru
    _
  // Predicated region
  $region10: #{tpu_custom_call.1} parent=0 // pred_check
    _
  $region11: #{tpu_custom_call.1} parent=0 // pred_check_branch
    %13 = sbr.rel (0) target = $region13
  $region12: #{tpu_custom_call.1} parent=0 // pred_region
    _
  $region13: #{tpu_custom_call.1} parent=0 // pred_fallthru
    _
  %v14 = vlaneseq
  %v15 = vand.u32 %v14, 127
  %v16 = vld [vmem:[%s0] sm:$0xff]
  %17 = vset.pattern.permute.xlu0 0
  %18 = vperm.xlu0 %17, %v16
  %v19 = vpop.permute.xlu0 %18
  %vm20 = vcmp.eq.s32.totalorder %v19, %v15
  %v21 = vsel %vm20, 1, 0
  %v22 = vcvt.s32.f32 %v21
  %v23 = vld [vmem:[%s1] sm:$0xff]
  %v24 = vld [vmem:[%s1 + $0x8] sm:$0xff]
  %v25 = vld [vmem:[%s1 + $0x10] sm:$0xff]
  %v26 = vld [vmem:[%s1 + $0x18] sm:$0xff]
  %v27 = vld [vmem:[%s1 + $0x20] sm:$0xff]
  %v28 = vld [vmem:[%s1 + $0x28] sm:$0xff]
  %v29 = vld [vmem:[%s1 + $0x30] sm:$0xff]
  %v30 = vld [vmem:[%s1 + $0x38] sm:$0xff]
  %v31 = vld [vmem:[%s1 + $0x40] sm:$0xff]
  %v32 = vld [vmem:[%s1 + $0x48] sm:$0xff]
  %v33 = vld [vmem:[%s1 + $0x50] sm:$0xff]
  %v34 = vld [vmem:[%s1 + $0x58] sm:$0xff]
  %v35 = vld [vmem:[%s1 + $0x60] sm:$0xff]
  %v36 = vld [vmem:[%s1 + $0x68] sm:$0xff]
  %v37 = vld [vmem:[%s1 + $0x70] sm:$0xff]
  %v38 = vld [vmem:[%s1 + $0x78] sm:$0xff]
  %39 = vset.pattern.permute.xlu0 1
  %40 = vperm.xlu0 %39, %v16
  %v41 = vpop.permute.xlu0 %40
  %vm42 = vcmp.eq.s32.totalorder %v41, %v15
  %v43 = vsel %vm42, 1, 0
  %v44 = vcvt.s32.f32 %v43
  %61 = vrot.lane.b32.xlu0 %v23, 126
  %v62 = vpop.permute.xlu0 %61
  %63 = vrot.lane.b32.xlu0 %v24, 126
  %v64 = vpop.permute.xlu0 %63
  %65 = vrot.lane.b32.xlu0 %v25, 126
  %v66 = vpop.permute.xlu0 %65
  %67 = vrot.lane.b32.xlu0 %v26, 126
  %v68 = vpop.permute.xlu0 %67
  %69 = vrot.lane.b32.xlu0 %v27, 126
  %v70 = vpop.permute.xlu0 %69
  %71 = vrot.lane.b32.xlu0 %v28, 126
  %v72 = vpop.permute.xlu0 %71
  %73 = vrot.lane.b32.xlu0 %v29, 126
  %v74 = vpop.permute.xlu0 %73
  %75 = vrot.lane.b32.xlu0 %v30, 126
  %v76 = vpop.permute.xlu0 %75
  %77 = vrot.lane.b32.xlu0 %v31, 126
  %v78 = vpop.permute.xlu0 %77
  %79 = vrot.lane.b32.xlu0 %v32, 126
  %v80 = vpop.permute.xlu0 %79
  %81 = vrot.lane.b32.xlu0 %v33, 126
  %v82 = vpop.permute.xlu0 %81
  %83 = vrot.lane.b32.xlu0 %v34, 126
  %v84 = vpop.permute.xlu0 %83
  %85 = vrot.lane.b32.xlu0 %v35, 126
  %v86 = vpop.permute.xlu0 %85
  %87 = vrot.lane.b32.xlu0 %v36, 126
  %v88 = vpop.permute.xlu0 %87
  %89 = vrot.lane.b32.xlu0 %v37, 126
  %v90 = vpop.permute.xlu0 %89
  %91 = vrot.lane.b32.xlu0 %v38, 126
  %v92 = vpop.permute.xlu0 %91
  %109 = vmatprep.subr.mxu0 0.0
  %110 = vmatpush1.msra.mxu0 %v62
  %111 = vmatprep.subr.mxu0 0.0
  %112 = vmatpush1.msra.mxu0 %v64
  %113 = vmatprep.subr.mxu0 0.0
  %114 = vmatpush1.msra.mxu0 %v66
  %115 = vmatprep.subr.mxu0 0.0
  %116 = vmatpush1.msra.mxu0 %v68
  %117 = vmatprep.subr.mxu0 0.0
  %118 = vmatpush1.msra.mxu0 %v70
  %119 = vmatprep.subr.mxu0 0.0
  %120 = vmatpush1.msra.mxu0 %v72
  %121 = vmatprep.subr.mxu0 0.0
  %122 = vmatpush1.msra.mxu0 %v74
  %123 = vmatprep.subr.mxu0 0.0
  %124 = vmatpush1.msra.mxu0 %v76
  %125 = vmatprep.subr.mxu0 0.0
  %126 = vmatpush1.msra.mxu0 %v78
  %127 = vmatprep.subr.mxu0 0.0
  %128 = vmatpush1.msra.mxu0 %v80
  %129 = vmatprep.subr.mxu0 0.0
  %130 = vmatpush1.msra.mxu0 %v82
  %131 = vmatprep.subr.mxu0 0.0
  %132 = vmatpush1.msra.mxu0 %v84
  %133 = vmatprep.subr.mxu0 0.0
  %134 = vmatpush1.msra.mxu0 %v86
  %135 = vmatprep.subr.mxu0 0.0
  %136 = vmatpush1.msra.mxu0 %v88
  %137 = vmatprep.subr.mxu0 0.0
  %138 = vmatpush1.msra.mxu0 %v90
  %139 = vmatprep.subr.mxu0 0.0
  %140 = vmatpush1.msra.mxu0 %v92
  %141 = vmatprep.subr.mxu0 0.0
  %142 = vmatpush1.msra.mxu0 0.0
  %143 = vmatprep.subr.mxu0 0.0
  %144 = vmatpush1.msra.mxu0 0.0
  %145 = vmatprep.subr.mxu0 0.0
  %146 = vmatpush1.msra.mxu0 0.0
  %147 = vmatprep.subr.mxu0 0.0
  %148 = vmatpush1.msra.mxu0 0.0
  %149 = vmatprep.subr.mxu0 0.0
  %150 = vmatpush1.msra.mxu0 0.0
  %151 = vmatprep.subr.mxu0 0.0
  %152 = vmatpush1.msra.mxu0 0.0
  %153 = vmatprep.subr.mxu0 0.0
  %154 = vmatpush1.msra.mxu0 0.0
  %155 = vmatprep.subr.mxu0 0.0
  %156 = vmatpush1.msra.mxu0 0.0
  %157 = vmatprep.subr.mxu0 0.0
  %158 = vmatpush1.msra.mxu0 0.0
  %159 = vmatprep.subr.mxu0 0.0
  %160 = vmatpush1.msra.mxu0 0.0
  %161 = vmatprep.subr.mxu0 0.0
  %162 = vmatpush1.msra.mxu0 0.0
  %163 = vmatprep.subr.mxu0 0.0
  %164 = vmatpush1.msra.mxu0 0.0
  %165 = vmatprep.subr.mxu0 0.0
  %166 = vmatpush1.msra.mxu0 0.0
  %167 = vmatprep.subr.mxu0 0.0
  %168 = vmatpush1.msra.mxu0 0.0
  %169 = vmatprep.subr.mxu0 0.0
  %170 = vmatpush1.msra.mxu0 0.0
  %171 = vmatprep.subr.mxu0 0.0
  %172 = vmatpush1.msra.mxu0 0.0
  %173 = vmatprep.mubr.f32.mxu0 0.0
  %174 = vmatmul.mubr.f32.gmra.mrb[0].mxu0 %v44
  %v175 = vpop.f32.mrb[0].mxu0
  %v176 = vadd.f32 0.0, %v175
  %v177 = vpop.f32.mrb[0].mxu0
  %178 = vdwg.mxu0
  %179 = vmatprep.subr.mxu0 0.0
  %180 = vmatpush1.msra.mxu0 %v23
  %181 = vmatprep.subr.mxu0 0.0
  %182 = vmatpush1.msra.mxu0 %v24
  %183 = vmatprep.subr.mxu0 0.0
  %184 = vmatpush1.msra.mxu0 %v25
  %185 = vmatprep.subr.mxu0 0.0
  %186 = vmatpush1.msra.mxu0 %v26
  %187 = vmatprep.subr.mxu0 0.0
  %188 = vmatpush1.msra.mxu0 %v27
  %189 = vmatprep.subr.mxu0 0.0
  %190 = vmatpush1.msra.mxu0 %v28
  %191 = vmatprep.subr.mxu0 0.0
  %192 = vmatpush1.msra.mxu0 %v29
  %193 = vmatprep.subr.mxu0 0.0
  %194 = vmatpush1.msra.mxu0 %v30
  %195 = vmatprep.subr.mxu0 0.0
  %196 = vmatpush1.msra.mxu0 %v31
  %197 = vmatprep.subr.mxu0 0.0
  %198 = vmatpush1.msra.mxu0 %v32
  %199 = vmatprep.subr.mxu0 0.0
  %200 = vmatpush1.msra.mxu0 %v33
  %201 = vmatprep.subr.mxu0 0.0
  %202 = vmatpush1.msra.mxu0 %v34
  %203 = vmatprep.subr.mxu0 0.0
  %204 = vmatpush1.msra.mxu0 %v35
  %205 = vmatprep.subr.mxu0 0.0
  %206 = vmatpush1.msra.mxu0 %v36
  %207 = vmatprep.subr.mxu0 0.0
  %208 = vmatpush1.msra.mxu0 %v37
  %209 = vmatprep.subr.mxu0 0.0
  %210 = vmatpush1.msra.mxu0 %v38
  %211 = vmatprep.subr.mxu0 0.0
  %212 = vmatpush1.msra.mxu0 0.0
  %213 = vmatprep.subr.mxu0 0.0
  %214 = vmatpush1.msra.mxu0 0.0
  %215 = vmatprep.subr.mxu0 0.0
  %216 = vmatpush1.msra.mxu0 0.0
  %217 = vmatprep.subr.mxu0 0.0
  %218 = vmatpush1.msra.mxu0 0.0
  %219 = vmatprep.subr.mxu0 0.0
  %220 = vmatpush1.msra.mxu0 0.0
  %221 = vmatprep.subr.mxu0 0.0
  %222 = vmatpush1.msra.mxu0 0.0
  %223 = vmatprep.subr.mxu0 0.0
  %224 = vmatpush1.msra.mxu0 0.0
  %225 = vmatprep.subr.mxu0 0.0
  %226 = vmatpush1.msra.mxu0 0.0
  %227 = vmatprep.subr.mxu0 0.0
  %228 = vmatpush1.msra.mxu0 0.0
  %229 = vmatprep.subr.mxu0 0.0
  %230 = vmatpush1.msra.mxu0 0.0
  %231 = vmatprep.subr.mxu0 0.0
  %232 = vmatpush1.msra.mxu0 0.0
  %233 = vmatprep.subr.mxu0 0.0
  %234 = vmatpush1.msra.mxu0 0.0
  %235 = vmatprep.subr.mxu0 0.0
  %236 = vmatpush1.msra.mxu0 0.0
  %237 = vmatprep.subr.mxu0 0.0
  %238 = vmatpush1.msra.mxu0 0.0
  %239 = vmatprep.subr.mxu0 0.0
  %240 = vmatpush1.msra.mxu0 0.0
  %241 = vmatprep.subr.mxu0 0.0
  %242 = vmatpush1.msra.mxu0 0.0
  %243 = vmatprep.mubr.f32.mxu0 0.0
  %244 = vmatmul.mubr.f32.gmra.mrb[0].mxu0 %v22
  %v245 = vpop.f32.mrb[0].mxu0
  %v246 = vadd.f32 %v176, %v245
  %v247 = vpop.f32.mrb[0].mxu0
  %248 = vdwg.mxu0
  %249 = vset.pattern.permute.xlu0 2
  %250 = vperm.xlu0 %249, %v16
  %v251 = vpop.permute.xlu0 %250
  %vm252 = vcmp.eq.s32.totalorder %v251, %v15
  %v253 = vsel %vm252, 1, 0
  %v254 = vcvt.s32.f32 %v253
  %255 = vrot.lane.b32.xlu0 %v23, 124
  %v256 = vpop.permute.xlu0 %255
  %257 = vrot.lane.b32.xlu0 %v24, 124
  %v258 = vpop.permute.xlu0 %257
  %259 = vrot.lane.b32.xlu0 %v25, 124
  %v260 = vpop.permute.xlu0 %259
  %261 = vrot.lane.b32.xlu0 %v26, 124
  %v262 = vpop.permute.xlu0 %261
  %263 = vrot.lane.b32.xlu0 %v27, 124
  %v264 = vpop.permute.xlu0 %263
  %265 = vrot.lane.b32.xlu0 %v28, 124
  %v266 = vpop.permute.xlu0 %265
  %267 = vrot.lane.b32.xlu0 %v29, 124
  %v268 = vpop.permute.xlu0 %267
  %269 = vrot.lane.b32.xlu0 %v30, 124
  %v270 = vpop.permute.xlu0 %269
  %271 = vrot.lane.b32.xlu0 %v31, 124
  %v272 = vpop.permute.xlu0 %271
  %273 = vrot.lane.b32.xlu0 %v32, 124
  %v274 = vpop.permute.xlu0 %273
  %275 = vrot.lane.b32.xlu0 %v33, 124
  %v276 = vpop.permute.xlu0 %275
  %277 = vrot.lane.b32.xlu0 %v34, 124
  %v278 = vpop.permute.xlu0 %277
  %279 = vrot.lane.b32.xlu0 %v35, 124
  %v280 = vpop.permute.xlu0 %279
  %281 = vrot.lane.b32.xlu0 %v36, 124
  %v282 = vpop.permute.xlu0 %281
  %283 = vrot.lane.b32.xlu0 %v37, 124
  %v284 = vpop.permute.xlu0 %283
  %285 = vrot.lane.b32.xlu0 %v38, 124
  %v286 = vpop.permute.xlu0 %285
  %303 = vmatprep.subr.mxu0 0.0
  %304 = vmatpush1.msra.mxu0 %v256
  %305 = vmatprep.subr.mxu0 0.0
  %306 = vmatpush1.msra.mxu0 %v258
  %307 = vmatprep.subr.mxu0 0.0
  %308 = vmatpush1.msra.mxu0 %v260
  %309 = vmatprep.subr.mxu0 0.0
  %310 = vmatpush1.msra.mxu0 %v262
  %311 = vmatprep.subr.mxu0 0.0
  %312 = vmatpush1.msra.mxu0 %v264
  %313 = vmatprep.subr.mxu0 0.0
  %314 = vmatpush1.msra.mxu0 %v266
  %315 = vmatprep.subr.mxu0 0.0
  %316 = vmatpush1.msra.mxu0 %v268
  %317 = vmatprep.subr.mxu0 0.0
  %318 = vmatpush1.msra.mxu0 %v270
  %319 = vmatprep.subr.mxu0 0.0
  %320 = vmatpush1.msra.mxu0 %v272
  %321 = vmatprep.subr.mxu0 0.0
  %322 = vmatpush1.msra.mxu0 %v274
  %323 = vmatprep.subr.mxu0 0.0
  %324 = vmatpush1.msra.mxu0 %v276
  %325 = vmatprep.subr.mxu0 0.0
  %326 = vmatpush1.msra.mxu0 %v278
  %327 = vmatprep.subr.mxu0 0.0
  %328 = vmatpush1.msra.mxu0 %v280
  %329 = vmatprep.subr.mxu0 0.0
  %330 = vmatpush1.msra.mxu0 %v282
  %331 = vmatprep.subr.mxu0 0.0
  %332 = vmatpush1.msra.mxu0 %v284
  %333 = vmatprep.subr.mxu0 0.0
  %334 = vmatpush1.msra.mxu0 %v286
  %335 = vmatprep.subr.mxu0 0.0
  %336 = vmatpush1.msra.mxu0 0.0
  %337 = vmatprep.subr.mxu0 0.0
  %338 = vmatpush1.msra.mxu0 0.0
  %339 = vmatprep.subr.mxu0 0.0
  %340 = vmatpush1.msra.mxu0 0.0
  %341 = vmatprep.subr.mxu0 0.0
  %342 = vmatpush1.msra.mxu0 0.0
  %343 = vmatprep.subr.mxu0 0.0
  %344 = vmatpush1.msra.mxu0 0.0
  %345 = vmatprep.subr.mxu0 0.0
  %346 = vmatpush1.msra.mxu0 0.0
  %347 = vmatprep.subr.mxu0 0.0
  %348 = vmatpush1.msra.mxu0 0.0
  %349 = vmatprep.subr.mxu0 0.0
  %350 = vmatpush1.msra.mxu0 0.0
  %351 = vmatprep.subr.mxu0 0.0
  %352 = vmatpush1.msra.mxu0 0.0
  %353 = vmatprep.subr.mxu0 0.0
  %354 = vmatpush1.msra.mxu0 0.0
  %355 = vmatprep.subr.mxu0 0.0
  %356 = vmatpush1.msra.mxu0 0.0
  %357 = vmatprep.subr.mxu0 0.0
  %358 = vmatpush1.msra.mxu0 0.0
  %359 = vmatprep.subr.mxu0 0.0
  %360 = vmatpush1.msra.mxu0 0.0
  %361 = vmatprep.subr.mxu0 0.0
  %362 = vmatpush1.msra.mxu0 0.0
  %363 = vmatprep.subr.mxu0 0.0
  %364 = vmatpush1.msra.mxu0 0.0
  %365 = vmatprep.subr.mxu0 0.0
  %366 = vmatpush1.msra.mxu0 0.0
  %367 = vmatprep.mubr.f32.mxu0 0.0
  %368 = vmatmul.mubr.f32.gmra.mrb[0].mxu0 %v254
  %v369 = vpop.f32.mrb[0].mxu0
  %v370 = vadd.f32 0.0, %v369
  %v371 = vpop.f32.mrb[0].mxu0
  %372 = vdwg.mxu0
  %v373 = vadd.f32 %v246, %v370
  %374 = vset.pattern.permute.xlu0 3
  %375 = vperm.xlu0 %374, %v16
  %v376 = vpop.permute.xlu0 %375
  %vm377 = vcmp.eq.s32.totalorder %v376, %v15
  %v378 = vsel %vm377, 1, 0
  %v379 = vcvt.s32.f32 %v378
  %380 = vrot.lane.b32.xlu0 %v23, 122
  %v381 = vpop.permute.xlu0 %380
  %382 = vrot.lane.b32.xlu0 %v24, 122
  %v383 = vpop.permute.xlu0 %382
  %384 = vrot.lane.b32.xlu0 %v25, 122
  %v385 = vpop.permute.xlu0 %384
  %386 = vrot.lane.b32.xlu0 %v26, 122
  %v387 = vpop.permute.xlu0 %386
  %388 = vrot.lane.b32.xlu0 %v27, 122
  %v389 = vpop.permute.xlu0 %388
  %390 = vrot.lane.b32.xlu0 %v28, 122
  %v391 = vpop.permute.xlu0 %390
  %392 = vrot.lane.b32.xlu0 %v29, 122
  %v393 = vpop.permute.xlu0 %392
  %394 = vrot.lane.b32.xlu0 %v30, 122
  %v395 = vpop.permute.xlu0 %394
  %396 = vrot.lane.b32.xlu0 %v31, 122
  %v397 = vpop.permute.xlu0 %396
  %398 = vrot.lane.b32.xlu0 %v32, 122
  %v399 = vpop.permute.xlu0 %398
  %400 = vrot.lane.b32.xlu0 %v33, 122
  %v401 = vpop.permute.xlu0 %400
  %402 = vrot.lane.b32.xlu0 %v34, 122
  %v403 = vpop.permute.xlu0 %402
  %404 = vrot.lane.b32.xlu0 %v35, 122
  %v405 = vpop.permute.xlu0 %404
  %406 = vrot.lane.b32.xlu0 %v36, 122
  %v407 = vpop.permute.xlu0 %406
  %408 = vrot.lane.b32.xlu0 %v37, 122
  %v409 = vpop.permute.xlu0 %408
  %410 = vrot.lane.b32.xlu0 %v38, 122
  %v411 = vpop.permute.xlu0 %410
  %428 = vmatprep.subr.mxu0 0.0
  %429 = vmatpush1.msra.mxu0 %v381
  %430 = vmatprep.subr.mxu0 0.0
  %431 = vmatpush1.msra.mxu0 %v383
  %432 = vmatprep.subr.mxu0 0.0
  %433 = vmatpush1.msra.mxu0 %v385
  %434 = vmatprep.subr.mxu0 0.0
  %435 = vmatpush1.msra.mxu0 %v387
  %436 = vmatprep.subr.mxu0 0.0
  %437 = vmatpush1.msra.mxu0 %v389
  %438 = vmatprep.subr.mxu0 0.0
  %439 = vmatpush1.msra.mxu0 %v391
  %440 = vmatprep.subr.mxu0 0.0
  %441 = vmatpush1.msra.mxu0 %v393
  %442 = vmatprep.subr.mxu0 0.0
  %443 = vmatpush1.msra.mxu0 %v395
  %444 = vmatprep.subr.mxu0 0.0
  %445 = vmatpush1.msra.mxu0 %v397
  %446 = vmatprep.subr.mxu0 0.0
  %447 = vmatpush1.msra.mxu0 %v399
  %448 = vmatprep.subr.mxu0 0.0
  %449 = vmatpush1.msra.mxu0 %v401
  %450 = vmatprep.subr.mxu0 0.0
  %451 = vmatpush1.msra.mxu0 %v403
  %452 = vmatprep.subr.mxu0 0.0
  %453 = vmatpush1.msra.mxu0 %v405
  %454 = vmatprep.subr.mxu0 0.0
  %455 = vmatpush1.msra.mxu0 %v407
  %456 = vmatprep.subr.mxu0 0.0
  %457 = vmatpush1.msra.mxu0 %v409
  %458 = vmatprep.subr.mxu0 0.0
  %459 = vmatpush1.msra.mxu0 %v411
  %460 = vmatprep.subr.mxu0 0.0
  %461 = vmatpush1.msra.mxu0 0.0
  %462 = vmatprep.subr.mxu0 0.0
  %463 = vmatpush1.msra.mxu0 0.0
  %464 = vmatprep.subr.mxu0 0.0
  %465 = vmatpush1.msra.mxu0 0.0
  %466 = vmatprep.subr.mxu0 0.0
  %467 = vmatpush1.msra.mxu0 0.0
  %468 = vmatprep.subr.mxu0 0.0
  %469 = vmatpush1.msra.mxu0 0.0
  %470 = vmatprep.subr.mxu0 0.0
  %471 = vmatpush1.msra.mxu0 0.0
  %472 = vmatprep.subr.mxu0 0.0
  %473 = vmatpush1.msra.mxu0 0.0
  %474 = vmatprep.subr.mxu0 0.0
  %475 = vmatpush1.msra.mxu0 0.0
  %476 = vmatprep.subr.mxu0 0.0
  %477 = vmatpush1.msra.mxu0 0.0
  %478 = vmatprep.subr.mxu0 0.0
  %479 = vmatpush1.msra.mxu0 0.0
  %480 = vmatprep.subr.mxu0 0.0
  %481 = vmatpush1.msra.mxu0 0.0
  %482 = vmatprep.subr.mxu0 0.0
  %483 = vmatpush1.msra.mxu0 0.0
  %484 = vmatprep.subr.mxu0 0.0
  %485 = vmatpush1.msra.mxu0 0.0
  %486 = vmatprep.subr.mxu0 0.0
  %487 = vmatpush1.msra.mxu0 0.0
  %488 = vmatprep.subr.mxu0 0.0
  %489 = vmatpush1.msra.mxu0 0.0
  %490 = vmatprep.subr.mxu0 0.0
  %491 = vmatpush1.msra.mxu0 0.0
  %492 = vmatprep.mubr.f32.mxu0 0.0
  %493 = vmatmul.mubr.f32.gmra.mrb[0].mxu0 %v379
  %v494 = vpop.f32.mrb[0].mxu0
  %v495 = vadd.f32 0.0, %v494
  %v496 = vpop.f32.mrb[0].mxu0
  %497 = vdwg.mxu0
  %v498 = vadd.f32 %v373, %v495
  %499 = vset.pattern.permute.xlu0 4
  %500 = vperm.xlu0 %499, %v16
  %v501 = vpop.permute.xlu0 %500
  %vm502 = vcmp.eq.s32.totalorder %v501, %v15
  %v503 = vsel %vm502, 1, 0
  %v504 = vcvt.s32.f32 %v503
  %505 = vrot.lane.b32.xlu0 %v23, 120
  %v506 = vpop.permute.xlu0 %505
  %507 = vrot.lane.b32.xlu0 %v24, 120
  %v508 = vpop.permute.xlu0 %507
  %509 = vrot.lane.b32.xlu0 %v25, 120
  %v510 = vpop.permute.xlu0 %509
  %511 = vrot.lane.b32.xlu0 %v26, 120
  %v512 = vpop.permute.xlu0 %511
  %513 = vrot.lane.b32.xlu0 %v27, 120
  %v514 = vpop.permute.xlu0 %513
  %515 = vrot.lane.b32.xlu0 %v28, 120
  %v516 = vpop.permute.xlu0 %515
  %517 = vrot.lane.b32.xlu0 %v29, 120
  %v518 = vpop.permute.xlu0 %517
  %519 = vrot.lane.b32.xlu0 %v30, 120
  %v520 = vpop.permute.xlu0 %519
  %521 = vrot.lane.b32.xlu0 %v31, 120
  %v522 = vpop.permute.xlu0 %521
  %523 = vrot.lane.b32.xlu0 %v32, 120
  %v524 = vpop.permute.xlu0 %523
  %525 = vrot.lane.b32.xlu0 %v33, 120
  %v526 = vpop.permute.xlu0 %525
  %527 = vrot.lane.b32.xlu0 %v34, 120
  %v528 = vpop.permute.xlu0 %527
  %529 = vrot.lane.b32.xlu0 %v35, 120
  %v530 = vpop.permute.xlu0 %529
  %531 = vrot.lane.b32.xlu0 %v36, 120
  %v532 = vpop.permute.xlu0 %531
  %533 = vrot.lane.b32.xlu0 %v37, 120
  %v534 = vpop.permute.xlu0 %533
  %535 = vrot.lane.b32.xlu0 %v38, 120
  %v536 = vpop.permute.xlu0 %535
  %553 = vmatprep.subr.mxu0 0.0
  %554 = vmatpush1.msra.mxu0 %v506
  %555 = vmatprep.subr.mxu0 0.0
  %556 = vmatpush1.msra.mxu0 %v508
  %557 = vmatprep.subr.mxu0 0.0
  %558 = vmatpush1.msra.mxu0 %v510
  %559 = vmatprep.subr.mxu0 0.0
  %560 = vmatpush1.msra.mxu0 %v512
  %561 = vmatprep.subr.mxu0 0.0
  %562 = vmatpush1.msra.mxu0 %v514
  %563 = vmatprep.subr.mxu0 0.0
  %564 = vmatpush1.msra.mxu0 %v516
  %565 = vmatprep.subr.mxu0 0.0
  %566 = vmatpush1.msra.mxu0 %v518
  %567 = vmatprep.subr.mxu0 0.0
  %568 = vmatpush1.msra.mxu0 %v520
  %569 = vmatprep.subr.mxu0 0.0
  %570 = vmatpush1.msra.mxu0 %v522
  %571 = vmatprep.subr.mxu0 0.0
  %572 = vmatpush1.msra.mxu0 %v524
  %573 = vmatprep.subr.mxu0 0.0
  %574 = vmatpush1.msra.mxu0 %v526
  %575 = vmatprep.subr.mxu0 0.0
  %576 = vmatpush1.msra.mxu0 %v528
  %577 = vmatprep.subr.mxu0 0.0
  %578 = vmatpush1.msra.mxu0 %v530
  %579 = vmatprep.subr.mxu0 0.0
  %580 = vmatpush1.msra.mxu0 %v532
  %581 = vmatprep.subr.mxu0 0.0
  %582 = vmatpush1.msra.mxu0 %v534
  %583 = vmatprep.subr.mxu0 0.0
  %584 = vmatpush1.msra.mxu0 %v536
  %585 = vmatprep.subr.mxu0 0.0
  %586 = vmatpush1.msra.mxu0 0.0
  %587 = vmatprep.subr.mxu0 0.0
  %588 = vmatpush1.msra.mxu0 0.0
  %589 = vmatprep.subr.mxu0 0.0
  %590 = vmatpush1.msra.mxu0 0.0
  %591 = vmatprep.subr.mxu0 0.0
  %592 = vmatpush1.msra.mxu0 0.0
  %593 = vmatprep.subr.mxu0 0.0
  %594 = vmatpush1.msra.mxu0 0.0
  %595 = vmatprep.subr.mxu0 0.0
  %596 = vmatpush1.msra.mxu0 0.0
  %597 = vmatprep.subr.mxu0 0.0
  %598 = vmatpush1.msra.mxu0 0.0
  %599 = vmatprep.subr.mxu0 0.0
  %600 = vmatpush1.msra.mxu0 0.0
  %601 = vmatprep.subr.mxu0 0.0
  %602 = vmatpush1.msra.mxu0 0.0
  %603 = vmatprep.subr.mxu0 0.0
  %604 = vmatpush1.msra.mxu0 0.0
  %605 = vmatprep.subr.mxu0 0.0
  %606 = vmatpush1.msra.mxu0 0.0
  %607 = vmatprep.subr.mxu0 0.0
  %608 = vmatpush1.msra.mxu0 0.0
  %609 = vmatprep.subr.mxu0 0.0
  %610 = vmatpush1.msra.mxu0 0.0
  %611 = vmatprep.subr.mxu0 0.0
  %612 = vmatpush1.msra.mxu0 0.0
  %613 = vmatprep.subr.mxu0 0.0
  %614 = vmatpush1.msra.mxu0 0.0
  %615 = vmatprep.subr.mxu0 0.0
  %616 = vmatpush1.msra.mxu0 0.0
  %617 = vmatprep.mubr.f32.mxu0 0.0
  %618 = vmatmul.mubr.f32.gmra.mrb[0].mxu0 %v504
  %v619 = vpop.f32.mrb[0].mxu0
  %v620 = vadd.f32 0.0, %v619
  %v621 = vpop.f32.mrb[0].mxu0
  %622 = vdwg.mxu0
  %v623 = vadd.f32 %v498, %v620
  %624 = vset.pattern.permute.xlu0 5
  %625 = vperm.xlu0 %624, %v16
  %v626 = vpop.permute.xlu0 %625
  %vm627 = vcmp.eq.s32.totalorder %v626, %v15
  %v628 = vsel %vm627, 1, 0
  %v629 = vcvt.s32.f32 %v628
  %630 = vrot.lane.b32.xlu0 %v23, 118
  %v631 = vpop.permute.xlu0 %630
  %632 = vrot.lane.b32.xlu0 %v24, 118
  %v633 = vpop.permute.xlu0 %632
  %634 = vrot.lane.b32.xlu0 %v25, 118
  %v635 = vpop.permute.xlu0 %634
  %636 = vrot.lane.b32.xlu0 %v26, 118
  %v637 = vpop.permute.xlu0 %636
  %638 = vrot.lane.b32.xlu0 %v27, 118
  %v639 = vpop.permute.xlu0 %638
  %640 = vrot.lane.b32.xlu0 %v28, 118
  %v641 = vpop.permute.xlu0 %640
  %642 = vrot.lane.b32.xlu0 %v29, 118
  %v643 = vpop.permute.xlu0 %642
  %644 = vrot.lane.b32.xlu0 %v30, 118
  %v645 = vpop.permute.xlu0 %644
  %646 = vrot.lane.b32.xlu0 %v31, 118
  %v647 = vpop.permute.xlu0 %646
  %648 = vrot.lane.b32.xlu0 %v32, 118
  %v649 = vpop.permute.xlu0 %648
  %650 = vrot.lane.b32.xlu0 %v33, 118
  %v651 = vpop.permute.xlu0 %650
  %652 = vrot.lane.b32.xlu0 %v34, 118
  %v653 = vpop.permute.xlu0 %652
  %654 = vrot.lane.b32.xlu0 %v35, 118
  %v655 = vpop.permute.xlu0 %654
  %656 = vrot.lane.b32.xlu0 %v36, 118
  %v657 = vpop.permute.xlu0 %656
  %658 = vrot.lane.b32.xlu0 %v37, 118
  %v659 = vpop.permute.xlu0 %658
  %660 = vrot.lane.b32.xlu0 %v38, 118
  %v661 = vpop.permute.xlu0 %660
  %678 = vmatprep.subr.mxu0 0.0
  %679 = vmatpush1.msra.mxu0 %v631
  %680 = vmatprep.subr.mxu0 0.0
  %681 = vmatpush1.msra.mxu0 %v633
  %682 = vmatprep.subr.mxu0 0.0
  %683 = vmatpush1.msra.mxu0 %v635
  %684 = vmatprep.subr.mxu0 0.0
  %685 = vmatpush1.msra.mxu0 %v637
  %686 = vmatprep.subr.mxu0 0.0
  %687 = vmatpush1.msra.mxu0 %v639
  %688 = vmatprep.subr.mxu0 0.0
  %689 = vmatpush1.msra.mxu0 %v641
  %690 = vmatprep.subr.mxu0 0.0
  %691 = vmatpush1.msra.mxu0 %v643
  %692 = vmatprep.subr.mxu0 0.0
  %693 = vmatpush1.msra.mxu0 %v645
  %694 = vmatprep.subr.mxu0 0.0
  %695 = vmatpush1.msra.mxu0 %v647
  %696 = vmatprep.subr.mxu0 0.0
  %697 = vmatpush1.msra.mxu0 %v649
  %698 = vmatprep.subr.mxu0 0.0
  %699 = vmatpush1.msra.mxu0 %v651
  %700 = vmatprep.subr.mxu0 0.0
  %701 = vmatpush1.msra.mxu0 %v653
  %702 = vmatprep.subr.mxu0 0.0
  %703 = vmatpush1.msra.mxu0 %v655
  %704 = vmatprep.subr.mxu0 0.0
  %705 = vmatpush1.msra.mxu0 %v657
  %706 = vmatprep.subr.mxu0 0.0
  %707 = vmatpush1.msra.mxu0 %v659
  %708 = vmatprep.subr.mxu0 0.0
  %709 = vmatpush1.msra.mxu0 %v661
  %710 = vmatprep.subr.mxu0 0.0
  %711 = vmatpush1.msra.mxu0 0.0
  %712 = vmatprep.subr.mxu0 0.0
  %713 = vmatpush1.msra.mxu0 0.0
  %714 = vmatprep.subr.mxu0 0.0
  %715 = vmatpush1.msra.mxu0 0.0
  %716 = vmatprep.subr.mxu0 0.0
  %717 = vmatpush1.msra.mxu0 0.0
  %718 = vmatprep.subr.mxu0 0.0
  %719 = vmatpush1.msra.mxu0 0.0
  %720 = vmatprep.subr.mxu0 0.0
  %721 = vmatpush1.msra.mxu0 0.0
  %722 = vmatprep.subr.mxu0 0.0
  %723 = vmatpush1.msra.mxu0 0.0
  %724 = vmatprep.subr.mxu0 0.0
  %725 = vmatpush1.msra.mxu0 0.0
  %726 = vmatprep.subr.mxu0 0.0
  %727 = vmatpush1.msra.mxu0 0.0
  %728 = vmatprep.subr.mxu0 0.0
  %729 = vmatpush1.msra.mxu0 0.0
  %730 = vmatprep.subr.mxu0 0.0
  %731 = vmatpush1.msra.mxu0 0.0
  %732 = vmatprep.subr.mxu0 0.0
  %733 = vmatpush1.msra.mxu0 0.0
  %734 = vmatprep.subr.mxu0 0.0
  %735 = vmatpush1.msra.mxu0 0.0
  %736 = vmatprep.subr.mxu0 0.0
  %737 = vmatpush1.msra.mxu0 0.0
  %738 = vmatprep.subr.mxu0 0.0
  %739 = vmatpush1.msra.mxu0 0.0
  %740 = vmatprep.subr.mxu0 0.0
  %741 = vmatpush1.msra.mxu0 0.0
  %742 = vmatprep.mubr.f32.mxu0 0.0
  %743 = vmatmul.mubr.f32.gmra.mrb[0].mxu0 %v629
  %v744 = vpop.f32.mrb[0].mxu0
  %v745 = vadd.f32 0.0, %v744
  %v746 = vpop.f32.mrb[0].mxu0
  %747 = vdwg.mxu0
  %v748 = vadd.f32 %v623, %v745
  %749 = vset.pattern.permute.xlu0 6
  %750 = vperm.xlu0 %749, %v16
  %v751 = vpop.permute.xlu0 %750
  %vm752 = vcmp.eq.s32.totalorder %v751, %v15
  %v753 = vsel %vm752, 1, 0
  %v754 = vcvt.s32.f32 %v753
  %755 = vrot.lane.b32.xlu0 %v23, 116
  %v756 = vpop.permute.xlu0 %755
  %757 = vrot.lane.b32.xlu0 %v24, 116
  %v758 = vpop.permute.xlu0 %757
  %759 = vrot.lane.b32.xlu0 %v25, 116
  %v760 = vpop.permute.xlu0 %759
  %761 = vrot.lane.b32.xlu0 %v26, 116
  %v762 = vpop.permute.xlu0 %761
  %763 = vrot.lane.b32.xlu0 %v27, 116
  %v764 = vpop.permute.xlu0 %763
  %765 = vrot.lane.b32.xlu0 %v28, 116
  %v766 = vpop.permute.xlu0 %765
  %767 = vrot.lane.b32.xlu0 %v29, 116
  %v768 = vpop.permute.xlu0 %767
  %769 = vrot.lane.b32.xlu0 %v30, 116
  %v770 = vpop.permute.xlu0 %769
  %771 = vrot.lane.b32.xlu0 %v31, 116
  %v772 = vpop.permute.xlu0 %771
  %773 = vrot.lane.b32.xlu0 %v32, 116
  %v774 = vpop.permute.xlu0 %773
  %775 = vrot.lane.b32.xlu0 %v33, 116
  %v776 = vpop.permute.xlu0 %775
  %777 = vrot.lane.b32.xlu0 %v34, 116
  %v778 = vpop.permute.xlu0 %777
  %779 = vrot.lane.b32.xlu0 %v35, 116
  %v780 = vpop.permute.xlu0 %779
  %781 = vrot.lane.b32.xlu0 %v36, 116
  %v782 = vpop.permute.xlu0 %781
  %783 = vrot.lane.b32.xlu0 %v37, 116
  %v784 = vpop.permute.xlu0 %783
  %785 = vrot.lane.b32.xlu0 %v38, 116
  %v786 = vpop.permute.xlu0 %785
  %803 = vmatprep.subr.mxu0 0.0
  %804 = vmatpush1.msra.mxu0 %v756
  %805 = vmatprep.subr.mxu0 0.0
  %806 = vmatpush1.msra.mxu0 %v758
  %807 = vmatprep.subr.mxu0 0.0
  %808 = vmatpush1.msra.mxu0 %v760
  %809 = vmatprep.subr.mxu0 0.0
  %810 = vmatpush1.msra.mxu0 %v762
  %811 = vmatprep.subr.mxu0 0.0
  %812 = vmatpush1.msra.mxu0 %v764
  %813 = vmatprep.subr.mxu0 0.0
  %814 = vmatpush1.msra.mxu0 %v766
  %815 = vmatprep.subr.mxu0 0.0
  %816 = vmatpush1.msra.mxu0 %v768
  %817 = vmatprep.subr.mxu0 0.0
  %818 = vmatpush1.msra.mxu0 %v770
  %819 = vmatprep.subr.mxu0 0.0
  %820 = vmatpush1.msra.mxu0 %v772
  %821 = vmatprep.subr.mxu0 0.0
  %822 = vmatpush1.msra.mxu0 %v774
  %823 = vmatprep.subr.mxu0 0.0
  %824 = vmatpush1.msra.mxu0 %v776
  %825 = vmatprep.subr.mxu0 0.0
  %826 = vmatpush1.msra.mxu0 %v778
  %827 = vmatprep.subr.mxu0 0.0
  %828 = vmatpush1.msra.mxu0 %v780
  %829 = vmatprep.subr.mxu0 0.0
  %830 = vmatpush1.msra.mxu0 %v782
  %831 = vmatprep.subr.mxu0 0.0
  %832 = vmatpush1.msra.mxu0 %v784
  %833 = vmatprep.subr.mxu0 0.0
  %834 = vmatpush1.msra.mxu0 %v786
  %835 = vmatprep.subr.mxu0 0.0
  %836 = vmatpush1.msra.mxu0 0.0
  %837 = vmatprep.subr.mxu0 0.0
  %838 = vmatpush1.msra.mxu0 0.0
  %839 = vmatprep.subr.mxu0 0.0
  %840 = vmatpush1.msra.mxu0 0.0
  %841 = vmatprep.subr.mxu0 0.0
  %842 = vmatpush1.msra.mxu0 0.0
  %843 = vmatprep.subr.mxu0 0.0
  %844 = vmatpush1.msra.mxu0 0.0
  %845 = vmatprep.subr.mxu0 0.0
  %846 = vmatpush1.msra.mxu0 0.0
  %847 = vmatprep.subr.mxu0 0.0
  %848 = vmatpush1.msra.mxu0 0.0
  %849 = vmatprep.subr.mxu0 0.0
  %850 = vmatpush1.msra.mxu0 0.0
  %851 = vmatprep.subr.mxu0 0.0
  %852 = vmatpush1.msra.mxu0 0.0
  %853 = vmatprep.subr.mxu0 0.0
  %854 = vmatpush1.msra.mxu0 0.0
  %855 = vmatprep.subr.mxu0 0.0
  %856 = vmatpush1.msra.mxu0 0.0
  %857 = vmatprep.subr.mxu0 0.0
  %858 = vmatpush1.msra.mxu0 0.0
  %859 = vmatprep.subr.mxu0 0.0
  %860 = vmatpush1.msra.mxu0 0.0
  %861 = vmatprep.subr.mxu0 0.0
  %862 = vmatpush1.msra.mxu0 0.0
  %863 = vmatprep.subr.mxu0 0.0
  %864 = vmatpush1.msra.mxu0 0.0
  %865 = vmatprep.subr.mxu0 0.0
  %866 = vmatpush1.msra.mxu0 0.0
  %867 = vmatprep.mubr.f32.mxu0 0.0
  %868 = vmatmul.mubr.f32.gmra.mrb[0].mxu0 %v754
  %v869 = vpop.f32.mrb[0].mxu0
  %v870 = vadd.f32 0.0, %v869
  %v871 = vpop.f32.mrb[0].mxu0
  %872 = vdwg.mxu0
  %v873 = vadd.f32 %v748, %v870
  %874 = vset.pattern.permute.xlu0 7
  %875 = vperm.xlu0 %874, %v16
  %v876 = vpop.permute.xlu0 %875
  %vm877 = vcmp.eq.s32.totalorder %v876, %v15
  %v878 = vsel %vm877, 1, 0
  %v879 = vcvt.s32.f32 %v878
  %880 = vrot.lane.b32.xlu0 %v23, 114
  %v881 = vpop.permute.xlu0 %880
  %882 = vrot.lane.b32.xlu0 %v24, 114
  %v883 = vpop.permute.xlu0 %882
  %884 = vrot.lane.b32.xlu0 %v25, 114
  %v885 = vpop.permute.xlu0 %884
  %886 = vrot.lane.b32.xlu0 %v26, 114
  %v887 = vpop.permute.xlu0 %886
  %888 = vrot.lane.b32.xlu0 %v27, 114
  %v889 = vpop.permute.xlu0 %888
  %890 = vrot.lane.b32.xlu0 %v28, 114
  %v891 = vpop.permute.xlu0 %890
  %892 = vrot.lane.b32.xlu0 %v29, 114
  %v893 = vpop.permute.xlu0 %892
  %894 = vrot.lane.b32.xlu0 %v30, 114
  %v895 = vpop.permute.xlu0 %894
  %896 = vrot.lane.b32.xlu0 %v31, 114
  %v897 = vpop.permute.xlu0 %896
  %898 = vrot.lane.b32.xlu0 %v32, 114
  %v899 = vpop.permute.xlu0 %898
  %900 = vrot.lane.b32.xlu0 %v33, 114
  %v901 = vpop.permute.xlu0 %900
  %902 = vrot.lane.b32.xlu0 %v34, 114
  %v903 = vpop.permute.xlu0 %902
  %904 = vrot.lane.b32.xlu0 %v35, 114
  %v905 = vpop.permute.xlu0 %904
  %906 = vrot.lane.b32.xlu0 %v36, 114
  %v907 = vpop.permute.xlu0 %906
  %908 = vrot.lane.b32.xlu0 %v37, 114
  %v909 = vpop.permute.xlu0 %908
  %910 = vrot.lane.b32.xlu0 %v38, 114
  %v911 = vpop.permute.xlu0 %910
  %928 = vmatprep.subr.mxu0 0.0
  %929 = vmatpush1.msra.mxu0 %v881
  %930 = vmatprep.subr.mxu0 0.0
  %931 = vmatpush1.msra.mxu0 %v883
  %932 = vmatprep.subr.mxu0 0.0
  %933 = vmatpush1.msra.mxu0 %v885
  %934 = vmatprep.subr.mxu0 0.0
  %935 = vmatpush1.msra.mxu0 %v887
  %936 = vmatprep.subr.mxu0 0.0
  %937 = vmatpush1.msra.mxu0 %v889
  %938 = vmatprep.subr.mxu0 0.0
  %939 = vmatpush1.msra.mxu0 %v891
  %940 = vmatprep.subr.mxu0 0.0
  %941 = vmatpush1.msra.mxu0 %v893
  %942 = vmatprep.subr.mxu0 0.0
  %943 = vmatpush1.msra.mxu0 %v895
  %944 = vmatprep.subr.mxu0 0.0
  %945 = vmatpush1.msra.mxu0 %v897
  %946 = vmatprep.subr.mxu0 0.0
  %947 = vmatpush1.msra.mxu0 %v899
  %948 = vmatprep.subr.mxu0 0.0
  %949 = vmatpush1.msra.mxu0 %v901
  %950 = vmatprep.subr.mxu0 0.0
  %951 = vmatpush1.msra.mxu0 %v903
  %952 = vmatprep.subr.mxu0 0.0
  %953 = vmatpush1.msra.mxu0 %v905
  %954 = vmatprep.subr.mxu0 0.0
  %955 = vmatpush1.msra.mxu0 %v907
  %956 = vmatprep.subr.mxu0 0.0
  %957 = vmatpush1.msra.mxu0 %v909
  %958 = vmatprep.subr.mxu0 0.0
  %959 = vmatpush1.msra.mxu0 %v911
  %960 = vmatprep.subr.mxu0 0.0
  %961 = vmatpush1.msra.mxu0 0.0
  %962 = vmatprep.subr.mxu0 0.0
  %963 = vmatpush1.msra.mxu0 0.0
  %964 = vmatprep.subr.mxu0 0.0
  %965 = vmatpush1.msra.mxu0 0.0
  %966 = vmatprep.subr.mxu0 0.0
  %967 = vmatpush1.msra.mxu0 0.0
  %968 = vmatprep.subr.mxu0 0.0
  %969 = vmatpush1.msra.mxu0 0.0
  %970 = vmatprep.subr.mxu0 0.0
  %971 = vmatpush1.msra.mxu0 0.0
  %972 = vmatprep.subr.mxu0 0.0
  %973 = vmatpush1.msra.mxu0 0.0
  %974 = vmatprep.subr.mxu0 0.0
  %975 = vmatpush1.msra.mxu0 0.0
  %976 = vmatprep.subr.mxu0 0.0
  %977 = vmatpush1.msra.mxu0 0.0
  %978 = vmatprep.subr.mxu0 0.0
  %979 = vmatpush1.msra.mxu0 0.0
  %980 = vmatprep.subr.mxu0 0.0
  %981 = vmatpush1.msra.mxu0 0.0
  %982 = vmatprep.subr.mxu0 0.0
  %983 = vmatpush1.msra.mxu0 0.0
  %984 = vmatprep.subr.mxu0 0.0
  %985 = vmatpush1.msra.mxu0 0.0
  %986 = vmatprep.subr.mxu0 0.0
  %987 = vmatpush1.msra.mxu0 0.0
  %988 = vmatprep.subr.mxu0 0.0
  %989 = vmatpush1.msra.mxu0 0.0
  %990 = vmatprep.subr.mxu0 0.0
  %991 = vmatpush1.msra.mxu0 0.0
  %992 = vmatprep.mubr.f32.mxu0 0.0
  %993 = vmatmul.mubr.f32.gmra.mrb[0].mxu0 %v879
  %v994 = vpop.f32.mrb[0].mxu0
  %v995 = vadd.f32 0.0, %v994
  %v996 = vpop.f32.mrb[0].mxu0
  %997 = vdwg.mxu0
  %v998 = vadd.f32 %v873, %v995
  %999 = vset.pattern.permute.xlu0 8
  %1000 = vperm.xlu0 %999, %v16
  %v1001 = vpop.permute.xlu0 %1000
  %vm1002 = vcmp.eq.s32.totalorder %v1001, %v15
  %v1003 = vsel %vm1002, 1, 0
  %v1004 = vcvt.s32.f32 %v1003
  %1005 = vrot.lane.b32.xlu0 %v23, 112
  %v1006 = vpop.permute.xlu0 %1005
  %1007 = vrot.lane.b32.xlu0 %v24, 112
  %v1008 = vpop.permute.xlu0 %1007
  %1009 = vrot.lane.b32.xlu0 %v25, 112
  %v1010 = vpop.permute.xlu0 %1009
  %1011 = vrot.lane.b32.xlu0 %v26, 112
  %v1012 = vpop.permute.xlu0 %1011
  %1013 = vrot.lane.b32.xlu0 %v27, 112
  %v1014 = vpop.permute.xlu0 %1013
  %1015 = vrot.lane.b32.xlu0 %v28, 112
  %v1016 = vpop.permute.xlu0 %1015
  %1017 = vrot.lane.b32.xlu0 %v29, 112
  %v1018 = vpop.permute.xlu0 %1017
  %1019 = vrot.lane.b32.xlu0 %v30, 112
  %v1020 = vpop.permute.xlu0 %1019
  %1021 = vrot.lane.b32.xlu0 %v31, 112
  %v1022 = vpop.permute.xlu0 %1021
  %1023 = vrot.lane.b32.xlu0 %v32, 112
  %v1024 = vpop.permute.xlu0 %1023
  %1025 = vrot.lane.b32.xlu0 %v33, 112
  %v1026 = vpop.permute.xlu0 %1025
  %1027 = vrot.lane.b32.xlu0 %v34, 112
  %v1028 = vpop.permute.xlu0 %1027
  %1029 = vrot.lane.b32.xlu0 %v35, 112
  %v1030 = vpop.permute.xlu0 %1029
  %1031 = vrot.lane.b32.xlu0 %v36, 112
  %v1032 = vpop.permute.xlu0 %1031
  %1033 = vrot.lane.b32.xlu0 %v37, 112
  %v1034 = vpop.permute.xlu0 %1033
  %1035 = vrot.lane.b32.xlu0 %v38, 112
  %v1036 = vpop.permute.xlu0 %1035
  %1053 = vmatprep.subr.mxu0 0.0
  %1054 = vmatpush1.msra.mxu0 %v1006
  %1055 = vmatprep.subr.mxu0 0.0
  %1056 = vmatpush1.msra.mxu0 %v1008
  %1057 = vmatprep.subr.mxu0 0.0
  %1058 = vmatpush1.msra.mxu0 %v1010
  %1059 = vmatprep.subr.mxu0 0.0
  %1060 = vmatpush1.msra.mxu0 %v1012
  %1061 = vmatprep.subr.mxu0 0.0
  %1062 = vmatpush1.msra.mxu0 %v1014
  %1063 = vmatprep.subr.mxu0 0.0
  %1064 = vmatpush1.msra.mxu0 %v1016
  %1065 = vmatprep.subr.mxu0 0.0
  %1066 = vmatpush1.msra.mxu0 %v1018
  %1067 = vmatprep.subr.mxu0 0.0
  %1068 = vmatpush1.msra.mxu0 %v1020
  %1069 = vmatprep.subr.mxu0 0.0
  %1070 = vmatpush1.msra.mxu0 %v1022
  %1071 = vmatprep.subr.mxu0 0.0
  %1072 = vmatpush1.msra.mxu0 %v1024
  %1073 = vmatprep.subr.mxu0 0.0
  %1074 = vmatpush1.msra.mxu0 %v1026
  %1075 = vmatprep.subr.mxu0 0.0
  %1076 = vmatpush1.msra.mxu0 %v1028
  %1077 = vmatprep.subr.mxu0 0.0
  %1078 = vmatpush1.msra.mxu0 %v1030
  %1079 = vmatprep.subr.mxu0 0.0
  %1080 = vmatpush1.msra.mxu0 %v1032
  %1081 = vmatprep.subr.mxu0 0.0
  %1082 = vmatpush1.msra.mxu0 %v1034
  %1083 = vmatprep.subr.mxu0 0.0
  %1084 = vmatpush1.msra.mxu0 %v1036
  %1085 = vmatprep.subr.mxu0 0.0
  %1086 = vmatpush1.msra.mxu0 0.0
  %1087 = vmatprep.subr.mxu0 0.0
  %1088 = vmatpush1.msra.mxu0 0.0
  %1089 = vmatprep.subr.mxu0 0.0
  %1090 = vmatpush1.msra.mxu0 0.0
  %1091 = vmatprep.subr.mxu0 0.0
  %1092 = vmatpush1.msra.mxu0 0.0
  %1093 = vmatprep.subr.mxu0 0.0
  %1094 = vmatpush1.msra.mxu0 0.0
  %1095 = vmatprep.subr.mxu0 0.0
  %1096 = vmatpush1.msra.mxu0 0.0
  %1097 = vmatprep.subr.mxu0 0.0
  %1098 = vmatpush1.msra.mxu0 0.0
  %1099 = vmatprep.subr.mxu0 0.0
  %1100 = vmatpush1.msra.mxu0 0.0
  %1101 = vmatprep.subr.mxu0 0.0
  %1102 = vmatpush1.msra.mxu0 0.0
  %1103 = vmatprep.subr.mxu0 0.0
  %1104 = vmatpush1.msra.mxu0 0.0
  %1105 = vmatprep.subr.mxu0 0.0
  %1106 = vmatpush1.msra.mxu0 0.0
  %1107 = vmatprep.subr.mxu0 0.0
  %1108 = vmatpush1.msra.mxu0 0.0
  %1109 = vmatprep.subr.mxu0 0.0
  %1110 = vmatpush1.msra.mxu0 0.0
  %1111 = vmatprep.subr.mxu0 0.0
  %1112 = vmatpush1.msra.mxu0 0.0
  %1113 = vmatprep.subr.mxu0 0.0
  %1114 = vmatpush1.msra.mxu0 0.0
  %1115 = vmatprep.subr.mxu0 0.0
  %1116 = vmatpush1.msra.mxu0 0.0
  %1117 = vmatprep.mubr.f32.mxu0 0.0
  %1118 = vmatmul.mubr.f32.gmra.mrb[0].mxu0 %v1004
  %v1119 = vpop.f32.mrb[0].mxu0
  %v1120 = vadd.f32 0.0, %v1119
  %v1121 = vpop.f32.mrb[0].mxu0
  %1122 = vdwg.mxu0
  %v1123 = vadd.f32 %v998, %v1120
  %1124 = vset.pattern.permute.xlu0 9
  %1125 = vperm.xlu0 %1124, %v16
  %v1126 = vpop.permute.xlu0 %1125
  %vm1127 = vcmp.eq.s32.totalorder %v1126, %v15
  %v1128 = vsel %vm1127, 1, 0
  %v1129 = vcvt.s32.f32 %v1128
  %1130 = vrot.lane.b32.xlu0 %v23, 110
  %v1131 = vpop.permute.xlu0 %1130
  %1132 = vrot.lane.b32.xlu0 %v24, 110
  %v1133 = vpop.permute.xlu0 %1132
  %1134 = vrot.lane.b32.xlu0 %v25, 110
  %v1135 = vpop.permute.xlu0 %1134
  %1136 = vrot.lane.b32.xlu0 %v26, 110
  %v1137 = vpop.permute.xlu0 %1136
  %1138 = vrot.lane.b32.xlu0 %v27, 110
  %v1139 = vpop.permute.xlu0 %1138
  %1140 = vrot.lane.b32.xlu0 %v28, 110
  %v1141 = vpop.permute.xlu0 %1140
  %1142 = vrot.lane.b32.xlu0 %v29, 110
  %v1143 = vpop.permute.xlu0 %1142
  %1144 = vrot.lane.b32.xlu0 %v30, 110
  %v1145 = vpop.permute.xlu0 %1144
  %1146 = vrot.lane.b32.xlu0 %v31, 110
  %v1147 = vpop.permute.xlu0 %1146
  %1148 = vrot.lane.b32.xlu0 %v32, 110
  %v1149 = vpop.permute.xlu0 %1148
  %1150 = vrot.lane.b32.xlu0 %v33, 110
  %v1151 = vpop.permute.xlu0 %1150
  %1152 = vrot.lane.b32.xlu0 %v34, 110
  %v1153 = vpop.permute.xlu0 %1152
  %1154 = vrot.lane.b32.xlu0 %v35, 110
  %v1155 = vpop.permute.xlu0 %1154
  %1156 = vrot.lane.b32.xlu0 %v36, 110
  %v1157 = vpop.permute.xlu0 %1156
  %1158 = vrot.lane.b32.xlu0 %v37, 110
  %v1159 = vpop.permute.xlu0 %1158
  %1160 = vrot.lane.b32.xlu0 %v38, 110
  %v1161 = vpop.permute.xlu0 %1160
  %1178 = vmatprep.subr.mxu0 0.0
  %1179 = vmatpush1.msra.mxu0 %v1131
  %1180 = vmatprep.subr.mxu0 0.0
  %1181 = vmatpush1.msra.mxu0 %v1133
  %1182 = vmatprep.subr.mxu0 0.0
  %1183 = vmatpush1.msra.mxu0 %v1135
  %1184 = vmatprep.subr.mxu0 0.0
  %1185 = vmatpush1.msra.mxu0 %v1137
  %1186 = vmatprep.subr.mxu0 0.0
  %1187 = vmatpush1.msra.mxu0 %v1139
  %1188 = vmatprep.subr.mxu0 0.0
  %1189 = vmatpush1.msra.mxu0 %v1141
  %1190 = vmatprep.subr.mxu0 0.0
  %1191 = vmatpush1.msra.mxu0 %v1143
  %1192 = vmatprep.subr.mxu0 0.0
  %1193 = vmatpush1.msra.mxu0 %v1145
  %1194 = vmatprep.subr.mxu0 0.0
  %1195 = vmatpush1.msra.mxu0 %v1147
  %1196 = vmatprep.subr.mxu0 0.0
  %1197 = vmatpush1.msra.mxu0 %v1149
  %1198 = vmatprep.subr.mxu0 0.0
  %1199 = vmatpush1.msra.mxu0 %v1151
  %1200 = vmatprep.subr.mxu0 0.0
  %1201 = vmatpush1.msra.mxu0 %v1153
  %1202 = vmatprep.subr.mxu0 0.0
  %1203 = vmatpush1.msra.mxu0 %v1155
  %1204 = vmatprep.subr.mxu0 0.0
  %1205 = vmatpush1.msra.mxu0 %v1157
  %1206 = vmatprep.subr.mxu0 0.0
  %1207 = vmatpush1.msra.mxu0 %v1159
  %1208 = vmatprep.subr.mxu0 0.0
  %1209 = vmatpush1.msra.mxu0 %v1161
  %1210 = vmatprep.subr.mxu0 0.0
  %1211 = vmatpush1.msra.mxu0 0.0
  %1212 = vmatprep.subr.mxu0 0.0
  %1213 = vmatpush1.msra.mxu0 0.0
  %1214 = vmatprep.subr.mxu0 0.0
  %1215 = vmatpush1.msra.mxu0 0.0
  %1216 = vmatprep.subr.mxu0 0.0
  %1217 = vmatpush1.msra.mxu0 0.0
  %1218 = vmatprep.subr.mxu0 0.0
  %1219 = vmatpush1.msra.mxu0 0.0
  %1220 = vmatprep.subr.mxu0 0.0
  %1221 = vmatpush1.msra.mxu0 0.0
  %1222 = vmatprep.subr.mxu0 0.0
  %1223 = vmatpush1.msra.mxu0 0.0
  %1224 = vmatprep.subr.mxu0 0.0
  %1225 = vmatpush1.msra.mxu0 0.0
  %1226 = vmatprep.subr.mxu0 0.0
  %1227 = vmatpush1.msra.mxu0 0.0
  %1228 = vmatprep.subr.mxu0 0.0
  %1229 = vmatpush1.msra.mxu0 0.0
  %1230 = vmatprep.subr.mxu0 0.0
  %1231 = vmatpush1.msra.mxu0 0.0
  %1232 = vmatprep.subr.mxu0 0.0
  %1233 = vmatpush1.msra.mxu0 0.0
  %1234 = vmatprep.subr.mxu0 0.0
  %1235 = vmatpush1.msra.mxu0 0.0
  %1236 = vmatprep.subr.mxu0 0.0
  %1237 = vmatpush1.msra.mxu0 0.0
  %1238 = vmatprep.subr.mxu0 0.0
  %1239 = vmatpush1.msra.mxu0 0.0
  %1240 = vmatprep.subr.mxu0 0.0
  %1241 = vmatpush1.msra.mxu0 0.0
  %1242 = vmatprep.mubr.f32.mxu0 0.0
  %1243 = vmatmul.mubr.f32.gmra.mrb[0].mxu0 %v1129
  %v1244 = vpop.f32.mrb[0].mxu0
  %v1245 = vadd.f32 0.0, %v1244
  %v1246 = vpop.f32.mrb[0].mxu0
  %1247 = vdwg.mxu0
  %v1248 = vadd.f32 %v1123, %v1245
  %1249 = vset.pattern.permute.xlu0 10
  %1250 = vperm.xlu0 %1249, %v16
  %v1251 = vpop.permute.xlu0 %1250
  %vm1252 = vcmp.eq.s32.totalorder %v1251, %v15
  %v1253 = vsel %vm1252, 1, 0
  %v1254 = vcvt.s32.f32 %v1253
  %1255 = vrot.lane.b32.xlu0 %v23, 108
  %v1256 = vpop.permute.xlu0 %1255
  %1257 = vrot.lane.b32.xlu0 %v24, 108
  %v1258 = vpop.permute.xlu0 %1257
  %1259 = vrot.lane.b32.xlu0 %v25, 108
  %v1260 = vpop.permute.xlu0 %1259
  %1261 = vrot.lane.b32.xlu0 %v26, 108
  %v1262 = vpop.permute.xlu0 %1261
  %1263 = vrot.lane.b32.xlu0 %v27, 108
  %v1264 = vpop.permute.xlu0 %1263
  %1265 = vrot.lane.b32.xlu0 %v28, 108
  %v1266 = vpop.permute.xlu0 %1265
  %1267 = vrot.lane.b32.xlu0 %v29, 108
  %v1268 = vpop.permute.xlu0 %1267
  %1269 = vrot.lane.b32.xlu0 %v30, 108
  %v1270 = vpop.permute.xlu0 %1269
  %1271 = vrot.lane.b32.xlu0 %v31, 108
  %v1272 = vpop.permute.xlu0 %1271
  %1273 = vrot.lane.b32.xlu0 %v32, 108
  %v1274 = vpop.permute.xlu0 %1273
  %1275 = vrot.lane.b32.xlu0 %v33, 108
  %v1276 = vpop.permute.xlu0 %1275
  %1277 = vrot.lane.b32.xlu0 %v34, 108
  %v1278 = vpop.permute.xlu0 %1277
  %1279 = vrot.lane.b32.xlu0 %v35, 108
  %v1280 = vpop.permute.xlu0 %1279
  %1281 = vrot.lane.b32.xlu0 %v36, 108
  %v1282 = vpop.permute.xlu0 %1281
  %1283 = vrot.lane.b32.xlu0 %v37, 108
  %v1284 = vpop.permute.xlu0 %1283
  %1285 = vrot.lane.b32.xlu0 %v38, 108
  %v1286 = vpop.permute.xlu0 %1285
  %1303 = vmatprep.subr.mxu0 0.0
  %1304 = vmatpush1.msra.mxu0 %v1256
  %1305 = vmatprep.subr.mxu0 0.0
  %1306 = vmatpush1.msra.mxu0 %v1258
  %1307 = vmatprep.subr.mxu0 0.0
  %1308 = vmatpush1.msra.mxu0 %v1260
  %1309 = vmatprep.subr.mxu0 0.0
  %1310 = vmatpush1.msra.mxu0 %v1262
  %1311 = vmatprep.subr.mxu0 0.0
  %1312 = vmatpush1.msra.mxu0 %v1264
  %1313 = vmatprep.subr.mxu0 0.0
  %1314 = vmatpush1.msra.mxu0 %v1266
  %1315 = vmatprep.subr.mxu0 0.0
  %1316 = vmatpush1.msra.mxu0 %v1268
  %1317 = vmatprep.subr.mxu0 0.0
  %1318 = vmatpush1.msra.mxu0 %v1270
  %1319 = vmatprep.subr.mxu0 0.0
  %1320 = vmatpush1.msra.mxu0 %v1272
  %1321 = vmatprep.subr.mxu0 0.0
  %1322 = vmatpush1.msra.mxu0 %v1274
  %1323 = vmatprep.subr.mxu0 0.0
  %1324 = vmatpush1.msra.mxu0 %v1276
  %1325 = vmatprep.subr.mxu0 0.0
  %1326 = vmatpush1.msra.mxu0 %v1278
  %1327 = vmatprep.subr.mxu0 0.0
  %1328 = vmatpush1.msra.mxu0 %v1280
  %1329 = vmatprep.subr.mxu0 0.0
  %1330 = vmatpush1.msra.mxu0 %v1282
  %1331 = vmatprep.subr.mxu0 0.0
  %1332 = vmatpush1.msra.mxu0 %v1284
  %1333 = vmatprep.subr.mxu0 0.0
  %1334 = vmatpush1.msra.mxu0 %v1286
  %1335 = vmatprep.subr.mxu0 0.0
  %1336 = vmatpush1.msra.mxu0 0.0
  %1337 = vmatprep.subr.mxu0 0.0
  %1338 = vmatpush1.msra.mxu0 0.0
  %1339 = vmatprep.subr.mxu0 0.0
  %1340 = vmatpush1.msra.mxu0 0.0
  %1341 = vmatprep.subr.mxu0 0.0
  %1342 = vmatpush1.msra.mxu0 0.0
  %1343 = vmatprep.subr.mxu0 0.0
  %1344 = vmatpush1.msra.mxu0 0.0
  %1345 = vmatprep.subr.mxu0 0.0
  %1346 = vmatpush1.msra.mxu0 0.0
  %1347 = vmatprep.subr.mxu0 0.0
  %1348 = vmatpush1.msra.mxu0 0.0
  %1349 = vmatprep.subr.mxu0 0.0
  %1350 = vmatpush1.msra.mxu0 0.0
  %1351 = vmatprep.subr.mxu0 0.0
  %1352 = vmatpush1.msra.mxu0 0.0
  %1353 = vmatprep.subr.mxu0 0.0
  %1354 = vmatpush1.msra.mxu0 0.0
  %1355 = vmatprep.subr.mxu0 0.0
  %1356 = vmatpush1.msra.mxu0 0.0
  %1357 = vmatprep.subr.mxu0 0.0
  %1358 = vmatpush1.msra.mxu0 0.0
  %1359 = vmatprep.subr.mxu0 0.0
  %1360 = vmatpush1.msra.mxu0 0.0
  %1361 = vmatprep.subr.mxu0 0.0
  %1362 = vmatpush1.msra.mxu0 0.0
  %1363 = vmatprep.subr.mxu0 0.0
  %1364 = vmatpush1.msra.mxu0 0.0
  %1365 = vmatprep.subr.mxu0 0.0
  %1366 = vmatpush1.msra.mxu0 0.0
  %1367 = vmatprep.mubr.f32.mxu0 0.0
  %1368 = vmatmul.mubr.f32.gmra.mrb[0].mxu0 %v1254
  %v1369 = vpop.f32.mrb[0].mxu0
  %v1370 = vadd.f32 0.0, %v1369
  %v1371 = vpop.f32.mrb[0].mxu0
  %1372 = vdwg.mxu0
  %v1373 = vadd.f32 %v1248, %v1370
  %1374 = vset.pattern.permute.xlu0 11
  %1375 = vperm.xlu0 %1374, %v16
  %v1376 = vpop.permute.xlu0 %1375
  %vm1377 = vcmp.eq.s32.totalorder %v1376, %v15
  %v1378 = vsel %vm1377, 1, 0
  %v1379 = vcvt.s32.f32 %v1378
  %1380 = vrot.lane.b32.xlu0 %v23, 106
  %v1381 = vpop.permute.xlu0 %1380
  %1382 = vrot.lane.b32.xlu0 %v24, 106
  %v1383 = vpop.permute.xlu0 %1382
  %1384 = vrot.lane.b32.xlu0 %v25, 106
  %v1385 = vpop.permute.xlu0 %1384
  %1386 = vrot.lane.b32.xlu0 %v26, 106
  %v1387 = vpop.permute.xlu0 %1386
  %1388 = vrot.lane.b32.xlu0 %v27, 106
  %v1389 = vpop.permute.xlu0 %1388
  %1390 = vrot.lane.b32.xlu0 %v28, 106
  %v1391 = vpop.permute.xlu0 %1390
  %1392 = vrot.lane.b32.xlu0 %v29, 106
  %v1393 = vpop.permute.xlu0 %1392
  %1394 = vrot.lane.b32.xlu0 %v30, 106
  %v1395 = vpop.permute.xlu0 %1394
  %1396 = vrot.lane.b32.xlu0 %v31, 106
  %v1397 = vpop.permute.xlu0 %1396
  %1398 = vrot.lane.b32.xlu0 %v32, 106
  %v1399 = vpop.permute.xlu0 %1398
  %1400 = vrot.lane.b32.xlu0 %v33, 106
  %v1401 = vpop.permute.xlu0 %1400
  %1402 = vrot.lane.b32.xlu0 %v34, 106
  %v1403 = vpop.permute.xlu0 %1402
  %1404 = vrot.lane.b32.xlu0 %v35, 106
  %v1405 = vpop.permute.xlu0 %1404
  %1406 = vrot.lane.b32.xlu0 %v36, 106
  %v1407 = vpop.permute.xlu0 %1406
  %1408 = vrot.lane.b32.xlu0 %v37, 106
  %v1409 = vpop.permute.xlu0 %1408
  %1410 = vrot.lane.b32.xlu0 %v38, 106
  %v1411 = vpop.permute.xlu0 %1410
  %1428 = vmatprep.subr.mxu0 0.0
  %1429 = vmatpush1.msra.mxu0 %v1381
  %1430 = vmatprep.subr.mxu0 0.0
  %1431 = vmatpush1.msra.mxu0 %v1383
  %1432 = vmatprep.subr.mxu0 0.0
  %1433 = vmatpush1.msra.mxu0 %v1385
  %1434 = vmatprep.subr.mxu0 0.0
  %1435 = vmatpush1.msra.mxu0 %v1387
  %1436 = vmatprep.subr.mxu0 0.0
  %1437 = vmatpush1.msra.mxu0 %v1389
  %1438 = vmatprep.subr.mxu0 0.0
  %1439 = vmatpush1.msra.mxu0 %v1391
  %1440 = vmatprep.subr.mxu0 0.0
  %1441 = vmatpush1.msra.mxu0 %v1393
  %1442 = vmatprep.subr.mxu0 0.0
  %1443 = vmatpush1.msra.mxu0 %v1395
  %1444 = vmatprep.subr.mxu0 0.0
  %1445 = vmatpush1.msra.mxu0 %v1397
  %1446 = vmatprep.subr.mxu0 0.0
  %1447 = vmatpush1.msra.mxu0 %v1399
  %1448 = vmatprep.subr.mxu0 0.0
  %1449 = vmatpush1.msra.mxu0 %v1401
  %1450 = vmatprep.subr.mxu0 0.0
  %1451 = vmatpush1.msra.mxu0 %v1403
  %1452 = vmatprep.subr.mxu0 0.0
  %1453 = vmatpush1.msra.mxu0 %v1405
  %1454 = vmatprep.subr.mxu0 0.0
  %1455 = vmatpush1.msra.mxu0 %v1407
  %1456 = vmatprep.subr.mxu0 0.0
  %1457 = vmatpush1.msra.mxu0 %v1409
  %1458 = vmatprep.subr.mxu0 0.0
  %1459 = vmatpush1.msra.mxu0 %v1411
  %1460 = vmatprep.subr.mxu0 0.0
  %1461 = vmatpush1.msra.mxu0 0.0
  %1462 = vmatprep.subr.mxu0 0.0
  %1463 = vmatpush1.msra.mxu0 0.0
  %1464 = vmatprep.subr.mxu0 0.0
  %1465 = vmatpush1.msra.mxu0 0.0
  %1466 = vmatprep.subr.mxu0 0.0
  %1467 = vmatpush1.msra.mxu0 0.0
  %1468 = vmatprep.subr.mxu0 0.0
  %1469 = vmatpush1.msra.mxu0 0.0
  %1470 = vmatprep.subr.mxu0 0.0
  %1471 = vmatpush1.msra.mxu0 0.0
  %1472 = vmatprep.subr.mxu0 0.0
  %1473 = vmatpush1.msra.mxu0 0.0
  %1474 = vmatprep.subr.mxu0 0.0
  %1475 = vmatpush1.msra.mxu0 0.0
  %1476 = vmatprep.subr.mxu0 0.0
  %1477 = vmatpush1.msra.mxu0 0.0
  %1478 = vmatprep.subr.mxu0 0.0
  %1479 = vmatpush1.msra.mxu0 0.0
  %1480 = vmatprep.subr.mxu0 0.0
  %1481 = vmatpush1.msra.mxu0 0.0
  %1482 = vmatprep.subr.mxu0 0.0
  %1483 = vmatpush1.msra.mxu0 0.0
  %1484 = vmatprep.subr.mxu0 0.0
  %1485 = vmatpush1.msra.mxu0 0.0
  %1486 = vmatprep.subr.mxu0 0.0
  %1487 = vmatpush1.msra.mxu0 0.0
  %1488 = vmatprep.subr.mxu0 0.0
  %1489 = vmatpush1.msra.mxu0 0.0
  %1490 = vmatprep.subr.mxu0 0.0
  %1491 = vmatpush1.msra.mxu0 0.0
  %1492 = vmatprep.mubr.f32.mxu0 0.0
  %1493 = vmatmul.mubr.f32.gmra.mrb[0].mxu0 %v1379
  %v1494 = vpop.f32.mrb[0].mxu0
  %v1495 = vadd.f32 0.0, %v1494
  %v1496 = vpop.f32.mrb[0].mxu0
  %1497 = vdwg.mxu0
  %v1498 = vadd.f32 %v1373, %v1495
  %1499 = vset.pattern.permute.xlu0 12
  %1500 = vperm.xlu0 %1499, %v16
  %v1501 = vpop.permute.xlu0 %1500
  %vm1502 = vcmp.eq.s32.totalorder %v1501, %v15
  %v1503 = vsel %vm1502, 1, 0
  %v1504 = vcvt.s32.f32 %v1503
  %1505 = vrot.lane.b32.xlu0 %v23, 104
  %v1506 = vpop.permute.xlu0 %1505
  %1507 = vrot.lane.b32.xlu0 %v24, 104
  %v1508 = vpop.permute.xlu0 %1507
  %1509 = vrot.lane.b32.xlu0 %v25, 104
  %v1510 = vpop.permute.xlu0 %1509
  %1511 = vrot.lane.b32.xlu0 %v26, 104
  %v1512 = vpop.permute.xlu0 %1511
  %1513 = vrot.lane.b32.xlu0 %v27, 104
  %v1514 = vpop.permute.xlu0 %1513
  %1515 = vrot.lane.b32.xlu0 %v28, 104
  %v1516 = vpop.permute.xlu0 %1515
  %1517 = vrot.lane.b32.xlu0 %v29, 104
  %v1518 = vpop.permute.xlu0 %1517
  %1519 = vrot.lane.b32.xlu0 %v30, 104
  %v1520 = vpop.permute.xlu0 %1519
  %1521 = vrot.lane.b32.xlu0 %v31, 104
  %v1522 = vpop.permute.xlu0 %1521
  %1523 = vrot.lane.b32.xlu0 %v32, 104
  %v1524 = vpop.permute.xlu0 %1523
  %1525 = vrot.lane.b32.xlu0 %v33, 104
  %v1526 = vpop.permute.xlu0 %1525
  %1527 = vrot.lane.b32.xlu0 %v34, 104
  %v1528 = vpop.permute.xlu0 %1527
  %1529 = vrot.lane.b32.xlu0 %v35, 104
  %v1530 = vpop.permute.xlu0 %1529
  %1531 = vrot.lane.b32.xlu0 %v36, 104
  %v1532 = vpop.permute.xlu0 %1531
  %1533 = vrot.lane.b32.xlu0 %v37, 104
  %v1534 = vpop.permute.xlu0 %1533
  %1535 = vrot.lane.b32.xlu0 %v38, 104
  %v1536 = vpop.permute.xlu0 %1535
  %1553 = vmatprep.subr.mxu0 0.0
  %1554 = vmatpush1.msra.mxu0 %v1506
  %1555 = vmatprep.subr.mxu0 0.0
  %1556 = vmatpush1.msra.mxu0 %v1508
  %1557 = vmatprep.subr.mxu0 0.0
  %1558 = vmatpush1.msra.mxu0 %v1510
  %1559 = vmatprep.subr.mxu0 0.0
  %1560 = vmatpush1.msra.mxu0 %v1512
  %1561 = vmatprep.subr.mxu0 0.0
  %1562 = vmatpush1.msra.mxu0 %v1514
  %1563 = vmatprep.subr.mxu0 0.0
  %1564 = vmatpush1.msra.mxu0 %v1516
  %1565 = vmatprep.subr.mxu0 0.0
  %1566 = vmatpush1.msra.mxu0 %v1518
  %1567 = vmatprep.subr.mxu0 0.0
  %1568 = vmatpush1.msra.mxu0 %v1520
  %1569 = vmatprep.subr.mxu0 0.0
  %1570 = vmatpush1.msra.mxu0 %v1522
  %1571 = vmatprep.subr.mxu0 0.0
  %1572 = vmatpush1.msra.mxu0 %v1524
  %1573 = vmatprep.subr.mxu0 0.0
  %1574 = vmatpush1.msra.mxu0 %v1526
  %1575 = vmatprep.subr.mxu0 0.0
  %1576 = vmatpush1.msra.mxu0 %v1528
  %1577 = vmatprep.subr.mxu0 0.0
  %1578 = vmatpush1.msra.mxu0 %v1530
  %1579 = vmatprep.subr.mxu0 0.0
  %1580 = vmatpush1.msra.mxu0 %v1532
  %1581 = vmatprep.subr.mxu0 0.0
  %1582 = vmatpush1.msra.mxu0 %v1534
  %1583 = vmatprep.subr.mxu0 0.0
  %1584 = vmatpush1.msra.mxu0 %v1536
  %1585 = vmatprep.subr.mxu0 0.0
  %1586 = vmatpush1.msra.mxu0 0.0
  %1587 = vmatprep.subr.mxu0 0.0
  %1588 = vmatpush1.msra.mxu0 0.0
  %1589 = vmatprep.subr.mxu0 0.0
  %1590 = vmatpush1.msra.mxu0 0.0
  %1591 = vmatprep.subr.mxu0 0.0
  %1592 = vmatpush1.msra.mxu0 0.0
  %1593 = vmatprep.subr.mxu0 0.0
  %1594 = vmatpush1.msra.mxu0 0.0
  %1595 = vmatprep.subr.mxu0 0.0
  %1596 = vmatpush1.msra.mxu0 0.0
  %1597 = vmatprep.subr.mxu0 0.0
  %1598 = vmatpush1.msra.mxu0 0.0
  %1599 = vmatprep.subr.mxu0 0.0
  %1600 = vmatpush1.msra.mxu0 0.0
  %1601 = vmatprep.subr.mxu0 0.0
  %1602 = vmatpush1.msra.mxu0 0.0
  %1603 = vmatprep.subr.mxu0 0.0
  %1604 = vmatpush1.msra.mxu0 0.0
  %1605 = vmatprep.subr.mxu0 0.0
  %1606 = vmatpush1.msra.mxu0 0.0
  %1607 = vmatprep.subr.mxu0 0.0
  %1608 = vmatpush1.msra.mxu0 0.0
  %1609 = vmatprep.subr.mxu0 0.0
  %1610 = vmatpush1.msra.mxu0 0.0
  %1611 = vmatprep.subr.mxu0 0.0
  %1612 = vmatpush1.msra.mxu0 0.0
  %1613 = vmatprep.subr.mxu0 0.0
  %1614 = vmatpush1.msra.mxu0 0.0
  %1615 = vmatprep.subr.mxu0 0.0
  %1616 = vmatpush1.msra.mxu0 0.0
  %1617 = vmatprep.mubr.f32.mxu0 0.0
  %1618 = vmatmul.mubr.f32.gmra.mrb[0].mxu0 %v1504
  %v1619 = vpop.f32.mrb[0].mxu0
  %v1620 = vadd.f32 0.0, %v1619
  %v1621 = vpop.f32.mrb[0].mxu0
  %1622 = vdwg.mxu0
  %v1623 = vadd.f32 %v1498, %v1620
  %1624 = vset.pattern.permute.xlu0 13
  %1625 = vperm.xlu0 %1624, %v16
  %v1626 = vpop.permute.xlu0 %1625
  %vm1627 = vcmp.eq.s32.totalorder %v1626, %v15
  %v1628 = vsel %vm1627, 1, 0
  %v1629 = vcvt.s32.f32 %v1628
  %1630 = vrot.lane.b32.xlu0 %v23, 102
  %v1631 = vpop.permute.xlu0 %1630
  %1632 = vrot.lane.b32.xlu0 %v24, 102
  %v1633 = vpop.permute.xlu0 %1632
  %1634 = vrot.lane.b32.xlu0 %v25, 102
  %v1635 = vpop.permute.xlu0 %1634
  %1636 = vrot.lane.b32.xlu0 %v26, 102
  %v1637 = vpop.permute.xlu0 %1636
  %1638 = vrot.lane.b32.xlu0 %v27, 102
  %v1639 = vpop.permute.xlu0 %1638
  %1640 = vrot.lane.b32.xlu0 %v28, 102
  %v1641 = vpop.permute.xlu0 %1640
  %1642 = vrot.lane.b32.xlu0 %v29, 102
  %v1643 = vpop.permute.xlu0 %1642
  %1644 = vrot.lane.b32.xlu0 %v30, 102
  %v1645 = vpop.permute.xlu0 %1644
  %1646 = vrot.lane.b32.xlu0 %v31, 102
  %v1647 = vpop.permute.xlu0 %1646
  %1648 = vrot.lane.b32.xlu0 %v32, 102
  %v1649 = vpop.permute.xlu0 %1648
  %1650 = vrot.lane.b32.xlu0 %v33, 102
  %v1651 = vpop.permute.xlu0 %1650
  %1652 = vrot.lane.b32.xlu0 %v34, 102
  %v1653 = vpop.permute.xlu0 %1652
  %1654 = vrot.lane.b32.xlu0 %v35, 102
  %v1655 = vpop.permute.xlu0 %1654
  %1656 = vrot.lane.b32.xlu0 %v36, 102
  %v1657 = vpop.permute.xlu0 %1656
  %1658 = vrot.lane.b32.xlu0 %v37, 102
  %v1659 = vpop.permute.xlu0 %1658
  %1660 = vrot.lane.b32.xlu0 %v38, 102
  %v1661 = vpop.permute.xlu0 %1660
  %1678 = vmatprep.subr.mxu0 0.0
  %1679 = vmatpush1.msra.mxu0 %v1631
  %1680 = vmatprep.subr.mxu0 0.0
  %1681 = vmatpush1.msra.mxu0 %v1633
  %1682 = vmatprep.subr.mxu0 0.0
  %1683 = vmatpush1.msra.mxu0 %v1635
  %1684 = vmatprep.subr.mxu0 0.0
  %1685 = vmatpush1.msra.mxu0 %v1637
  %1686 = vmatprep.subr.mxu0 0.0
  %1687 = vmatpush1.msra.mxu0 %v1639
  %1688 = vmatprep.subr.mxu0 0.0
  %1689 = vmatpush1.msra.mxu0 %v1641
  %1690 = vmatprep.subr.mxu0 0.0
  %1691 = vmatpush1.msra.mxu0 %v1643
  %1692 = vmatprep.subr.mxu0 0.0
  %1693 = vmatpush1.msra.mxu0 %v1645
  %1694 = vmatprep.subr.mxu0 0.0
  %1695 = vmatpush1.msra.mxu0 %v1647
  %1696 = vmatprep.subr.mxu0 0.0
  %1697 = vmatpush1.msra.mxu0 %v1649
  %1698 = vmatprep.subr.mxu0 0.0
  %1699 = vmatpush1.msra.mxu0 %v1651
  %1700 = vmatprep.subr.mxu0 0.0
  %1701 = vmatpush1.msra.mxu0 %v1653
  %1702 = vmatprep.subr.mxu0 0.0
  %1703 = vmatpush1.msra.mxu0 %v1655
  %1704 = vmatprep.subr.mxu0 0.0
  %1705 = vmatpush1.msra.mxu0 %v1657
  %1706 = vmatprep.subr.mxu0 0.0
  %1707 = vmatpush1.msra.mxu0 %v1659
  %1708 = vmatprep.subr.mxu0 0.0
  %1709 = vmatpush1.msra.mxu0 %v1661
  %1710 = vmatprep.subr.mxu0 0.0
  %1711 = vmatpush1.msra.mxu0 0.0
  %1712 = vmatprep.subr.mxu0 0.0
  %1713 = vmatpush1.msra.mxu0 0.0
  %1714 = vmatprep.subr.mxu0 0.0
  %1715 = vmatpush1.msra.mxu0 0.0
  %1716 = vmatprep.subr.mxu0 0.0
  %1717 = vmatpush1.msra.mxu0 0.0
  %1718 = vmatprep.subr.mxu0 0.0
  %1719 = vmatpush1.msra.mxu0 0.0
  %1720 = vmatprep.subr.mxu0 0.0
  %1721 = vmatpush1.msra.mxu0 0.0
  %1722 = vmatprep.subr.mxu0 0.0
  %1723 = vmatpush1.msra.mxu0 0.0
  %1724 = vmatprep.subr.mxu0 0.0
  %1725 = vmatpush1.msra.mxu0 0.0
  %1726 = vmatprep.subr.mxu0 0.0
  %1727 = vmatpush1.msra.mxu0 0.0
  %1728 = vmatprep.subr.mxu0 0.0
  %1729 = vmatpush1.msra.mxu0 0.0
  %1730 = vmatprep.subr.mxu0 0.0
  %1731 = vmatpush1.msra.mxu0 0.0
  %1732 = vmatprep.subr.mxu0 0.0
  %1733 = vmatpush1.msra.mxu0 0.0
  %1734 = vmatprep.subr.mxu0 0.0
  %1735 = vmatpush1.msra.mxu0 0.0
  %1736 = vmatprep.subr.mxu0 0.0
  %1737 = vmatpush1.msra.mxu0 0.0
  %1738 = vmatprep.subr.mxu0 0.0
  %1739 = vmatpush1.msra.mxu0 0.0
  %1740 = vmatprep.subr.mxu0 0.0
  %1741 = vmatpush1.msra.mxu0 0.0
  %1742 = vmatprep.mubr.f32.mxu0 0.0
  %1743 = vmatmul.mubr.f32.gmra.mrb[0].mxu0 %v1629
  %v1744 = vpop.f32.mrb[0].mxu0
  %v1745 = vadd.f32 0.0, %v1744
  %v1746 = vpop.f32.mrb[0].mxu0
  %1747 = vdwg.mxu0
  %v1748 = vadd.f32 %v1623, %v1745
  %1749 = vset.pattern.permute.xlu0 14
  %1750 = vperm.xlu0 %1749, %v16
  %v1751 = vpop.permute.xlu0 %1750
  %vm1752 = vcmp.eq.s32.totalorder %v1751, %v15
  %v1753 = vsel %vm1752, 1, 0
  %v1754 = vcvt.s32.f32 %v1753
  %1755 = vrot.lane.b32.xlu0 %v23, 100
  %v1756 = vpop.permute.xlu0 %1755
  %1757 = vrot.lane.b32.xlu0 %v24, 100
  %v1758 = vpop.permute.xlu0 %1757
  %1759 = vrot.lane.b32.xlu0 %v25, 100
  %v1760 = vpop.permute.xlu0 %1759
  %1761 = vrot.lane.b32.xlu0 %v26, 100
  %v1762 = vpop.permute.xlu0 %1761
  %1763 = vrot.lane.b32.xlu0 %v27, 100
  %v1764 = vpop.permute.xlu0 %1763
  %1765 = vrot.lane.b32.xlu0 %v28, 100
  %v1766 = vpop.permute.xlu0 %1765
  %1767 = vrot.lane.b32.xlu0 %v29, 100
  %v1768 = vpop.permute.xlu0 %1767
  %1769 = vrot.lane.b32.xlu0 %v30, 100
  %v1770 = vpop.permute.xlu0 %1769
  %1771 = vrot.lane.b32.xlu0 %v31, 100
  %v1772 = vpop.permute.xlu0 %1771
  %1773 = vrot.lane.b32.xlu0 %v32, 100
  %v1774 = vpop.permute.xlu0 %1773
  %1775 = vrot.lane.b32.xlu0 %v33, 100
  %v1776 = vpop.permute.xlu0 %1775
  %1777 = vrot.lane.b32.xlu0 %v34, 100
  %v1778 = vpop.permute.xlu0 %1777
  %1779 = vrot.lane.b32.xlu0 %v35, 100
  %v1780 = vpop.permute.xlu0 %1779
  %1781 = vrot.lane.b32.xlu0 %v36, 100
  %v1782 = vpop.permute.xlu0 %1781
  %1783 = vrot.lane.b32.xlu0 %v37, 100
  %v1784 = vpop.permute.xlu0 %1783
  %1785 = vrot.lane.b32.xlu0 %v38, 100
  %v1786 = vpop.permute.xlu0 %1785
  %1803 = vmatprep.subr.mxu0 0.0
  %1804 = vmatpush1.msra.mxu0 %v1756
  %1805 = vmatprep.subr.mxu0 0.0
  %1806 = vmatpush1.msra.mxu0 %v1758
  %1807 = vmatprep.subr.mxu0 0.0
  %1808 = vmatpush1.msra.mxu0 %v1760
  %1809 = vmatprep.subr.mxu0 0.0
  %1810 = vmatpush1.msra.mxu0 %v1762
  %1811 = vmatprep.subr.mxu0 0.0
  %1812 = vmatpush1.msra.mxu0 %v1764
  %1813 = vmatprep.subr.mxu0 0.0
  %1814 = vmatpush1.msra.mxu0 %v1766
  %1815 = vmatprep.subr.mxu0 0.0
  %1816 = vmatpush1.msra.mxu0 %v1768
  %1817 = vmatprep.subr.mxu0 0.0
  %1818 = vmatpush1.msra.mxu0 %v1770
  %1819 = vmatprep.subr.mxu0 0.0
  %1820 = vmatpush1.msra.mxu0 %v1772
  %1821 = vmatprep.subr.mxu0 0.0
  %1822 = vmatpush1.msra.mxu0 %v1774
  %1823 = vmatprep.subr.mxu0 0.0
  %1824 = vmatpush1.msra.mxu0 %v1776
  %1825 = vmatprep.subr.mxu0 0.0
  %1826 = vmatpush1.msra.mxu0 %v1778
  %1827 = vmatprep.subr.mxu0 0.0
  %1828 = vmatpush1.msra.mxu0 %v1780
  %1829 = vmatprep.subr.mxu0 0.0
  %1830 = vmatpush1.msra.mxu0 %v1782
  %1831 = vmatprep.subr.mxu0 0.0
  %1832 = vmatpush1.msra.mxu0 %v1784
  %1833 = vmatprep.subr.mxu0 0.0
  %1834 = vmatpush1.msra.mxu0 %v1786
  %1835 = vmatprep.subr.mxu0 0.0
  %1836 = vmatpush1.msra.mxu0 0.0
  %1837 = vmatprep.subr.mxu0 0.0
  %1838 = vmatpush1.msra.mxu0 0.0
  %1839 = vmatprep.subr.mxu0 0.0
  %1840 = vmatpush1.msra.mxu0 0.0
  %1841 = vmatprep.subr.mxu0 0.0
  %1842 = vmatpush1.msra.mxu0 0.0
  %1843 = vmatprep.subr.mxu0 0.0
  %1844 = vmatpush1.msra.mxu0 0.0
  %1845 = vmatprep.subr.mxu0 0.0
  %1846 = vmatpush1.msra.mxu0 0.0
  %1847 = vmatprep.subr.mxu0 0.0
  %1848 = vmatpush1.msra.mxu0 0.0
  %1849 = vmatprep.subr.mxu0 0.0
  %1850 = vmatpush1.msra.mxu0 0.0
  %1851 = vmatprep.subr.mxu0 0.0
  %1852 = vmatpush1.msra.mxu0 0.0
  %1853 = vmatprep.subr.mxu0 0.0
  %1854 = vmatpush1.msra.mxu0 0.0
  %1855 = vmatprep.subr.mxu0 0.0
  %1856 = vmatpush1.msra.mxu0 0.0
  %1857 = vmatprep.subr.mxu0 0.0
  %1858 = vmatpush1.msra.mxu0 0.0
  %1859 = vmatprep.subr.mxu0 0.0
  %1860 = vmatpush1.msra.mxu0 0.0
  %1861 = vmatprep.subr.mxu0 0.0
  %1862 = vmatpush1.msra.mxu0 0.0
  %1863 = vmatprep.subr.mxu0 0.0
  %1864 = vmatpush1.msra.mxu0 0.0
  %1865 = vmatprep.subr.mxu0 0.0
  %1866 = vmatpush1.msra.mxu0 0.0
  %1867 = vmatprep.mubr.f32.mxu0 0.0
  %1868 = vmatmul.mubr.f32.gmra.mrb[0].mxu0 %v1754
  %v1869 = vpop.f32.mrb[0].mxu0
  %v1870 = vadd.f32 0.0, %v1869
  %v1871 = vpop.f32.mrb[0].mxu0
  %1872 = vdwg.mxu0
  %v1873 = vadd.f32 %v1748, %v1870
  %1874 = vset.pattern.permute.xlu0 15
  %1875 = vperm.xlu0 %1874, %v16
  %v1876 = vpop.permute.xlu0 %1875
  %vm1877 = vcmp.eq.s32.totalorder %v1876, %v15
  %v1878 = vsel %vm1877, 1, 0
  %v1879 = vcvt.s32.f32 %v1878
  %1880 = vrot.lane.b32.xlu0 %v23, 98
  %v1881 = vpop.permute.xlu0 %1880
  %1882 = vrot.lane.b32.xlu0 %v24, 98
  %v1883 = vpop.permute.xlu0 %1882
  %1884 = vrot.lane.b32.xlu0 %v25, 98
  %v1885 = vpop.permute.xlu0 %1884
  %1886 = vrot.lane.b32.xlu0 %v26, 98
  %v1887 = vpop.permute.xlu0 %1886
  %1888 = vrot.lane.b32.xlu0 %v27, 98
  %v1889 = vpop.permute.xlu0 %1888
  %1890 = vrot.lane.b32.xlu0 %v28, 98
  %v1891 = vpop.permute.xlu0 %1890
  %1892 = vrot.lane.b32.xlu0 %v29, 98
  %v1893 = vpop.permute.xlu0 %1892
  %1894 = vrot.lane.b32.xlu0 %v30, 98
  %v1895 = vpop.permute.xlu0 %1894
  %1896 = vrot.lane.b32.xlu0 %v31, 98
  %v1897 = vpop.permute.xlu0 %1896
  %1898 = vrot.lane.b32.xlu0 %v32, 98
  %v1899 = vpop.permute.xlu0 %1898
  %1900 = vrot.lane.b32.xlu0 %v33, 98
  %v1901 = vpop.permute.xlu0 %1900
  %1902 = vrot.lane.b32.xlu0 %v34, 98
  %v1903 = vpop.permute.xlu0 %1902
  %1904 = vrot.lane.b32.xlu0 %v35, 98
  %v1905 = vpop.permute.xlu0 %1904
  %1906 = vrot.lane.b32.xlu0 %v36, 98
  %v1907 = vpop.permute.xlu0 %1906
  %1908 = vrot.lane.b32.xlu0 %v37, 98
  %v1909 = vpop.permute.xlu0 %1908
  %1910 = vrot.lane.b32.xlu0 %v38, 98
  %v1911 = vpop.permute.xlu0 %1910
  %1928 = vmatprep.subr.mxu0 0.0
  %1929 = vmatpush1.msra.mxu0 %v1881
  %1930 = vmatprep.subr.mxu0 0.0
  %1931 = vmatpush1.msra.mxu0 %v1883
  %1932 = vmatprep.subr.mxu0 0.0
  %1933 = vmatpush1.msra.mxu0 %v1885
  %1934 = vmatprep.subr.mxu0 0.0
  %1935 = vmatpush1.msra.mxu0 %v1887
  %1936 = vmatprep.subr.mxu0 0.0
  %1937 = vmatpush1.msra.mxu0 %v1889
  %1938 = vmatprep.subr.mxu0 0.0
  %1939 = vmatpush1.msra.mxu0 %v1891
  %1940 = vmatprep.subr.mxu0 0.0
  %1941 = vmatpush1.msra.mxu0 %v1893
  %1942 = vmatprep.subr.mxu0 0.0
  %1943 = vmatpush1.msra.mxu0 %v1895
  %1944 = vmatprep.subr.mxu0 0.0
  %1945 = vmatpush1.msra.mxu0 %v1897
  %1946 = vmatprep.subr.mxu0 0.0
  %1947 = vmatpush1.msra.mxu0 %v1899
  %1948 = vmatprep.subr.mxu0 0.0
  %1949 = vmatpush1.msra.mxu0 %v1901
  %1950 = vmatprep.subr.mxu0 0.0
  %1951 = vmatpush1.msra.mxu0 %v1903
  %1952 = vmatprep.subr.mxu0 0.0
  %1953 = vmatpush1.msra.mxu0 %v1905
  %1954 = vmatprep.subr.mxu0 0.0
  %1955 = vmatpush1.msra.mxu0 %v1907
  %1956 = vmatprep.subr.mxu0 0.0
  %1957 = vmatpush1.msra.mxu0 %v1909
  %1958 = vmatprep.subr.mxu0 0.0
  %1959 = vmatpush1.msra.mxu0 %v1911
  %1960 = vmatprep.subr.mxu0 0.0
  %1961 = vmatpush1.msra.mxu0 0.0
  %1962 = vmatprep.subr.mxu0 0.0
  %1963 = vmatpush1.msra.mxu0 0.0
  %1964 = vmatprep.subr.mxu0 0.0
  %1965 = vmatpush1.msra.mxu0 0.0
  %1966 = vmatprep.subr.mxu0 0.0
  %1967 = vmatpush1.msra.mxu0 0.0
  %1968 = vmatprep.subr.mxu0 0.0
  %1969 = vmatpush1.msra.mxu0 0.0
  %1970 = vmatprep.subr.mxu0 0.0
  %1971 = vmatpush1.msra.mxu0 0.0
  %1972 = vmatprep.subr.mxu0 0.0
  %1973 = vmatpush1.msra.mxu0 0.0
  %1974 = vmatprep.subr.mxu0 0.0
  %1975 = vmatpush1.msra.mxu0 0.0
  %1976 = vmatprep.subr.mxu0 0.0
  %1977 = vmatpush1.msra.mxu0 0.0
  %1978 = vmatprep.subr.mxu0 0.0
  %1979 = vmatpush1.msra.mxu0 0.0
  %1980 = vmatprep.subr.mxu0 0.0
  %1981 = vmatpush1.msra.mxu0 0.0
  %1982 = vmatprep.subr.mxu0 0.0
  %1983 = vmatpush1.msra.mxu0 0.0
  %1984 = vmatprep.subr.mxu0 0.0
  %1985 = vmatpush1.msra.mxu0 0.0
  %1986 = vmatprep.subr.mxu0 0.0
  %1987 = vmatpush1.msra.mxu0 0.0
  %1988 = vmatprep.subr.mxu0 0.0
  %1989 = vmatpush1.msra.mxu0 0.0
  %1990 = vmatprep.subr.mxu0 0.0
  %1991 = vmatpush1.msra.mxu0 0.0
  %1992 = vmatprep.mubr.f32.mxu0 0.0
  %1993 = vmatmul.mubr.f32.gmra.mrb[0].mxu0 %v1879
  %v1994 = vpop.f32.mrb[0].mxu0
  %v1995 = vadd.f32 0.0, %v1994
  %v1996 = vpop.f32.mrb[0].mxu0
  %1997 = vdwg.mxu0
  %v1998 = vadd.f32 %v1873, %v1995
  %1999 = vset.pattern.permute.xlu0 16
  %2000 = vperm.xlu0 %1999, %v16
  %v2001 = vpop.permute.xlu0 %2000
  %vm2002 = vcmp.eq.s32.totalorder %v2001, %v15
  %v2003 = vsel %vm2002, 1, 0
  %v2004 = vcvt.s32.f32 %v2003
  %2005 = vrot.lane.b32.xlu0 %v23, 96
  %v2006 = vpop.permute.xlu0 %2005
  %2007 = vrot.lane.b32.xlu0 %v24, 96
  %v2008 = vpop.permute.xlu0 %2007
  %2009 = vrot.lane.b32.xlu0 %v25, 96
  %v2010 = vpop.permute.xlu0 %2009
  %2011 = vrot.lane.b32.xlu0 %v26, 96
  %v2012 = vpop.permute.xlu0 %2011
  %2013 = vrot.lane.b32.xlu0 %v27, 96
  %v2014 = vpop.permute.xlu0 %2013
  %2015 = vrot.lane.b32.xlu0 %v28, 96
  %v2016 = vpop.permute.xlu0 %2015
  %2017 = vrot.lane.b32.xlu0 %v29, 96
  %v2018 = vpop.permute.xlu0 %2017
  %2019 = vrot.lane.b32.xlu0 %v30, 96
  %v2020 = vpop.permute.xlu0 %2019
  %2021 = vrot.lane.b32.xlu0 %v31, 96
  %v2022 = vpop.permute.xlu0 %2021
  %2023 = vrot.lane.b32.xlu0 %v32, 96
  %v2024 = vpop.permute.xlu0 %2023
  %2025 = vrot.lane.b32.xlu0 %v33, 96
  %v2026 = vpop.permute.xlu0 %2025
  %2027 = vrot.lane.b32.xlu0 %v34, 96
  %v2028 = vpop.permute.xlu0 %2027
  %2029 = vrot.lane.b32.xlu0 %v35, 96
  %v2030 = vpop.permute.xlu0 %2029
  %2031 = vrot.lane.b32.xlu0 %v36, 96
  %v2032 = vpop.permute.xlu0 %2031
  %2033 = vrot.lane.b32.xlu0 %v37, 96
  %v2034 = vpop.permute.xlu0 %2033
  %2035 = vrot.lane.b32.xlu0 %v38, 96
  %v2036 = vpop.permute.xlu0 %2035
  %2053 = vmatprep.subr.mxu0 0.0
  %2054 = vmatpush1.msra.mxu0 %v2006
  %2055 = vmatprep.subr.mxu0 0.0
  %2056 = vmatpush1.msra.mxu0 %v2008
  %2057 = vmatprep.subr.mxu0 0.0
  %2058 = vmatpush1.msra.mxu0 %v2010
  %2059 = vmatprep.subr.mxu0 0.0
  %2060 = vmatpush1.msra.mxu0 %v2012
  %2061 = vmatprep.subr.mxu0 0.0
  %2062 = vmatpush1.msra.mxu0 %v2014
  %2063 = vmatprep.subr.mxu0 0.0
  %2064 = vmatpush1.msra.mxu0 %v2016
  %2065 = vmatprep.subr.mxu0 0.0
  %2066 = vmatpush1.msra.mxu0 %v2018
  %2067 = vmatprep.subr.mxu0 0.0
  %2068 = vmatpush1.msra.mxu0 %v2020
  %2069 = vmatprep.subr.mxu0 0.0
  %2070 = vmatpush1.msra.mxu0 %v2022
  %2071 = vmatprep.subr.mxu0 0.0
  %2072 = vmatpush1.msra.mxu0 %v2024
  %2073 = vmatprep.subr.mxu0 0.0
  %2074 = vmatpush1.msra.mxu0 %v2026
  %2075 = vmatprep.subr.mxu0 0.0
  %2076 = vmatpush1.msra.mxu0 %v2028
  %2077 = vmatprep.subr.mxu0 0.0
  %2078 = vmatpush1.msra.mxu0 %v2030
  %2079 = vmatprep.subr.mxu0 0.0
  %2080 = vmatpush1.msra.mxu0 %v2032
  %2081 = vmatprep.subr.mxu0 0.0
  %2082 = vmatpush1.msra.mxu0 %v2034
  %2083 = vmatprep.subr.mxu0 0.0
  %2084 = vmatpush1.msra.mxu0 %v2036
  %2085 = vmatprep.subr.mxu0 0.0
  %2086 = vmatpush1.msra.mxu0 0.0
  %2087 = vmatprep.subr.mxu0 0.0
  %2088 = vmatpush1.msra.mxu0 0.0
  %2089 = vmatprep.subr.mxu0 0.0
  %2090 = vmatpush1.msra.mxu0 0.0
  %2091 = vmatprep.subr.mxu0 0.0
  %2092 = vmatpush1.msra.mxu0 0.0
  %2093 = vmatprep.subr.mxu0 0.0
  %2094 = vmatpush1.msra.mxu0 0.0
  %2095 = vmatprep.subr.mxu0 0.0
  %2096 = vmatpush1.msra.mxu0 0.0
  %2097 = vmatprep.subr.mxu0 0.0
  %2098 = vmatpush1.msra.mxu0 0.0
  %2099 = vmatprep.subr.mxu0 0.0
  %2100 = vmatpush1.msra.mxu0 0.0
  %2101 = vmatprep.subr.mxu0 0.0
  %2102 = vmatpush1.msra.mxu0 0.0
  %2103 = vmatprep.subr.mxu0 0.0
  %2104 = vmatpush1.msra.mxu0 0.0
  %2105 = vmatprep.subr.mxu0 0.0
  %2106 = vmatpush1.msra.mxu0 0.0
  %2107 = vmatprep.subr.mxu0 0.0
  %2108 = vmatpush1.msra.mxu0 0.0
  %2109 = vmatprep.subr.mxu0 0.0
  %2110 = vmatpush1.msra.mxu0 0.0
  %2111 = vmatprep.subr.mxu0 0.0
  %2112 = vmatpush1.msra.mxu0 0.0
  %2113 = vmatprep.subr.mxu0 0.0
  %2114 = vmatpush1.msra.mxu0 0.0
  %2115 = vmatprep.subr.mxu0 0.0
  %2116 = vmatpush1.msra.mxu0 0.0
  %2117 = vmatprep.mubr.f32.mxu0 0.0
  %2118 = vmatmul.mubr.f32.gmra.mrb[0].mxu0 %v2004
  %v2119 = vpop.f32.mrb[0].mxu0
  %v2120 = vadd.f32 0.0, %v2119
  %v2121 = vpop.f32.mrb[0].mxu0
  %2122 = vdwg.mxu0
  %v2123 = vadd.f32 %v1998, %v2120
  %2124 = vset.pattern.permute.xlu0 17
  %2125 = vperm.xlu0 %2124, %v16
  %v2126 = vpop.permute.xlu0 %2125
  %vm2127 = vcmp.eq.s32.totalorder %v2126, %v15
  %v2128 = vsel %vm2127, 1, 0
  %v2129 = vcvt.s32.f32 %v2128
  %2130 = vrot.lane.b32.xlu0 %v23, 94
  %v2131 = vpop.permute.xlu0 %2130
  %2132 = vrot.lane.b32.xlu0 %v24, 94
  %v2133 = vpop.permute.xlu0 %2132
  %2134 = vrot.lane.b32.xlu0 %v25, 94
  %v2135 = vpop.permute.xlu0 %2134
  %2136 = vrot.lane.b32.xlu0 %v26, 94
  %v2137 = vpop.permute.xlu0 %2136
  %2138 = vrot.lane.b32.xlu0 %v27, 94
  %v2139 = vpop.permute.xlu0 %2138
  %2140 = vrot.lane.b32.xlu0 %v28, 94
  %v2141 = vpop.permute.xlu0 %2140
  %2142 = vrot.lane.b32.xlu0 %v29, 94
  %v2143 = vpop.permute.xlu0 %2142
  %2144 = vrot.lane.b32.xlu0 %v30, 94
  %v2145 = vpop.permute.xlu0 %2144
  %2146 = vrot.lane.b32.xlu0 %v31, 94
  %v2147 = vpop.permute.xlu0 %2146
  %2148 = vrot.lane.b32.xlu0 %v32, 94
  %v2149 = vpop.permute.xlu0 %2148
  %2150 = vrot.lane.b32.xlu0 %v33, 94
  %v2151 = vpop.permute.xlu0 %2150
  %2152 = vrot.lane.b32.xlu0 %v34, 94
  %v2153 = vpop.permute.xlu0 %2152
  %2154 = vrot.lane.b32.xlu0 %v35, 94
  %v2155 = vpop.permute.xlu0 %2154
  %2156 = vrot.lane.b32.xlu0 %v36, 94
  %v2157 = vpop.permute.xlu0 %2156
  %2158 = vrot.lane.b32.xlu0 %v37, 94
  %v2159 = vpop.permute.xlu0 %2158
  %2160 = vrot.lane.b32.xlu0 %v38, 94
  %v2161 = vpop.permute.xlu0 %2160
  %2178 = vmatprep.subr.mxu0 0.0
  %2179 = vmatpush1.msra.mxu0 %v2131
  %2180 = vmatprep.subr.mxu0 0.0
  %2181 = vmatpush1.msra.mxu0 %v2133
  %2182 = vmatprep.subr.mxu0 0.0
  %2183 = vmatpush1.msra.mxu0 %v2135
  %2184 = vmatprep.subr.mxu0 0.0
  %2185 = vmatpush1.msra.mxu0 %v2137
  %2186 = vmatprep.subr.mxu0 0.0
  %2187 = vmatpush1.msra.mxu0 %v2139
  %2188 = vmatprep.subr.mxu0 0.0
  %2189 = vmatpush1.msra.mxu0 %v2141
  %2190 = vmatprep.subr.mxu0 0.0
  %2191 = vmatpush1.msra.mxu0 %v2143
  %2192 = vmatprep.subr.mxu0 0.0
  %2193 = vmatpush1.msra.mxu0 %v2145
  %2194 = vmatprep.subr.mxu0 0.0
  %2195 = vmatpush1.msra.mxu0 %v2147
  %2196 = vmatprep.subr.mxu0 0.0
  %2197 = vmatpush1.msra.mxu0 %v2149
  %2198 = vmatprep.subr.mxu0 0.0
  %2199 = vmatpush1.msra.mxu0 %v2151
  %2200 = vmatprep.subr.mxu0 0.0
  %2201 = vmatpush1.msra.mxu0 %v2153
  %2202 = vmatprep.subr.mxu0 0.0
  %2203 = vmatpush1.msra.mxu0 %v2155
  %2204 = vmatprep.subr.mxu0 0.0
  %2205 = vmatpush1.msra.mxu0 %v2157
  %2206 = vmatprep.subr.mxu0 0.0
  %2207 = vmatpush1.msra.mxu0 %v2159
  %2208 = vmatprep.subr.mxu0 0.0
  %2209 = vmatpush1.msra.mxu0 %v2161
  %2210 = vmatprep.subr.mxu0 0.0
  %2211 = vmatpush1.msra.mxu0 0.0
  %2212 = vmatprep.subr.mxu0 0.0
  %2213 = vmatpush1.msra.mxu0 0.0
  %2214 = vmatprep.subr.mxu0 0.0
  %2215 = vmatpush1.msra.mxu0 0.0
  %2216 = vmatprep.subr.mxu0 0.0
  %2217 = vmatpush1.msra.mxu0 0.0
  %2218 = vmatprep.subr.mxu0 0.0
  %2219 = vmatpush1.msra.mxu0 0.0
  %2220 = vmatprep.subr.mxu0 0.0
  %2221 = vmatpush1.msra.mxu0 0.0
  %2222 = vmatprep.subr.mxu0 0.0
  %2223 = vmatpush1.msra.mxu0 0.0
  %2224 = vmatprep.subr.mxu0 0.0
  %2225 = vmatpush1.msra.mxu0 0.0
  %2226 = vmatprep.subr.mxu0 0.0
  %2227 = vmatpush1.msra.mxu0 0.0
  %2228 = vmatprep.subr.mxu0 0.0
  %2229 = vmatpush1.msra.mxu0 0.0
  %2230 = vmatprep.subr.mxu0 0.0
  %2231 = vmatpush1.msra.mxu0 0.0
  %2232 = vmatprep.subr.mxu0 0.0
  %2233 = vmatpush1.msra.mxu0 0.0
  %2234 = vmatprep.subr.mxu0 0.0
  %2235 = vmatpush1.msra.mxu0 0.0
  %2236 = vmatprep.subr.mxu0 0.0
  %2237 = vmatpush1.msra.mxu0 0.0
  %2238 = vmatprep.subr.mxu0 0.0
  %2239 = vmatpush1.msra.mxu0 0.0
  %2240 = vmatprep.subr.mxu0 0.0
  %2241 = vmatpush1.msra.mxu0 0.0
  %2242 = vmatprep.mubr.f32.mxu0 0.0
  %2243 = vmatmul.mubr.f32.gmra.mrb[0].mxu0 %v2129
  %v2244 = vpop.f32.mrb[0].mxu0
  %v2245 = vadd.f32 0.0, %v2244
  %v2246 = vpop.f32.mrb[0].mxu0
  %2247 = vdwg.mxu0
  %v2248 = vadd.f32 %v2123, %v2245
  %2249 = vset.pattern.permute.xlu0 18
  %2250 = vperm.xlu0 %2249, %v16
  %v2251 = vpop.permute.xlu0 %2250
  %vm2252 = vcmp.eq.s32.totalorder %v2251, %v15
  %v2253 = vsel %vm2252, 1, 0
  %v2254 = vcvt.s32.f32 %v2253
  %2255 = vrot.lane.b32.xlu0 %v23, 92
  %v2256 = vpop.permute.xlu0 %2255
  %2257 = vrot.lane.b32.xlu0 %v24, 92
  %v2258 = vpop.permute.xlu0 %2257
  %2259 = vrot.lane.b32.xlu0 %v25, 92
  %v2260 = vpop.permute.xlu0 %2259
  %2261 = vrot.lane.b32.xlu0 %v26, 92
  %v2262 = vpop.permute.xlu0 %2261
  %2263 = vrot.lane.b32.xlu0 %v27, 92
  %v2264 = vpop.permute.xlu0 %2263
  %2265 = vrot.lane.b32.xlu0 %v28, 92
  %v2266 = vpop.permute.xlu0 %2265
  %2267 = vrot.lane.b32.xlu0 %v29, 92
  %v2268 = vpop.permute.xlu0 %2267
  %2269 = vrot.lane.b32.xlu0 %v30, 92
  %v2270 = vpop.permute.xlu0 %2269
  %2271 = vrot.lane.b32.xlu0 %v31, 92
  %v2272 = vpop.permute.xlu0 %2271
  %2273 = vrot.lane.b32.xlu0 %v32, 92
  %v2274 = vpop.permute.xlu0 %2273
  %2275 = vrot.lane.b32.xlu0 %v33, 92
  %v2276 = vpop.permute.xlu0 %2275
  %2277 = vrot.lane.b32.xlu0 %v34, 92
  %v2278 = vpop.permute.xlu0 %2277
  %2279 = vrot.lane.b32.xlu0 %v35, 92
  %v2280 = vpop.permute.xlu0 %2279
  %2281 = vrot.lane.b32.xlu0 %v36, 92
  %v2282 = vpop.permute.xlu0 %2281
  %2283 = vrot.lane.b32.xlu0 %v37, 92
  %v2284 = vpop.permute.xlu0 %2283
  %2285 = vrot.lane.b32.xlu0 %v38, 92
  %v2286 = vpop.permute.xlu0 %2285
  %2303 = vmatprep.subr.mxu0 0.0
  %2304 = vmatpush1.msra.mxu0 %v2256
  %2305 = vmatprep.subr.mxu0 0.0
  %2306 = vmatpush1.msra.mxu0 %v2258
  %2307 = vmatprep.subr.mxu0 0.0
  %2308 = vmatpush1.msra.mxu0 %v2260
  %2309 = vmatprep.subr.mxu0 0.0
  %2310 = vmatpush1.msra.mxu0 %v2262
  %2311 = vmatprep.subr.mxu0 0.0
  %2312 = vmatpush1.msra.mxu0 %v2264
  %2313 = vmatprep.subr.mxu0 0.0
  %2314 = vmatpush1.msra.mxu0 %v2266
  %2315 = vmatprep.subr.mxu0 0.0
  %2316 = vmatpush1.msra.mxu0 %v2268
  %2317 = vmatprep.subr.mxu0 0.0
  %2318 = vmatpush1.msra.mxu0 %v2270
  %2319 = vmatprep.subr.mxu0 0.0
  %2320 = vmatpush1.msra.mxu0 %v2272
  %2321 = vmatprep.subr.mxu0 0.0
  %2322 = vmatpush1.msra.mxu0 %v2274
  %2323 = vmatprep.subr.mxu0 0.0
  %2324 = vmatpush1.msra.mxu0 %v2276
  %2325 = vmatprep.subr.mxu0 0.0
  %2326 = vmatpush1.msra.mxu0 %v2278
  %2327 = vmatprep.subr.mxu0 0.0
  %2328 = vmatpush1.msra.mxu0 %v2280
  %2329 = vmatprep.subr.mxu0 0.0
  %2330 = vmatpush1.msra.mxu0 %v2282
  %2331 = vmatprep.subr.mxu0 0.0
  %2332 = vmatpush1.msra.mxu0 %v2284
  %2333 = vmatprep.subr.mxu0 0.0
  %2334 = vmatpush1.msra.mxu0 %v2286
  %2335 = vmatprep.subr.mxu0 0.0
  %2336 = vmatpush1.msra.mxu0 0.0
  %2337 = vmatprep.subr.mxu0 0.0
  %2338 = vmatpush1.msra.mxu0 0.0
  %2339 = vmatprep.subr.mxu0 0.0
  %2340 = vmatpush1.msra.mxu0 0.0
  %2341 = vmatprep.subr.mxu0 0.0
  %2342 = vmatpush1.msra.mxu0 0.0
  %2343 = vmatprep.subr.mxu0 0.0
  %2344 = vmatpush1.msra.mxu0 0.0
  %2345 = vmatprep.subr.mxu0 0.0
  %2346 = vmatpush1.msra.mxu0 0.0
  %2347 = vmatprep.subr.mxu0 0.0
  %2348 = vmatpush1.msra.mxu0 0.0
  %2349 = vmatprep.subr.mxu0 0.0
  %2350 = vmatpush1.msra.mxu0 0.0
  %2351 = vmatprep.subr.mxu0 0.0
  %2352 = vmatpush1.msra.mxu0 0.0
  %2353 = vmatprep.subr.mxu0 0.0
  %2354 = vmatpush1.msra.mxu0 0.0
  %2355 = vmatprep.subr.mxu0 0.0
  %2356 = vmatpush1.msra.mxu0 0.0
  %2357 = vmatprep.subr.mxu0 0.0
  %2358 = vmatpush1.msra.mxu0 0.0
  %2359 = vmatprep.subr.mxu0 0.0
  %2360 = vmatpush1.msra.mxu0 0.0
  %2361 = vmatprep.subr.mxu0 0.0
  %2362 = vmatpush1.msra.mxu0 0.0
  %2363 = vmatprep.subr.mxu0 0.0
  %2364 = vmatpush1.msra.mxu0 0.0
  %2365 = vmatprep.subr.mxu0 0.0
  %2366 = vmatpush1.msra.mxu0 0.0
  %2367 = vmatprep.mubr.f32.mxu0 0.0
  %2368 = vmatmul.mubr.f32.gmra.mrb[0].mxu0 %v2254
  %v2369 = vpop.f32.mrb[0].mxu0
  %v2370 = vadd.f32 0.0, %v2369
  %v2371 = vpop.f32.mrb[0].mxu0
  %2372 = vdwg.mxu0
  %v2373 = vadd.f32 %v2248, %v2370
  %2374 = vset.pattern.permute.xlu0 19
  %2375 = vperm.xlu0 %2374, %v16
  %v2376 = vpop.permute.xlu0 %2375
  %vm2377 = vcmp.eq.s32.totalorder %v2376, %v15
  %v2378 = vsel %vm2377, 1, 0
  %v2379 = vcvt.s32.f32 %v2378
  %2380 = vrot.lane.b32.xlu0 %v23, 90
  %v2381 = vpop.permute.xlu0 %2380
  %2382 = vrot.lane.b32.xlu0 %v24, 90
  %v2383 = vpop.permute.xlu0 %2382
  %2384 = vrot.lane.b32.xlu0 %v25, 90
  %v2385 = vpop.permute.xlu0 %2384
  %2386 = vrot.lane.b32.xlu0 %v26, 90
  %v2387 = vpop.permute.xlu0 %2386
  %2388 = vrot.lane.b32.xlu0 %v27, 90
  %v2389 = vpop.permute.xlu0 %2388
  %2390 = vrot.lane.b32.xlu0 %v28, 90
  %v2391 = vpop.permute.xlu0 %2390
  %2392 = vrot.lane.b32.xlu0 %v29, 90
  %v2393 = vpop.permute.xlu0 %2392
  %2394 = vrot.lane.b32.xlu0 %v30, 90
  %v2395 = vpop.permute.xlu0 %2394
  %2396 = vrot.lane.b32.xlu0 %v31, 90
  %v2397 = vpop.permute.xlu0 %2396
  %2398 = vrot.lane.b32.xlu0 %v32, 90
  %v2399 = vpop.permute.xlu0 %2398
  %2400 = vrot.lane.b32.xlu0 %v33, 90
  %v2401 = vpop.permute.xlu0 %2400
  %2402 = vrot.lane.b32.xlu0 %v34, 90
  %v2403 = vpop.permute.xlu0 %2402
  %2404 = vrot.lane.b32.xlu0 %v35, 90
  %v2405 = vpop.permute.xlu0 %2404
  %2406 = vrot.lane.b32.xlu0 %v36, 90
  %v2407 = vpop.permute.xlu0 %2406
  %2408 = vrot.lane.b32.xlu0 %v37, 90
  %v2409 = vpop.permute.xlu0 %2408
  %2410 = vrot.lane.b32.xlu0 %v38, 90
  %v2411 = vpop.permute.xlu0 %2410
  %2428 = vmatprep.subr.mxu0 0.0
  %2429 = vmatpush1.msra.mxu0 %v2381
  %2430 = vmatprep.subr.mxu0 0.0
  %2431 = vmatpush1.msra.mxu0 %v2383
  %2432 = vmatprep.subr.mxu0 0.0
  %2433 = vmatpush1.msra.mxu0 %v2385
  %2434 = vmatprep.subr.mxu0 0.0
  %2435 = vmatpush1.msra.mxu0 %v2387
  %2436 = vmatprep.subr.mxu0 0.0
  %2437 = vmatpush1.msra.mxu0 %v2389
  %2438 = vmatprep.subr.mxu0 0.0
  %2439 = vmatpush1.msra.mxu0 %v2391
  %2440 = vmatprep.subr.mxu0 0.0
  %2441 = vmatpush1.msra.mxu0 %v2393
  %2442 = vmatprep.subr.mxu0 0.0
  %2443 = vmatpush1.msra.mxu0 %v2395
  %2444 = vmatprep.subr.mxu0 0.0
  %2445 = vmatpush1.msra.mxu0 %v2397
  %2446 = vmatprep.subr.mxu0 0.0
  %2447 = vmatpush1.msra.mxu0 %v2399
  %2448 = vmatprep.subr.mxu0 0.0
  %2449 = vmatpush1.msra.mxu0 %v2401
  %2450 = vmatprep.subr.mxu0 0.0
  %2451 = vmatpush1.msra.mxu0 %v2403
  %2452 = vmatprep.subr.mxu0 0.0
  %2453 = vmatpush1.msra.mxu0 %v2405
  %2454 = vmatprep.subr.mxu0 0.0
  %2455 = vmatpush1.msra.mxu0 %v2407
  %2456 = vmatprep.subr.mxu0 0.0
  %2457 = vmatpush1.msra.mxu0 %v2409
  %2458 = vmatprep.subr.mxu0 0.0
  %2459 = vmatpush1.msra.mxu0 %v2411
  %2460 = vmatprep.subr.mxu0 0.0
  %2461 = vmatpush1.msra.mxu0 0.0
  %2462 = vmatprep.subr.mxu0 0.0
  %2463 = vmatpush1.msra.mxu0 0.0
  %2464 = vmatprep.subr.mxu0 0.0
  %2465 = vmatpush1.msra.mxu0 0.0
  %2466 = vmatprep.subr.mxu0 0.0
  %2467 = vmatpush1.msra.mxu0 0.0
  %2468 = vmatprep.subr.mxu0 0.0
  %2469 = vmatpush1.msra.mxu0 0.0
  %2470 = vmatprep.subr.mxu0 0.0
  %2471 = vmatpush1.msra.mxu0 0.0
  %2472 = vmatprep.subr.mxu0 0.0
  %2473 = vmatpush1.msra.mxu0 0.0
  %2474 = vmatprep.subr.mxu0 0.0
  %2475 = vmatpush1.msra.mxu0 0.0
  %2476 = vmatprep.subr.mxu0 0.0
  %2477 = vmatpush1.msra.mxu0 0.0
  %2478 = vmatprep.subr.mxu0 0.0
  %2479 = vmatpush1.msra.mxu0 0.0
  %2480 = vmatprep.subr.mxu0 0.0
  %2481 = vmatpush1.msra.mxu0 0.0
  %2482 = vmatprep.subr.mxu0 0.0
  %2483 = vmatpush1.msra.mxu0 0.0
  %2484 = vmatprep.subr.mxu0 0.0
  %2485 = vmatpush1.msra.mxu0 0.0
  %2486 = vmatprep.subr.mxu0 0.0
  %2487 = vmatpush1.msra.mxu0 0.0
  %2488 = vmatprep.subr.mxu0 0.0
  %2489 = vmatpush1.msra.mxu0 0.0
  %2490 = vmatprep.subr.mxu0 0.0
  %2491 = vmatpush1.msra.mxu0 0.0
  %2492 = vmatprep.mubr.f32.mxu0 0.0
  %2493 = vmatmul.mubr.f32.gmra.mrb[0].mxu0 %v2379
  %v2494 = vpop.f32.mrb[0].mxu0
  %v2495 = vadd.f32 0.0, %v2494
  %v2496 = vpop.f32.mrb[0].mxu0
  %2497 = vdwg.mxu0
  %v2498 = vadd.f32 %v2373, %v2495
  %2499 = vset.pattern.permute.xlu0 20
  %2500 = vperm.xlu0 %2499, %v16
  %v2501 = vpop.permute.xlu0 %2500
  %vm2502 = vcmp.eq.s32.totalorder %v2501, %v15
  %v2503 = vsel %vm2502, 1, 0
  %v2504 = vcvt.s32.f32 %v2503
  %2505 = vrot.lane.b32.xlu0 %v23, 88
  %v2506 = vpop.permute.xlu0 %2505
  %2507 = vrot.lane.b32.xlu0 %v24, 88
  %v2508 = vpop.permute.xlu0 %2507
  %2509 = vrot.lane.b32.xlu0 %v25, 88
  %v2510 = vpop.permute.xlu0 %2509
  %2511 = vrot.lane.b32.xlu0 %v26, 88
  %v2512 = vpop.permute.xlu0 %2511
  %2513 = vrot.lane.b32.xlu0 %v27, 88
  %v2514 = vpop.permute.xlu0 %2513
  %2515 = vrot.lane.b32.xlu0 %v28, 88
  %v2516 = vpop.permute.xlu0 %2515
  %2517 = vrot.lane.b32.xlu0 %v29, 88
  %v2518 = vpop.permute.xlu0 %2517
  %2519 = vrot.lane.b32.xlu0 %v30, 88
  %v2520 = vpop.permute.xlu0 %2519
  %2521 = vrot.lane.b32.xlu0 %v31, 88
  %v2522 = vpop.permute.xlu0 %2521
  %2523 = vrot.lane.b32.xlu0 %v32, 88
  %v2524 = vpop.permute.xlu0 %2523
  %2525 = vrot.lane.b32.xlu0 %v33, 88
  %v2526 = vpop.permute.xlu0 %2525
  %2527 = vrot.lane.b32.xlu0 %v34, 88
  %v2528 = vpop.permute.xlu0 %2527
  %2529 = vrot.lane.b32.xlu0 %v35, 88
  %v2530 = vpop.permute.xlu0 %2529
  %2531 = vrot.lane.b32.xlu0 %v36, 88
  %v2532 = vpop.permute.xlu0 %2531
  %2533 = vrot.lane.b32.xlu0 %v37, 88
  %v2534 = vpop.permute.xlu0 %2533
  %2535 = vrot.lane.b32.xlu0 %v38, 88
  %v2536 = vpop.permute.xlu0 %2535
  %2553 = vmatprep.subr.mxu0 0.0
  %2554 = vmatpush1.msra.mxu0 %v2506
  %2555 = vmatprep.subr.mxu0 0.0
  %2556 = vmatpush1.msra.mxu0 %v2508
  %2557 = vmatprep.subr.mxu0 0.0
  %2558 = vmatpush1.msra.mxu0 %v2510
  %2559 = vmatprep.subr.mxu0 0.0
  %2560 = vmatpush1.msra.mxu0 %v2512
  %2561 = vmatprep.subr.mxu0 0.0
  %2562 = vmatpush1.msra.mxu0 %v2514
  %2563 = vmatprep.subr.mxu0 0.0
  %2564 = vmatpush1.msra.mxu0 %v2516
  %2565 = vmatprep.subr.mxu0 0.0
  %2566 = vmatpush1.msra.mxu0 %v2518
  %2567 = vmatprep.subr.mxu0 0.0
  %2568 = vmatpush1.msra.mxu0 %v2520
  %2569 = vmatprep.subr.mxu0 0.0
  %2570 = vmatpush1.msra.mxu0 %v2522
  %2571 = vmatprep.subr.mxu0 0.0
  %2572 = vmatpush1.msra.mxu0 %v2524
  %2573 = vmatprep.subr.mxu0 0.0
  %2574 = vmatpush1.msra.mxu0 %v2526
  %2575 = vmatprep.subr.mxu0 0.0
  %2576 = vmatpush1.msra.mxu0 %v2528
  %2577 = vmatprep.subr.mxu0 0.0
  %2578 = vmatpush1.msra.mxu0 %v2530
  %2579 = vmatprep.subr.mxu0 0.0
  %2580 = vmatpush1.msra.mxu0 %v2532
  %2581 = vmatprep.subr.mxu0 0.0
  %2582 = vmatpush1.msra.mxu0 %v2534
  %2583 = vmatprep.subr.mxu0 0.0
  %2584 = vmatpush1.msra.mxu0 %v2536
  %2585 = vmatprep.subr.mxu0 0.0
  %2586 = vmatpush1.msra.mxu0 0.0
  %2587 = vmatprep.subr.mxu0 0.0
  %2588 = vmatpush1.msra.mxu0 0.0
  %2589 = vmatprep.subr.mxu0 0.0
  %2590 = vmatpush1.msra.mxu0 0.0
  %2591 = vmatprep.subr.mxu0 0.0
  %2592 = vmatpush1.msra.mxu0 0.0
  %2593 = vmatprep.subr.mxu0 0.0
  %2594 = vmatpush1.msra.mxu0 0.0
  %2595 = vmatprep.subr.mxu0 0.0
  %2596 = vmatpush1.msra.mxu0 0.0
  %2597 = vmatprep.subr.mxu0 0.0
  %2598 = vmatpush1.msra.mxu0 0.0
  %2599 = vmatprep.subr.mxu0 0.0
  %2600 = vmatpush1.msra.mxu0 0.0
  %2601 = vmatprep.subr.mxu0 0.0
  %2602 = vmatpush1.msra.mxu0 0.0
  %2603 = vmatprep.subr.mxu0 0.0
  %2604 = vmatpush1.msra.mxu0 0.0
  %2605 = vmatprep.subr.mxu0 0.0
  %2606 = vmatpush1.msra.mxu0 0.0
  %2607 = vmatprep.subr.mxu0 0.0
  %2608 = vmatpush1.msra.mxu0 0.0
  %2609 = vmatprep.subr.mxu0 0.0
  %2610 = vmatpush1.msra.mxu0 0.0
  %2611 = vmatprep.subr.mxu0 0.0
  %2612 = vmatpush1.msra.mxu0 0.0
  %2613 = vmatprep.subr.mxu0 0.0
  %2614 = vmatpush1.msra.mxu0 0.0
  %2615 = vmatprep.subr.mxu0 0.0
  %2616 = vmatpush1.msra.mxu0 0.0
  %2617 = vmatprep.mubr.f32.mxu0 0.0
  %2618 = vmatmul.mubr.f32.gmra.mrb[0].mxu0 %v2504
  %v2619 = vpop.f32.mrb[0].mxu0
  %v2620 = vadd.f32 0.0, %v2619
  %v2621 = vpop.f32.mrb[0].mxu0
  %2622 = vdwg.mxu0
  %v2623 = vadd.f32 %v2498, %v2620
  %2624 = vset.pattern.permute.xlu0 21
  %2625 = vperm.xlu0 %2624, %v16
  %v2626 = vpop.permute.xlu0 %2625
  %vm2627 = vcmp.eq.s32.totalorder %v2626, %v15
  %v2628 = vsel %vm2627, 1, 0
  %v2629 = vcvt.s32.f32 %v2628
  %2630 = vrot.lane.b32.xlu0 %v23, 86
  %v2631 = vpop.permute.xlu0 %2630
  %2632 = vrot.lane.b32.xlu0 %v24, 86
  %v2633 = vpop.permute.xlu0 %2632
  %2634 = vrot.lane.b32.xlu0 %v25, 86
  %v2635 = vpop.permute.xlu0 %2634
  %2636 = vrot.lane.b32.xlu0 %v26, 86
  %v2637 = vpop.permute.xlu0 %2636
  %2638 = vrot.lane.b32.xlu0 %v27, 86
  %v2639 = vpop.permute.xlu0 %2638
  %2640 = vrot.lane.b32.xlu0 %v28, 86
  %v2641 = vpop.permute.xlu0 %2640
  %2642 = vrot.lane.b32.xlu0 %v29, 86
  %v2643 = vpop.permute.xlu0 %2642
  %2644 = vrot.lane.b32.xlu0 %v30, 86
  %v2645 = vpop.permute.xlu0 %2644
  %2646 = vrot.lane.b32.xlu0 %v31, 86
  %v2647 = vpop.permute.xlu0 %2646
  %2648 = vrot.lane.b32.xlu0 %v32, 86
  %v2649 = vpop.permute.xlu0 %2648
  %2650 = vrot.lane.b32.xlu0 %v33, 86
  %v2651 = vpop.permute.xlu0 %2650
  %2652 = vrot.lane.b32.xlu0 %v34, 86
  %v2653 = vpop.permute.xlu0 %2652
  %2654 = vrot.lane.b32.xlu0 %v35, 86
  %v2655 = vpop.permute.xlu0 %2654
  %2656 = vrot.lane.b32.xlu0 %v36, 86
  %v2657 = vpop.permute.xlu0 %2656
  %2658 = vrot.lane.b32.xlu0 %v37, 86
  %v2659 = vpop.permute.xlu0 %2658
  %2660 = vrot.lane.b32.xlu0 %v38, 86
  %v2661 = vpop.permute.xlu0 %2660
  %2678 = vmatprep.subr.mxu0 0.0
  %2679 = vmatpush1.msra.mxu0 %v2631
  %2680 = vmatprep.subr.mxu0 0.0
  %2681 = vmatpush1.msra.mxu0 %v2633
  %2682 = vmatprep.subr.mxu0 0.0
  %2683 = vmatpush1.msra.mxu0 %v2635
  %2684 = vmatprep.subr.mxu0 0.0
  %2685 = vmatpush1.msra.mxu0 %v2637
  %2686 = vmatprep.subr.mxu0 0.0
  %2687 = vmatpush1.msra.mxu0 %v2639
  %2688 = vmatprep.subr.mxu0 0.0
  %2689 = vmatpush1.msra.mxu0 %v2641
  %2690 = vmatprep.subr.mxu0 0.0
  %2691 = vmatpush1.msra.mxu0 %v2643
  %2692 = vmatprep.subr.mxu0 0.0
  %2693 = vmatpush1.msra.mxu0 %v2645
  %2694 = vmatprep.subr.mxu0 0.0
  %2695 = vmatpush1.msra.mxu0 %v2647
  %2696 = vmatprep.subr.mxu0 0.0
  %2697 = vmatpush1.msra.mxu0 %v2649
  %2698 = vmatprep.subr.mxu0 0.0
  %2699 = vmatpush1.msra.mxu0 %v2651
  %2700 = vmatprep.subr.mxu0 0.0
  %2701 = vmatpush1.msra.mxu0 %v2653
  %2702 = vmatprep.subr.mxu0 0.0
  %2703 = vmatpush1.msra.mxu0 %v2655
  %2704 = vmatprep.subr.mxu0 0.0
  %2705 = vmatpush1.msra.mxu0 %v2657
  %2706 = vmatprep.subr.mxu0 0.0
  %2707 = vmatpush1.msra.mxu0 %v2659
  %2708 = vmatprep.subr.mxu0 0.0
  %2709 = vmatpush1.msra.mxu0 %v2661
  %2710 = vmatprep.subr.mxu0 0.0
  %2711 = vmatpush1.msra.mxu0 0.0
  %2712 = vmatprep.subr.mxu0 0.0
  %2713 = vmatpush1.msra.mxu0 0.0
  %2714 = vmatprep.subr.mxu0 0.0
  %2715 = vmatpush1.msra.mxu0 0.0
  %2716 = vmatprep.subr.mxu0 0.0
  %2717 = vmatpush1.msra.mxu0 0.0
  %2718 = vmatprep.subr.mxu0 0.0
  %2719 = vmatpush1.msra.mxu0 0.0
  %2720 = vmatprep.subr.mxu0 0.0
  %2721 = vmatpush1.msra.mxu0 0.0
  %2722 = vmatprep.subr.mxu0 0.0
  %2723 = vmatpush1.msra.mxu0 0.0
  %2724 = vmatprep.subr.mxu0 0.0
  %2725 = vmatpush1.msra.mxu0 0.0
  %2726 = vmatprep.subr.mxu0 0.0
  %2727 = vmatpush1.msra.mxu0 0.0
  %2728 = vmatprep.subr.mxu0 0.0
  %2729 = vmatpush1.msra.mxu0 0.0
  %2730 = vmatprep.subr.mxu0 0.0
  %2731 = vmatpush1.msra.mxu0 0.0
  %2732 = vmatprep.subr.mxu0 0.0
  %2733 = vmatpush1.msra.mxu0 0.0
  %2734 = vmatprep.subr.mxu0 0.0
  %2735 = vmatpush1.msra.mxu0 0.0
  %2736 = vmatprep.subr.mxu0 0.0
  %2737 = vmatpush1.msra.mxu0 0.0
  %2738 = vmatprep.subr.mxu0 0.0
  %2739 = vmatpush1.msra.mxu0 0.0
  %2740 = vmatprep.subr.mxu0 0.0
  %2741 = vmatpush1.msra.mxu0 0.0
  %2742 = vmatprep.mubr.f32.mxu0 0.0
  %2743 = vmatmul.mubr.f32.gmra.mrb[0].mxu0 %v2629
  %v2744 = vpop.f32.mrb[0].mxu0
  %v2745 = vadd.f32 0.0, %v2744
  %v2746 = vpop.f32.mrb[0].mxu0
  %2747 = vdwg.mxu0
  %v2748 = vadd.f32 %v2623, %v2745
  %2749 = vset.pattern.permute.xlu0 22
  %2750 = vperm.xlu0 %2749, %v16
  %v2751 = vpop.permute.xlu0 %2750
  %vm2752 = vcmp.eq.s32.totalorder %v2751, %v15
  %v2753 = vsel %vm2752, 1, 0
  %v2754 = vcvt.s32.f32 %v2753
  %2755 = vrot.lane.b32.xlu0 %v23, 84
  %v2756 = vpop.permute.xlu0 %2755
  %2757 = vrot.lane.b32.xlu0 %v24, 84
  %v2758 = vpop.permute.xlu0 %2757
  %2759 = vrot.lane.b32.xlu0 %v25, 84
  %v2760 = vpop.permute.xlu0 %2759
  %2761 = vrot.lane.b32.xlu0 %v26, 84
  %v2762 = vpop.permute.xlu0 %2761
  %2763 = vrot.lane.b32.xlu0 %v27, 84
  %v2764 = vpop.permute.xlu0 %2763
  %2765 = vrot.lane.b32.xlu0 %v28, 84
  %v2766 = vpop.permute.xlu0 %2765
  %2767 = vrot.lane.b32.xlu0 %v29, 84
  %v2768 = vpop.permute.xlu0 %2767
  %2769 = vrot.lane.b32.xlu0 %v30, 84
  %v2770 = vpop.permute.xlu0 %2769
  %2771 = vrot.lane.b32.xlu0 %v31, 84
  %v2772 = vpop.permute.xlu0 %2771
  %2773 = vrot.lane.b32.xlu0 %v32, 84
  %v2774 = vpop.permute.xlu0 %2773
  %2775 = vrot.lane.b32.xlu0 %v33, 84
  %v2776 = vpop.permute.xlu0 %2775
  %2777 = vrot.lane.b32.xlu0 %v34, 84
  %v2778 = vpop.permute.xlu0 %2777
  %2779 = vrot.lane.b32.xlu0 %v35, 84
  %v2780 = vpop.permute.xlu0 %2779
  %2781 = vrot.lane.b32.xlu0 %v36, 84
  %v2782 = vpop.permute.xlu0 %2781
  %2783 = vrot.lane.b32.xlu0 %v37, 84
  %v2784 = vpop.permute.xlu0 %2783
  %2785 = vrot.lane.b32.xlu0 %v38, 84
  %v2786 = vpop.permute.xlu0 %2785
  %2803 = vmatprep.subr.mxu0 0.0
  %2804 = vmatpush1.msra.mxu0 %v2756
  %2805 = vmatprep.subr.mxu0 0.0
  %2806 = vmatpush1.msra.mxu0 %v2758
  %2807 = vmatprep.subr.mxu0 0.0
  %2808 = vmatpush1.msra.mxu0 %v2760
  %2809 = vmatprep.subr.mxu0 0.0
  %2810 = vmatpush1.msra.mxu0 %v2762
  %2811 = vmatprep.subr.mxu0 0.0
  %2812 = vmatpush1.msra.mxu0 %v2764
  %2813 = vmatprep.subr.mxu0 0.0
  %2814 = vmatpush1.msra.mxu0 %v2766
  %2815 = vmatprep.subr.mxu0 0.0
  %2816 = vmatpush1.msra.mxu0 %v2768
  %2817 = vmatprep.subr.mxu0 0.0
  %2818 = vmatpush1.msra.mxu0 %v2770
  %2819 = vmatprep.subr.mxu0 0.0
  %2820 = vmatpush1.msra.mxu0 %v2772
  %2821 = vmatprep.subr.mxu0 0.0
  %2822 = vmatpush1.msra.mxu0 %v2774
  %2823 = vmatprep.subr.mxu0 0.0
  %2824 = vmatpush1.msra.mxu0 %v2776
  %2825 = vmatprep.subr.mxu0 0.0
  %2826 = vmatpush1.msra.mxu0 %v2778
  %2827 = vmatprep.subr.mxu0 0.0
  %2828 = vmatpush1.msra.mxu0 %v2780
  %2829 = vmatprep.subr.mxu0 0.0
  %2830 = vmatpush1.msra.mxu0 %v2782
  %2831 = vmatprep.subr.mxu0 0.0
  %2832 = vmatpush1.msra.mxu0 %v2784
  %2833 = vmatprep.subr.mxu0 0.0
  %2834 = vmatpush1.msra.mxu0 %v2786
  %2835 = vmatprep.subr.mxu0 0.0
  %2836 = vmatpush1.msra.mxu0 0.0
  %2837 = vmatprep.subr.mxu0 0.0
  %2838 = vmatpush1.msra.mxu0 0.0
  %2839 = vmatprep.subr.mxu0 0.0
  %2840 = vmatpush1.msra.mxu0 0.0
  %2841 = vmatprep.subr.mxu0 0.0
  %2842 = vmatpush1.msra.mxu0 0.0
  %2843 = vmatprep.subr.mxu0 0.0
  %2844 = vmatpush1.msra.mxu0 0.0
  %2845 = vmatprep.subr.mxu0 0.0
  %2846 = vmatpush1.msra.mxu0 0.0
  %2847 = vmatprep.subr.mxu0 0.0
  %2848 = vmatpush1.msra.mxu0 0.0
  %2849 = vmatprep.subr.mxu0 0.0
  %2850 = vmatpush1.msra.mxu0 0.0
  %2851 = vmatprep.subr.mxu0 0.0
  %2852 = vmatpush1.msra.mxu0 0.0
  %2853 = vmatprep.subr.mxu0 0.0
  %2854 = vmatpush1.msra.mxu0 0.0
  %2855 = vmatprep.subr.mxu0 0.0
  %2856 = vmatpush1.msra.mxu0 0.0
  %2857 = vmatprep.subr.mxu0 0.0
  %2858 = vmatpush1.msra.mxu0 0.0
  %2859 = vmatprep.subr.mxu0 0.0
  %2860 = vmatpush1.msra.mxu0 0.0
  %2861 = vmatprep.subr.mxu0 0.0
  %2862 = vmatpush1.msra.mxu0 0.0
  %2863 = vmatprep.subr.mxu0 0.0
  %2864 = vmatpush1.msra.mxu0 0.0
  %2865 = vmatprep.subr.mxu0 0.0
  %2866 = vmatpush1.msra.mxu0 0.0
  %2867 = vmatprep.mubr.f32.mxu0 0.0
  %2868 = vmatmul.mubr.f32.gmra.mrb[0].mxu0 %v2754
  %v2869 = vpop.f32.mrb[0].mxu0
  %v2870 = vadd.f32 0.0, %v2869
  %v2871 = vpop.f32.mrb[0].mxu0
  %2872 = vdwg.mxu0
  %v2873 = vadd.f32 %v2748, %v2870
  %2874 = vset.pattern.permute.xlu0 23
  %2875 = vperm.xlu0 %2874, %v16
  %v2876 = vpop.permute.xlu0 %2875
  %vm2877 = vcmp.eq.s32.totalorder %v2876, %v15
  %v2878 = vsel %vm2877, 1, 0
  %v2879 = vcvt.s32.f32 %v2878
  %2880 = vrot.lane.b32.xlu0 %v23, 82
  %v2881 = vpop.permute.xlu0 %2880
  %2882 = vrot.lane.b32.xlu0 %v24, 82
  %v2883 = vpop.permute.xlu0 %2882
  %2884 = vrot.lane.b32.xlu0 %v25, 82
  %v2885 = vpop.permute.xlu0 %2884
  %2886 = vrot.lane.b32.xlu0 %v26, 82
  %v2887 = vpop.permute.xlu0 %2886
  %2888 = vrot.lane.b32.xlu0 %v27, 82
  %v2889 = vpop.permute.xlu0 %2888
  %2890 = vrot.lane.b32.xlu0 %v28, 82
  %v2891 = vpop.permute.xlu0 %2890
  %2892 = vrot.lane.b32.xlu0 %v29, 82
  %v2893 = vpop.permute.xlu0 %2892
  %2894 = vrot.lane.b32.xlu0 %v30, 82
  %v2895 = vpop.permute.xlu0 %2894
  %2896 = vrot.lane.b32.xlu0 %v31, 82
  %v2897 = vpop.permute.xlu0 %2896
  %2898 = vrot.lane.b32.xlu0 %v32, 82
  %v2899 = vpop.permute.xlu0 %2898
  %2900 = vrot.lane.b32.xlu0 %v33, 82
  %v2901 = vpop.permute.xlu0 %2900
  %2902 = vrot.lane.b32.xlu0 %v34, 82
  %v2903 = vpop.permute.xlu0 %2902
  %2904 = vrot.lane.b32.xlu0 %v35, 82
  %v2905 = vpop.permute.xlu0 %2904
  %2906 = vrot.lane.b32.xlu0 %v36, 82
  %v2907 = vpop.permute.xlu0 %2906
  %2908 = vrot.lane.b32.xlu0 %v37, 82
  %v2909 = vpop.permute.xlu0 %2908
  %2910 = vrot.lane.b32.xlu0 %v38, 82
  %v2911 = vpop.permute.xlu0 %2910
  %2928 = vmatprep.subr.mxu0 0.0
  %2929 = vmatpush1.msra.mxu0 %v2881
  %2930 = vmatprep.subr.mxu0 0.0
  %2931 = vmatpush1.msra.mxu0 %v2883
  %2932 = vmatprep.subr.mxu0 0.0
  %2933 = vmatpush1.msra.mxu0 %v2885
  %2934 = vmatprep.subr.mxu0 0.0
  %2935 = vmatpush1.msra.mxu0 %v2887
  %2936 = vmatprep.subr.mxu0 0.0
  %2937 = vmatpush1.msra.mxu0 %v2889
  %2938 = vmatprep.subr.mxu0 0.0
  %2939 = vmatpush1.msra.mxu0 %v2891
  %2940 = vmatprep.subr.mxu0 0.0
  %2941 = vmatpush1.msra.mxu0 %v2893
  %2942 = vmatprep.subr.mxu0 0.0
  %2943 = vmatpush1.msra.mxu0 %v2895
  %2944 = vmatprep.subr.mxu0 0.0
  %2945 = vmatpush1.msra.mxu0 %v2897
  %2946 = vmatprep.subr.mxu0 0.0
  %2947 = vmatpush1.msra.mxu0 %v2899
  %2948 = vmatprep.subr.mxu0 0.0
  %2949 = vmatpush1.msra.mxu0 %v2901
  %2950 = vmatprep.subr.mxu0 0.0
  %2951 = vmatpush1.msra.mxu0 %v2903
  %2952 = vmatprep.subr.mxu0 0.0
  %2953 = vmatpush1.msra.mxu0 %v2905
  %2954 = vmatprep.subr.mxu0 0.0
  %2955 = vmatpush1.msra.mxu0 %v2907
  %2956 = vmatprep.subr.mxu0 0.0
  %2957 = vmatpush1.msra.mxu0 %v2909
  %2958 = vmatprep.subr.mxu0 0.0
  %2959 = vmatpush1.msra.mxu0 %v2911
  %2960 = vmatprep.subr.mxu0 0.0
  %2961 = vmatpush1.msra.mxu0 0.0
  %2962 = vmatprep.subr.mxu0 0.0
  %2963 = vmatpush1.msra.mxu0 0.0
  %2964 = vmatprep.subr.mxu0 0.0
  %2965 = vmatpush1.msra.mxu0 0.0
  %2966 = vmatprep.subr.mxu0 0.0
  %2967 = vmatpush1.msra.mxu0 0.0
  %2968 = vmatprep.subr.mxu0 0.0
  %2969 = vmatpush1.msra.mxu0 0.0
  %2970 = vmatprep.subr.mxu0 0.0
  %2971 = vmatpush1.msra.mxu0 0.0
  %2972 = vmatprep.subr.mxu0 0.0
  %2973 = vmatpush1.msra.mxu0 0.0
  %2974 = vmatprep.subr.mxu0 0.0
  %2975 = vmatpush1.msra.mxu0 0.0
  %2976 = vmatprep.subr.mxu0 0.0
  %2977 = vmatpush1.msra.mxu0 0.0
  %2978 = vmatprep.subr.mxu0 0.0
  %2979 = vmatpush1.msra.mxu0 0.0
  %2980 = vmatprep.subr.mxu0 0.0
  %2981 = vmatpush1.msra.mxu0 0.0
  %2982 = vmatprep.subr.mxu0 0.0
  %2983 = vmatpush1.msra.mxu0 0.0
  %2984 = vmatprep.subr.mxu0 0.0
  %2985 = vmatpush1.msra.mxu0 0.0
  %2986 = vmatprep.subr.mxu0 0.0
  %2987 = vmatpush1.msra.mxu0 0.0
  %2988 = vmatprep.subr.mxu0 0.0
  %2989 = vmatpush1.msra.mxu0 0.0
  %2990 = vmatprep.subr.mxu0 0.0
  %2991 = vmatpush1.msra.mxu0 0.0
  %2992 = vmatprep.mubr.f32.mxu0 0.0
  %2993 = vmatmul.mubr.f32.gmra.mrb[0].mxu0 %v2879
  %v2994 = vpop.f32.mrb[0].mxu0
  %v2995 = vadd.f32 0.0, %v2994
  %v2996 = vpop.f32.mrb[0].mxu0
  %2997 = vdwg.mxu0
  %v2998 = vadd.f32 %v2873, %v2995
  %2999 = vset.pattern.permute.xlu0 24
  %3000 = vperm.xlu0 %2999, %v16
  %v3001 = vpop.permute.xlu0 %3000
  %vm3002 = vcmp.eq.s32.totalorder %v3001, %v15
  %v3003 = vsel %vm3002, 1, 0
  %v3004 = vcvt.s32.f32 %v3003
  %3005 = vrot.lane.b32.xlu0 %v23, 80
  %v3006 = vpop.permute.xlu0 %3005
  %3007 = vrot.lane.b32.xlu0 %v24, 80
  %v3008 = vpop.permute.xlu0 %3007
  %3009 = vrot.lane.b32.xlu0 %v25, 80
  %v3010 = vpop.permute.xlu0 %3009
  %3011 = vrot.lane.b32.xlu0 %v26, 80
  %v3012 = vpop.permute.xlu0 %3011
  %3013 = vrot.lane.b32.xlu0 %v27, 80
  %v3014 = vpop.permute.xlu0 %3013
  %3015 = vrot.lane.b32.xlu0 %v28, 80
  %v3016 = vpop.permute.xlu0 %3015
  %3017 = vrot.lane.b32.xlu0 %v29, 80
  %v3018 = vpop.permute.xlu0 %3017
  %3019 = vrot.lane.b32.xlu0 %v30, 80
  %v3020 = vpop.permute.xlu0 %3019
  %3021 = vrot.lane.b32.xlu0 %v31, 80
  %v3022 = vpop.permute.xlu0 %3021
  %3023 = vrot.lane.b32.xlu0 %v32, 80
  %v3024 = vpop.permute.xlu0 %3023
  %3025 = vrot.lane.b32.xlu0 %v33, 80
  %v3026 = vpop.permute.xlu0 %3025
  %3027 = vrot.lane.b32.xlu0 %v34, 80
  %v3028 = vpop.permute.xlu0 %3027
  %3029 = vrot.lane.b32.xlu0 %v35, 80
  %v3030 = vpop.permute.xlu0 %3029
  %3031 = vrot.lane.b32.xlu0 %v36, 80
  %v3032 = vpop.permute.xlu0 %3031
  %3033 = vrot.lane.b32.xlu0 %v37, 80
  %v3034 = vpop.permute.xlu0 %3033
  %3035 = vrot.lane.b32.xlu0 %v38, 80
  %v3036 = vpop.permute.xlu0 %3035
  %3053 = vmatprep.subr.mxu0 0.0
  %3054 = vmatpush1.msra.mxu0 %v3006
  %3055 = vmatprep.subr.mxu0 0.0
  %3056 = vmatpush1.msra.mxu0 %v3008
  %3057 = vmatprep.subr.mxu0 0.0
  %3058 = vmatpush1.msra.mxu0 %v3010
  %3059 = vmatprep.subr.mxu0 0.0
  %3060 = vmatpush1.msra.mxu0 %v3012
  %3061 = vmatprep.subr.mxu0 0.0
  %3062 = vmatpush1.msra.mxu0 %v3014
  %3063 = vmatprep.subr.mxu0 0.0
  %3064 = vmatpush1.msra.mxu0 %v3016
  %3065 = vmatprep.subr.mxu0 0.0
  %3066 = vmatpush1.msra.mxu0 %v3018
  %3067 = vmatprep.subr.mxu0 0.0
  %3068 = vmatpush1.msra.mxu0 %v3020
  %3069 = vmatprep.subr.mxu0 0.0
  %3070 = vmatpush1.msra.mxu0 %v3022
  %3071 = vmatprep.subr.mxu0 0.0
  %3072 = vmatpush1.msra.mxu0 %v3024
  %3073 = vmatprep.subr.mxu0 0.0
  %3074 = vmatpush1.msra.mxu0 %v3026
  %3075 = vmatprep.subr.mxu0 0.0
  %3076 = vmatpush1.msra.mxu0 %v3028
  %3077 = vmatprep.subr.mxu0 0.0
  %3078 = vmatpush1.msra.mxu0 %v3030
  %3079 = vmatprep.subr.mxu0 0.0
  %3080 = vmatpush1.msra.mxu0 %v3032
  %3081 = vmatprep.subr.mxu0 0.0
  %3082 = vmatpush1.msra.mxu0 %v3034
  %3083 = vmatprep.subr.mxu0 0.0
  %3084 = vmatpush1.msra.mxu0 %v3036
  %3085 = vmatprep.subr.mxu0 0.0
  %3086 = vmatpush1.msra.mxu0 0.0
  %3087 = vmatprep.subr.mxu0 0.0
  %3088 = vmatpush1.msra.mxu0 0.0
  %3089 = vmatprep.subr.mxu0 0.0
  %3090 = vmatpush1.msra.mxu0 0.0
  %3091 = vmatprep.subr.mxu0 0.0
  %3092 = vmatpush1.msra.mxu0 0.0
  %3093 = vmatprep.subr.mxu0 0.0
  %3094 = vmatpush1.msra.mxu0 0.0
  %3095 = vmatprep.subr.mxu0 0.0
  %3096 = vmatpush1.msra.mxu0 0.0
  %3097 = vmatprep.subr.mxu0 0.0
  %3098 = vmatpush1.msra.mxu0 0.0
  %3099 = vmatprep.subr.mxu0 0.0
  %3100 = vmatpush1.msra.mxu0 0.0
  %3101 = vmatprep.subr.mxu0 0.0
  %3102 = vmatpush1.msra.mxu0 0.0
  %3103 = vmatprep.subr.mxu0 0.0
  %3104 = vmatpush1.msra.mxu0 0.0
  %3105 = vmatprep.subr.mxu0 0.0
  %3106 = vmatpush1.msra.mxu0 0.0
  %3107 = vmatprep.subr.mxu0 0.0
  %3108 = vmatpush1.msra.mxu0 0.0
  %3109 = vmatprep.subr.mxu0 0.0
  %3110 = vmatpush1.msra.mxu0 0.0
  %3111 = vmatprep.subr.mxu0 0.0
  %3112 = vmatpush1.msra.mxu0 0.0
  %3113 = vmatprep.subr.mxu0 0.0
  %3114 = vmatpush1.msra.mxu0 0.0
  %3115 = vmatprep.subr.mxu0 0.0
  %3116 = vmatpush1.msra.mxu0 0.0
  %3117 = vmatprep.mubr.f32.mxu0 0.0
  %3118 = vmatmul.mubr.f32.gmra.mrb[0].mxu0 %v3004
  %v3119 = vpop.f32.mrb[0].mxu0
  %v3120 = vadd.f32 0.0, %v3119
  %v3121 = vpop.f32.mrb[0].mxu0
  %3122 = vdwg.mxu0
  %v3123 = vadd.f32 %v2998, %v3120
  %3124 = vset.pattern.permute.xlu0 25
  %3125 = vperm.xlu0 %3124, %v16
  %v3126 = vpop.permute.xlu0 %3125
  %vm3127 = vcmp.eq.s32.totalorder %v3126, %v15
  %v3128 = vsel %vm3127, 1, 0
  %v3129 = vcvt.s32.f32 %v3128
  %3130 = vrot.lane.b32.xlu0 %v23, 78
  %v3131 = vpop.permute.xlu0 %3130
  %3132 = vrot.lane.b32.xlu0 %v24, 78
  %v3133 = vpop.permute.xlu0 %3132
  %3134 = vrot.lane.b32.xlu0 %v25, 78
  %v3135 = vpop.permute.xlu0 %3134
  %3136 = vrot.lane.b32.xlu0 %v26, 78
  %v3137 = vpop.permute.xlu0 %3136
  %3138 = vrot.lane.b32.xlu0 %v27, 78
  %v3139 = vpop.permute.xlu0 %3138
  %3140 = vrot.lane.b32.xlu0 %v28, 78
  %v3141 = vpop.permute.xlu0 %3140
  %3142 = vrot.lane.b32.xlu0 %v29, 78
  %v3143 = vpop.permute.xlu0 %3142
  %3144 = vrot.lane.b32.xlu0 %v30, 78
  %v3145 = vpop.permute.xlu0 %3144
  %3146 = vrot.lane.b32.xlu0 %v31, 78
  %v3147 = vpop.permute.xlu0 %3146
  %3148 = vrot.lane.b32.xlu0 %v32, 78
  %v3149 = vpop.permute.xlu0 %3148
  %3150 = vrot.lane.b32.xlu0 %v33, 78
  %v3151 = vpop.permute.xlu0 %3150
  %3152 = vrot.lane.b32.xlu0 %v34, 78
  %v3153 = vpop.permute.xlu0 %3152
  %3154 = vrot.lane.b32.xlu0 %v35, 78
  %v3155 = vpop.permute.xlu0 %3154
  %3156 = vrot.lane.b32.xlu0 %v36, 78
  %v3157 = vpop.permute.xlu0 %3156
  %3158 = vrot.lane.b32.xlu0 %v37, 78
  %v3159 = vpop.permute.xlu0 %3158
  %3160 = vrot.lane.b32.xlu0 %v38, 78
  %v3161 = vpop.permute.xlu0 %3160
  %3178 = vmatprep.subr.mxu0 0.0
  %3179 = vmatpush1.msra.mxu0 %v3131
  %3180 = vmatprep.subr.mxu0 0.0
  %3181 = vmatpush1.msra.mxu0 %v3133
  %3182 = vmatprep.subr.mxu0 0.0
  %3183 = vmatpush1.msra.mxu0 %v3135
  %3184 = vmatprep.subr.mxu0 0.0
  %3185 = vmatpush1.msra.mxu0 %v3137
  %3186 = vmatprep.subr.mxu0 0.0
  %3187 = vmatpush1.msra.mxu0 %v3139
  %3188 = vmatprep.subr.mxu0 0.0
  %3189 = vmatpush1.msra.mxu0 %v3141
  %3190 = vmatprep.subr.mxu0 0.0
  %3191 = vmatpush1.msra.mxu0 %v3143
  %3192 = vmatprep.subr.mxu0 0.0
  %3193 = vmatpush1.msra.mxu0 %v3145
  %3194 = vmatprep.subr.mxu0 0.0
  %3195 = vmatpush1.msra.mxu0 %v3147
  %3196 = vmatprep.subr.mxu0 0.0
  %3197 = vmatpush1.msra.mxu0 %v3149
  %3198 = vmatprep.subr.mxu0 0.0
  %3199 = vmatpush1.msra.mxu0 %v3151
  %3200 = vmatprep.subr.mxu0 0.0
  %3201 = vmatpush1.msra.mxu0 %v3153
  %3202 = vmatprep.subr.mxu0 0.0
  %3203 = vmatpush1.msra.mxu0 %v3155
  %3204 = vmatprep.subr.mxu0 0.0
  %3205 = vmatpush1.msra.mxu0 %v3157
  %3206 = vmatprep.subr.mxu0 0.0
  %3207 = vmatpush1.msra.mxu0 %v3159
  %3208 = vmatprep.subr.mxu0 0.0
  %3209 = vmatpush1.msra.mxu0 %v3161
  %3210 = vmatprep.subr.mxu0 0.0
  %3211 = vmatpush1.msra.mxu0 0.0
  %3212 = vmatprep.subr.mxu0 0.0
  %3213 = vmatpush1.msra.mxu0 0.0
  %3214 = vmatprep.subr.mxu0 0.0
  %3215 = vmatpush1.msra.mxu0 0.0
  %3216 = vmatprep.subr.mxu0 0.0
  %3217 = vmatpush1.msra.mxu0 0.0
  %3218 = vmatprep.subr.mxu0 0.0
  %3219 = vmatpush1.msra.mxu0 0.0
  %3220 = vmatprep.subr.mxu0 0.0
  %3221 = vmatpush1.msra.mxu0 0.0
  %3222 = vmatprep.subr.mxu0 0.0
  %3223 = vmatpush1.msra.mxu0 0.0
  %3224 = vmatprep.subr.mxu0 0.0
  %3225 = vmatpush1.msra.mxu0 0.0
  %3226 = vmatprep.subr.mxu0 0.0
  %3227 = vmatpush1.msra.mxu0 0.0
  %3228 = vmatprep.subr.mxu0 0.0
  %3229 = vmatpush1.msra.mxu0 0.0
  %3230 = vmatprep.subr.mxu0 0.0
  %3231 = vmatpush1.msra.mxu0 0.0
  %3232 = vmatprep.subr.mxu0 0.0
  %3233 = vmatpush1.msra.mxu0 0.0
  %3234 = vmatprep.subr.mxu0 0.0
  %3235 = vmatpush1.msra.mxu0 0.0
  %3236 = vmatprep.subr.mxu0 0.0
  %3237 = vmatpush1.msra.mxu0 0.0
  %3238 = vmatprep.subr.mxu0 0.0
  %3239 = vmatpush1.msra.mxu0 0.0
  %3240 = vmatprep.subr.mxu0 0.0
  %3241 = vmatpush1.msra.mxu0 0.0
  %3242 = vmatprep.mubr.f32.mxu0 0.0
  %3243 = vmatmul.mubr.f32.gmra.mrb[0].mxu0 %v3129
  %v3244 = vpop.f32.mrb[0].mxu0
  %v3245 = vadd.f32 0.0, %v3244
  %v3246 = vpop.f32.mrb[0].mxu0
  %3247 = vdwg.mxu0
  %v3248 = vadd.f32 %v3123, %v3245
  %3249 = vset.pattern.permute.xlu0 26
  %3250 = vperm.xlu0 %3249, %v16
  %v3251 = vpop.permute.xlu0 %3250
  %vm3252 = vcmp.eq.s32.totalorder %v3251, %v15
  %v3253 = vsel %vm3252, 1, 0
  %v3254 = vcvt.s32.f32 %v3253
  %3255 = vrot.lane.b32.xlu0 %v23, 76
  %v3256 = vpop.permute.xlu0 %3255
  %3257 = vrot.lane.b32.xlu0 %v24, 76
  %v3258 = vpop.permute.xlu0 %3257
  %3259 = vrot.lane.b32.xlu0 %v25, 76
  %v3260 = vpop.permute.xlu0 %3259
  %3261 = vrot.lane.b32.xlu0 %v26, 76
  %v3262 = vpop.permute.xlu0 %3261
  %3263 = vrot.lane.b32.xlu0 %v27, 76
  %v3264 = vpop.permute.xlu0 %3263
  %3265 = vrot.lane.b32.xlu0 %v28, 76
  %v3266 = vpop.permute.xlu0 %3265
  %3267 = vrot.lane.b32.xlu0 %v29, 76
  %v3268 = vpop.permute.xlu0 %3267
  %3269 = vrot.lane.b32.xlu0 %v30, 76
  %v3270 = vpop.permute.xlu0 %3269
  %3271 = vrot.lane.b32.xlu0 %v31, 76
  %v3272 = vpop.permute.xlu0 %3271
  %3273 = vrot.lane.b32.xlu0 %v32, 76
  %v3274 = vpop.permute.xlu0 %3273
  %3275 = vrot.lane.b32.xlu0 %v33, 76
  %v3276 = vpop.permute.xlu0 %3275
  %3277 = vrot.lane.b32.xlu0 %v34, 76
  %v3278 = vpop.permute.xlu0 %3277
  %3279 = vrot.lane.b32.xlu0 %v35, 76
  %v3280 = vpop.permute.xlu0 %3279
  %3281 = vrot.lane.b32.xlu0 %v36, 76
  %v3282 = vpop.permute.xlu0 %3281
  %3283 = vrot.lane.b32.xlu0 %v37, 76
  %v3284 = vpop.permute.xlu0 %3283
  %3285 = vrot.lane.b32.xlu0 %v38, 76
  %v3286 = vpop.permute.xlu0 %3285
  %3303 = vmatprep.subr.mxu0 0.0
  %3304 = vmatpush1.msra.mxu0 %v3256
  %3305 = vmatprep.subr.mxu0 0.0
  %3306 = vmatpush1.msra.mxu0 %v3258
  %3307 = vmatprep.subr.mxu0 0.0
  %3308 = vmatpush1.msra.mxu0 %v3260
  %3309 = vmatprep.subr.mxu0 0.0
  %3310 = vmatpush1.msra.mxu0 %v3262
  %3311 = vmatprep.subr.mxu0 0.0
  %3312 = vmatpush1.msra.mxu0 %v3264
  %3313 = vmatprep.subr.mxu0 0.0
  %3314 = vmatpush1.msra.mxu0 %v3266
  %3315 = vmatprep.subr.mxu0 0.0
  %3316 = vmatpush1.msra.mxu0 %v3268
  %3317 = vmatprep.subr.mxu0 0.0
  %3318 = vmatpush1.msra.mxu0 %v3270
  %3319 = vmatprep.subr.mxu0 0.0
  %3320 = vmatpush1.msra.mxu0 %v3272
  %3321 = vmatprep.subr.mxu0 0.0
  %3322 = vmatpush1.msra.mxu0 %v3274
  %3323 = vmatprep.subr.mxu0 0.0
  %3324 = vmatpush1.msra.mxu0 %v3276
  %3325 = vmatprep.subr.mxu0 0.0
  %3326 = vmatpush1.msra.mxu0 %v3278
  %3327 = vmatprep.subr.mxu0 0.0
  %3328 = vmatpush1.msra.mxu0 %v3280
  %3329 = vmatprep.subr.mxu0 0.0
  %3330 = vmatpush1.msra.mxu0 %v3282
  %3331 = vmatprep.subr.mxu0 0.0
  %3332 = vmatpush1.msra.mxu0 %v3284
  %3333 = vmatprep.subr.mxu0 0.0
  %3334 = vmatpush1.msra.mxu0 %v3286
  %3335 = vmatprep.subr.mxu0 0.0
  %3336 = vmatpush1.msra.mxu0 0.0
  %3337 = vmatprep.subr.mxu0 0.0
  %3338 = vmatpush1.msra.mxu0 0.0
  %3339 = vmatprep.subr.mxu0 0.0
  %3340 = vmatpush1.msra.mxu0 0.0
  %3341 = vmatprep.subr.mxu0 0.0
  %3342 = vmatpush1.msra.mxu0 0.0
  %3343 = vmatprep.subr.mxu0 0.0
  %3344 = vmatpush1.msra.mxu0 0.0
  %3345 = vmatprep.subr.mxu0 0.0
  %3346 = vmatpush1.msra.mxu0 0.0
  %3347 = vmatprep.subr.mxu0 0.0
  %3348 = vmatpush1.msra.mxu0 0.0
  %3349 = vmatprep.subr.mxu0 0.0
  %3350 = vmatpush1.msra.mxu0 0.0
  %3351 = vmatprep.subr.mxu0 0.0
  %3352 = vmatpush1.msra.mxu0 0.0
  %3353 = vmatprep.subr.mxu0 0.0
  %3354 = vmatpush1.msra.mxu0 0.0
  %3355 = vmatprep.subr.mxu0 0.0
  %3356 = vmatpush1.msra.mxu0 0.0
  %3357 = vmatprep.subr.mxu0 0.0
  %3358 = vmatpush1.msra.mxu0 0.0
  %3359 = vmatprep.subr.mxu0 0.0
  %3360 = vmatpush1.msra.mxu0 0.0
  %3361 = vmatprep.subr.mxu0 0.0
  %3362 = vmatpush1.msra.mxu0 0.0
  %3363 = vmatprep.subr.mxu0 0.0
  %3364 = vmatpush1.msra.mxu0 0.0
  %3365 = vmatprep.subr.mxu0 0.0
  %3366 = vmatpush1.msra.mxu0 0.0
  %3367 = vmatprep.mubr.f32.mxu0 0.0
  %3368 = vmatmul.mubr.f32.gmra.mrb[0].mxu0 %v3254
  %v3369 = vpop.f32.mrb[0].mxu0
  %v3370 = vadd.f32 0.0, %v3369
  %v3371 = vpop.f32.mrb[0].mxu0
  %3372 = vdwg.mxu0
  %v3373 = vadd.f32 %v3248, %v3370
  %3374 = vset.pattern.permute.xlu0 27
  %3375 = vperm.xlu0 %3374, %v16
  %v3376 = vpop.permute.xlu0 %3375
  %vm3377 = vcmp.eq.s32.totalorder %v3376, %v15
  %v3378 = vsel %vm3377, 1, 0
  %v3379 = vcvt.s32.f32 %v3378
  %3380 = vrot.lane.b32.xlu0 %v23, 74
  %v3381 = vpop.permute.xlu0 %3380
  %3382 = vrot.lane.b32.xlu0 %v24, 74
  %v3383 = vpop.permute.xlu0 %3382
  %3384 = vrot.lane.b32.xlu0 %v25, 74
  %v3385 = vpop.permute.xlu0 %3384
  %3386 = vrot.lane.b32.xlu0 %v26, 74
  %v3387 = vpop.permute.xlu0 %3386
  %3388 = vrot.lane.b32.xlu0 %v27, 74
  %v3389 = vpop.permute.xlu0 %3388
  %3390 = vrot.lane.b32.xlu0 %v28, 74
  %v3391 = vpop.permute.xlu0 %3390
  %3392 = vrot.lane.b32.xlu0 %v29, 74
  %v3393 = vpop.permute.xlu0 %3392
  %3394 = vrot.lane.b32.xlu0 %v30, 74
  %v3395 = vpop.permute.xlu0 %3394
  %3396 = vrot.lane.b32.xlu0 %v31, 74
  %v3397 = vpop.permute.xlu0 %3396
  %3398 = vrot.lane.b32.xlu0 %v32, 74
  %v3399 = vpop.permute.xlu0 %3398
  %3400 = vrot.lane.b32.xlu0 %v33, 74
  %v3401 = vpop.permute.xlu0 %3400
  %3402 = vrot.lane.b32.xlu0 %v34, 74
  %v3403 = vpop.permute.xlu0 %3402
  %3404 = vrot.lane.b32.xlu0 %v35, 74
  %v3405 = vpop.permute.xlu0 %3404
  %3406 = vrot.lane.b32.xlu0 %v36, 74
  %v3407 = vpop.permute.xlu0 %3406
  %3408 = vrot.lane.b32.xlu0 %v37, 74
  %v3409 = vpop.permute.xlu0 %3408
  %3410 = vrot.lane.b32.xlu0 %v38, 74
  %v3411 = vpop.permute.xlu0 %3410
  %3428 = vmatprep.subr.mxu0 0.0
  %3429 = vmatpush1.msra.mxu0 %v3381
  %3430 = vmatprep.subr.mxu0 0.0
  %3431 = vmatpush1.msra.mxu0 %v3383
  %3432 = vmatprep.subr.mxu0 0.0
  %3433 = vmatpush1.msra.mxu0 %v3385
  %3434 = vmatprep.subr.mxu0 0.0
  %3435 = vmatpush1.msra.mxu0 %v3387
  %3436 = vmatprep.subr.mxu0 0.0
  %3437 = vmatpush1.msra.mxu0 %v3389
  %3438 = vmatprep.subr.mxu0 0.0
  %3439 = vmatpush1.msra.mxu0 %v3391
  %3440 = vmatprep.subr.mxu0 0.0
  %3441 = vmatpush1.msra.mxu0 %v3393
  %3442 = vmatprep.subr.mxu0 0.0
  %3443 = vmatpush1.msra.mxu0 %v3395
  %3444 = vmatprep.subr.mxu0 0.0
  %3445 = vmatpush1.msra.mxu0 %v3397
  %3446 = vmatprep.subr.mxu0 0.0
  %3447 = vmatpush1.msra.mxu0 %v3399
  %3448 = vmatprep.subr.mxu0 0.0
  %3449 = vmatpush1.msra.mxu0 %v3401
  %3450 = vmatprep.subr.mxu0 0.0
  %3451 = vmatpush1.msra.mxu0 %v3403
  %3452 = vmatprep.subr.mxu0 0.0
  %3453 = vmatpush1.msra.mxu0 %v3405
  %3454 = vmatprep.subr.mxu0 0.0
  %3455 = vmatpush1.msra.mxu0 %v3407
  %3456 = vmatprep.subr.mxu0 0.0
  %3457 = vmatpush1.msra.mxu0 %v3409
  %3458 = vmatprep.subr.mxu0 0.0
  %3459 = vmatpush1.msra.mxu0 %v3411
  %3460 = vmatprep.subr.mxu0 0.0
  %3461 = vmatpush1.msra.mxu0 0.0
  %3462 = vmatprep.subr.mxu0 0.0
  %3463 = vmatpush1.msra.mxu0 0.0
  %3464 = vmatprep.subr.mxu0 0.0
  %3465 = vmatpush1.msra.mxu0 0.0
  %3466 = vmatprep.subr.mxu0 0.0
  %3467 = vmatpush1.msra.mxu0 0.0
  %3468 = vmatprep.subr.mxu0 0.0
  %3469 = vmatpush1.msra.mxu0 0.0
  %3470 = vmatprep.subr.mxu0 0.0
  %3471 = vmatpush1.msra.mxu0 0.0
  %3472 = vmatprep.subr.mxu0 0.0
  %3473 = vmatpush1.msra.mxu0 0.0
  %3474 = vmatprep.subr.mxu0 0.0
  %3475 = vmatpush1.msra.mxu0 0.0
  %3476 = vmatprep.subr.mxu0 0.0
  %3477 = vmatpush1.msra.mxu0 0.0
  %3478 = vmatprep.subr.mxu0 0.0
  %3479 = vmatpush1.msra.mxu0 0.0
  %3480 = vmatprep.subr.mxu0 0.0
  %3481 = vmatpush1.msra.mxu0 0.0
  %3482 = vmatprep.subr.mxu0 0.0
  %3483 = vmatpush1.msra.mxu0 0.0
  %3484 = vmatprep.subr.mxu0 0.0
  %3485 = vmatpush1.msra.mxu0 0.0
  %3486 = vmatprep.subr.mxu0 0.0
  %3487 = vmatpush1.msra.mxu0 0.0
  %3488 = vmatprep.subr.mxu0 0.0
  %3489 = vmatpush1.msra.mxu0 0.0
  %3490 = vmatprep.subr.mxu0 0.0
  %3491 = vmatpush1.msra.mxu0 0.0
  %3492 = vmatprep.mubr.f32.mxu0 0.0
  %3493 = vmatmul.mubr.f32.gmra.mrb[0].mxu0 %v3379
  %v3494 = vpop.f32.mrb[0].mxu0
  %v3495 = vadd.f32 0.0, %v3494
  %v3496 = vpop.f32.mrb[0].mxu0
  %3497 = vdwg.mxu0
  %v3498 = vadd.f32 %v3373, %v3495
  %3499 = vset.pattern.permute.xlu0 28
  %3500 = vperm.xlu0 %3499, %v16
  %v3501 = vpop.permute.xlu0 %3500
  %vm3502 = vcmp.eq.s32.totalorder %v3501, %v15
  %v3503 = vsel %vm3502, 1, 0
  %v3504 = vcvt.s32.f32 %v3503
  %3505 = vrot.lane.b32.xlu0 %v23, 72
  %v3506 = vpop.permute.xlu0 %3505
  %3507 = vrot.lane.b32.xlu0 %v24, 72
  %v3508 = vpop.permute.xlu0 %3507
  %3509 = vrot.lane.b32.xlu0 %v25, 72
  %v3510 = vpop.permute.xlu0 %3509
  %3511 = vrot.lane.b32.xlu0 %v26, 72
  %v3512 = vpop.permute.xlu0 %3511
  %3513 = vrot.lane.b32.xlu0 %v27, 72
  %v3514 = vpop.permute.xlu0 %3513
  %3515 = vrot.lane.b32.xlu0 %v28, 72
  %v3516 = vpop.permute.xlu0 %3515
  %3517 = vrot.lane.b32.xlu0 %v29, 72
  %v3518 = vpop.permute.xlu0 %3517
  %3519 = vrot.lane.b32.xlu0 %v30, 72
  %v3520 = vpop.permute.xlu0 %3519
  %3521 = vrot.lane.b32.xlu0 %v31, 72
  %v3522 = vpop.permute.xlu0 %3521
  %3523 = vrot.lane.b32.xlu0 %v32, 72
  %v3524 = vpop.permute.xlu0 %3523
  %3525 = vrot.lane.b32.xlu0 %v33, 72
  %v3526 = vpop.permute.xlu0 %3525
  %3527 = vrot.lane.b32.xlu0 %v34, 72
  %v3528 = vpop.permute.xlu0 %3527
  %3529 = vrot.lane.b32.xlu0 %v35, 72
  %v3530 = vpop.permute.xlu0 %3529
  %3531 = vrot.lane.b32.xlu0 %v36, 72
  %v3532 = vpop.permute.xlu0 %3531
  %3533 = vrot.lane.b32.xlu0 %v37, 72
  %v3534 = vpop.permute.xlu0 %3533
  %3535 = vrot.lane.b32.xlu0 %v38, 72
  %v3536 = vpop.permute.xlu0 %3535
  %3553 = vmatprep.subr.mxu0 0.0
  %3554 = vmatpush1.msra.mxu0 %v3506
  %3555 = vmatprep.subr.mxu0 0.0
  %3556 = vmatpush1.msra.mxu0 %v3508
  %3557 = vmatprep.subr.mxu0 0.0
  %3558 = vmatpush1.msra.mxu0 %v3510
  %3559 = vmatprep.subr.mxu0 0.0
  %3560 = vmatpush1.msra.mxu0 %v3512
  %3561 = vmatprep.subr.mxu0 0.0
  %3562 = vmatpush1.msra.mxu0 %v3514
  %3563 = vmatprep.subr.mxu0 0.0
  %3564 = vmatpush1.msra.mxu0 %v3516
  %3565 = vmatprep.subr.mxu0 0.0
  %3566 = vmatpush1.msra.mxu0 %v3518
  %3567 = vmatprep.subr.mxu0 0.0
  %3568 = vmatpush1.msra.mxu0 %v3520
  %3569 = vmatprep.subr.mxu0 0.0
  %3570 = vmatpush1.msra.mxu0 %v3522
  %3571 = vmatprep.subr.mxu0 0.0
  %3572 = vmatpush1.msra.mxu0 %v3524
  %3573 = vmatprep.subr.mxu0 0.0
  %3574 = vmatpush1.msra.mxu0 %v3526
  %3575 = vmatprep.subr.mxu0 0.0
  %3576 = vmatpush1.msra.mxu0 %v3528
  %3577 = vmatprep.subr.mxu0 0.0
  %3578 = vmatpush1.msra.mxu0 %v3530
  %3579 = vmatprep.subr.mxu0 0.0
  %3580 = vmatpush1.msra.mxu0 %v3532
  %3581 = vmatprep.subr.mxu0 0.0
  %3582 = vmatpush1.msra.mxu0 %v3534
  %3583 = vmatprep.subr.mxu0 0.0
  %3584 = vmatpush1.msra.mxu0 %v3536
  %3585 = vmatprep.subr.mxu0 0.0
  %3586 = vmatpush1.msra.mxu0 0.0
  %3587 = vmatprep.subr.mxu0 0.0
  %3588 = vmatpush1.msra.mxu0 0.0
  %3589 = vmatprep.subr.mxu0 0.0
  %3590 = vmatpush1.msra.mxu0 0.0
  %3591 = vmatprep.subr.mxu0 0.0
  %3592 = vmatpush1.msra.mxu0 0.0
  %3593 = vmatprep.subr.mxu0 0.0
  %3594 = vmatpush1.msra.mxu0 0.0
  %3595 = vmatprep.subr.mxu0 0.0
  %3596 = vmatpush1.msra.mxu0 0.0
  %3597 = vmatprep.subr.mxu0 0.0
  %3598 = vmatpush1.msra.mxu0 0.0
  %3599 = vmatprep.subr.mxu0 0.0
  %3600 = vmatpush1.msra.mxu0 0.0
  %3601 = vmatprep.subr.mxu0 0.0
  %3602 = vmatpush1.msra.mxu0 0.0
  %3603 = vmatprep.subr.mxu0 0.0
  %3604 = vmatpush1.msra.mxu0 0.0
  %3605 = vmatprep.subr.mxu0 0.0
  %3606 = vmatpush1.msra.mxu0 0.0
  %3607 = vmatprep.subr.mxu0 0.0
  %3608 = vmatpush1.msra.mxu0 0.0
  %3609 = vmatprep.subr.mxu0 0.0
  %3610 = vmatpush1.msra.mxu0 0.0
  %3611 = vmatprep.subr.mxu0 0.0
  %3612 = vmatpush1.msra.mxu0 0.0
  %3613 = vmatprep.subr.mxu0 0.0
  %3614 = vmatpush1.msra.mxu0 0.0
  %3615 = vmatprep.subr.mxu0 0.0
  %3616 = vmatpush1.msra.mxu0 0.0
  %3617 = vmatprep.mubr.f32.mxu0 0.0
  %3618 = vmatmul.mubr.f32.gmra.mrb[0].mxu0 %v3504
  %v3619 = vpop.f32.mrb[0].mxu0
  %v3620 = vadd.f32 0.0, %v3619
  %v3621 = vpop.f32.mrb[0].mxu0
  %3622 = vdwg.mxu0
  %v3623 = vadd.f32 %v3498, %v3620
  %3624 = vset.pattern.permute.xlu0 29
  %3625 = vperm.xlu0 %3624, %v16
  %v3626 = vpop.permute.xlu0 %3625
  %vm3627 = vcmp.eq.s32.totalorder %v3626, %v15
  %v3628 = vsel %vm3627, 1, 0
  %v3629 = vcvt.s32.f32 %v3628
  %3630 = vrot.lane.b32.xlu0 %v23, 70
  %v3631 = vpop.permute.xlu0 %3630
  %3632 = vrot.lane.b32.xlu0 %v24, 70
  %v3633 = vpop.permute.xlu0 %3632
  %3634 = vrot.lane.b32.xlu0 %v25, 70
  %v3635 = vpop.permute.xlu0 %3634
  %3636 = vrot.lane.b32.xlu0 %v26, 70
  %v3637 = vpop.permute.xlu0 %3636
  %3638 = vrot.lane.b32.xlu0 %v27, 70
  %v3639 = vpop.permute.xlu0 %3638
  %3640 = vrot.lane.b32.xlu0 %v28, 70
  %v3641 = vpop.permute.xlu0 %3640
  %3642 = vrot.lane.b32.xlu0 %v29, 70
  %v3643 = vpop.permute.xlu0 %3642
  %3644 = vrot.lane.b32.xlu0 %v30, 70
  %v3645 = vpop.permute.xlu0 %3644
  %3646 = vrot.lane.b32.xlu0 %v31, 70
  %v3647 = vpop.permute.xlu0 %3646
  %3648 = vrot.lane.b32.xlu0 %v32, 70
  %v3649 = vpop.permute.xlu0 %3648
  %3650 = vrot.lane.b32.xlu0 %v33, 70
  %v3651 = vpop.permute.xlu0 %3650
  %3652 = vrot.lane.b32.xlu0 %v34, 70
  %v3653 = vpop.permute.xlu0 %3652
  %3654 = vrot.lane.b32.xlu0 %v35, 70
  %v3655 = vpop.permute.xlu0 %3654
  %3656 = vrot.lane.b32.xlu0 %v36, 70
  %v3657 = vpop.permute.xlu0 %3656
  %3658 = vrot.lane.b32.xlu0 %v37, 70
  %v3659 = vpop.permute.xlu0 %3658
  %3660 = vrot.lane.b32.xlu0 %v38, 70
  %v3661 = vpop.permute.xlu0 %3660
  %3678 = vmatprep.subr.mxu0 0.0
  %3679 = vmatpush1.msra.mxu0 %v3631
  %3680 = vmatprep.subr.mxu0 0.0
  %3681 = vmatpush1.msra.mxu0 %v3633
  %3682 = vmatprep.subr.mxu0 0.0
  %3683 = vmatpush1.msra.mxu0 %v3635
  %3684 = vmatprep.subr.mxu0 0.0
  %3685 = vmatpush1.msra.mxu0 %v3637
  %3686 = vmatprep.subr.mxu0 0.0
  %3687 = vmatpush1.msra.mxu0 %v3639
  %3688 = vmatprep.subr.mxu0 0.0
  %3689 = vmatpush1.msra.mxu0 %v3641
  %3690 = vmatprep.subr.mxu0 0.0
  %3691 = vmatpush1.msra.mxu0 %v3643
  %3692 = vmatprep.subr.mxu0 0.0
  %3693 = vmatpush1.msra.mxu0 %v3645
  %3694 = vmatprep.subr.mxu0 0.0
  %3695 = vmatpush1.msra.mxu0 %v3647
  %3696 = vmatprep.subr.mxu0 0.0
  %3697 = vmatpush1.msra.mxu0 %v3649
  %3698 = vmatprep.subr.mxu0 0.0
  %3699 = vmatpush1.msra.mxu0 %v3651
  %3700 = vmatprep.subr.mxu0 0.0
  %3701 = vmatpush1.msra.mxu0 %v3653
  %3702 = vmatprep.subr.mxu0 0.0
  %3703 = vmatpush1.msra.mxu0 %v3655
  %3704 = vmatprep.subr.mxu0 0.0
  %3705 = vmatpush1.msra.mxu0 %v3657
  %3706 = vmatprep.subr.mxu0 0.0
  %3707 = vmatpush1.msra.mxu0 %v3659
  %3708 = vmatprep.subr.mxu0 0.0
  %3709 = vmatpush1.msra.mxu0 %v3661
  %3710 = vmatprep.subr.mxu0 0.0
  %3711 = vmatpush1.msra.mxu0 0.0
  %3712 = vmatprep.subr.mxu0 0.0
  %3713 = vmatpush1.msra.mxu0 0.0
  %3714 = vmatprep.subr.mxu0 0.0
  %3715 = vmatpush1.msra.mxu0 0.0
  %3716 = vmatprep.subr.mxu0 0.0
  %3717 = vmatpush1.msra.mxu0 0.0
  %3718 = vmatprep.subr.mxu0 0.0
  %3719 = vmatpush1.msra.mxu0 0.0
  %3720 = vmatprep.subr.mxu0 0.0
  %3721 = vmatpush1.msra.mxu0 0.0
  %3722 = vmatprep.subr.mxu0 0.0
  %3723 = vmatpush1.msra.mxu0 0.0
  %3724 = vmatprep.subr.mxu0 0.0
  %3725 = vmatpush1.msra.mxu0 0.0
  %3726 = vmatprep.subr.mxu0 0.0
  %3727 = vmatpush1.msra.mxu0 0.0
  %3728 = vmatprep.subr.mxu0 0.0
  %3729 = vmatpush1.msra.mxu0 0.0
  %3730 = vmatprep.subr.mxu0 0.0
  %3731 = vmatpush1.msra.mxu0 0.0
  %3732 = vmatprep.subr.mxu0 0.0
  %3733 = vmatpush1.msra.mxu0 0.0
  %3734 = vmatprep.subr.mxu0 0.0
  %3735 = vmatpush1.msra.mxu0 0.0
  %3736 = vmatprep.subr.mxu0 0.0
  %3737 = vmatpush1.msra.mxu0 0.0
  %3738 = vmatprep.subr.mxu0 0.0
  %3739 = vmatpush1.msra.mxu0 0.0
  %3740 = vmatprep.subr.mxu0 0.0
  %3741 = vmatpush1.msra.mxu0 0.0
  %3742 = vmatprep.mubr.f32.mxu0 0.0
  %3743 = vmatmul.mubr.f32.gmra.mrb[0].mxu0 %v3629
  %v3744 = vpop.f32.mrb[0].mxu0
  %v3745 = vadd.f32 0.0, %v3744
  %v3746 = vpop.f32.mrb[0].mxu0
  %3747 = vdwg.mxu0
  %v3748 = vadd.f32 %v3623, %v3745
  %3749 = vset.pattern.permute.xlu0 30
  %3750 = vperm.xlu0 %3749, %v16
  %v3751 = vpop.permute.xlu0 %3750
  %vm3752 = vcmp.eq.s32.totalorder %v3751, %v15
  %v3753 = vsel %vm3752, 1, 0
  %v3754 = vcvt.s32.f32 %v3753
  %3755 = vrot.lane.b32.xlu0 %v23, 68
  %v3756 = vpop.permute.xlu0 %3755
  %3757 = vrot.lane.b32.xlu0 %v24, 68
  %v3758 = vpop.permute.xlu0 %3757
  %3759 = vrot.lane.b32.xlu0 %v25, 68
  %v3760 = vpop.permute.xlu0 %3759
  %3761 = vrot.lane.b32.xlu0 %v26, 68
  %v3762 = vpop.permute.xlu0 %3761
  %3763 = vrot.lane.b32.xlu0 %v27, 68
  %v3764 = vpop.permute.xlu0 %3763
  %3765 = vrot.lane.b32.xlu0 %v28, 68
  %v3766 = vpop.permute.xlu0 %3765
  %3767 = vrot.lane.b32.xlu0 %v29, 68
  %v3768 = vpop.permute.xlu0 %3767
  %3769 = vrot.lane.b32.xlu0 %v30, 68
  %v3770 = vpop.permute.xlu0 %3769
  %3771 = vrot.lane.b32.xlu0 %v31, 68
  %v3772 = vpop.permute.xlu0 %3771
  %3773 = vrot.lane.b32.xlu0 %v32, 68
  %v3774 = vpop.permute.xlu0 %3773
  %3775 = vrot.lane.b32.xlu0 %v33, 68
  %v3776 = vpop.permute.xlu0 %3775
  %3777 = vrot.lane.b32.xlu0 %v34, 68
  %v3778 = vpop.permute.xlu0 %3777
  %3779 = vrot.lane.b32.xlu0 %v35, 68
  %v3780 = vpop.permute.xlu0 %3779
  %3781 = vrot.lane.b32.xlu0 %v36, 68
  %v3782 = vpop.permute.xlu0 %3781
  %3783 = vrot.lane.b32.xlu0 %v37, 68
  %v3784 = vpop.permute.xlu0 %3783
  %3785 = vrot.lane.b32.xlu0 %v38, 68
  %v3786 = vpop.permute.xlu0 %3785
  %3803 = vmatprep.subr.mxu0 0.0
  %3804 = vmatpush1.msra.mxu0 %v3756
  %3805 = vmatprep.subr.mxu0 0.0
  %3806 = vmatpush1.msra.mxu0 %v3758
  %3807 = vmatprep.subr.mxu0 0.0
  %3808 = vmatpush1.msra.mxu0 %v3760
  %3809 = vmatprep.subr.mxu0 0.0
  %3810 = vmatpush1.msra.mxu0 %v3762
  %3811 = vmatprep.subr.mxu0 0.0
  %3812 = vmatpush1.msra.mxu0 %v3764
  %3813 = vmatprep.subr.mxu0 0.0
  %3814 = vmatpush1.msra.mxu0 %v3766
  %3815 = vmatprep.subr.mxu0 0.0
  %3816 = vmatpush1.msra.mxu0 %v3768
  %3817 = vmatprep.subr.mxu0 0.0
  %3818 = vmatpush1.msra.mxu0 %v3770
  %3819 = vmatprep.subr.mxu0 0.0
  %3820 = vmatpush1.msra.mxu0 %v3772
  %3821 = vmatprep.subr.mxu0 0.0
  %3822 = vmatpush1.msra.mxu0 %v3774
  %3823 = vmatprep.subr.mxu0 0.0
  %3824 = vmatpush1.msra.mxu0 %v3776
  %3825 = vmatprep.subr.mxu0 0.0
  %3826 = vmatpush1.msra.mxu0 %v3778
  %3827 = vmatprep.subr.mxu0 0.0
  %3828 = vmatpush1.msra.mxu0 %v3780
  %3829 = vmatprep.subr.mxu0 0.0
  %3830 = vmatpush1.msra.mxu0 %v3782
  %3831 = vmatprep.subr.mxu0 0.0
  %3832 = vmatpush1.msra.mxu0 %v3784
  %3833 = vmatprep.subr.mxu0 0.0
  %3834 = vmatpush1.msra.mxu0 %v3786
  %3835 = vmatprep.subr.mxu0 0.0
  %3836 = vmatpush1.msra.mxu0 0.0
  %3837 = vmatprep.subr.mxu0 0.0
  %3838 = vmatpush1.msra.mxu0 0.0
  %3839 = vmatprep.subr.mxu0 0.0
  %3840 = vmatpush1.msra.mxu0 0.0
  %3841 = vmatprep.subr.mxu0 0.0
  %3842 = vmatpush1.msra.mxu0 0.0
  %3843 = vmatprep.subr.mxu0 0.0
  %3844 = vmatpush1.msra.mxu0 0.0
  %3845 = vmatprep.subr.mxu0 0.0
  %3846 = vmatpush1.msra.mxu0 0.0
  %3847 = vmatprep.subr.mxu0 0.0
  %3848 = vmatpush1.msra.mxu0 0.0
  %3849 = vmatprep.subr.mxu0 0.0
  %3850 = vmatpush1.msra.mxu0 0.0
  %3851 = vmatprep.subr.mxu0 0.0
  %3852 = vmatpush1.msra.mxu0 0.0
  %3853 = vmatprep.subr.mxu0 0.0
  %3854 = vmatpush1.msra.mxu0 0.0
  %3855 = vmatprep.subr.mxu0 0.0
  %3856 = vmatpush1.msra.mxu0 0.0
  %3857 = vmatprep.subr.mxu0 0.0
  %3858 = vmatpush1.msra.mxu0 0.0
  %3859 = vmatprep.subr.mxu0 0.0
  %3860 = vmatpush1.msra.mxu0 0.0
  %3861 = vmatprep.subr.mxu0 0.0
  %3862 = vmatpush1.msra.mxu0 0.0
  %3863 = vmatprep.subr.mxu0 0.0
  %3864 = vmatpush1.msra.mxu0 0.0
  %3865 = vmatprep.subr.mxu0 0.0
  %3866 = vmatpush1.msra.mxu0 0.0
  %3867 = vmatprep.mubr.f32.mxu0 0.0
  %3868 = vmatmul.mubr.f32.gmra.mrb[0].mxu0 %v3754
  %v3869 = vpop.f32.mrb[0].mxu0
  %v3870 = vadd.f32 0.0, %v3869
  %v3871 = vpop.f32.mrb[0].mxu0
  %3872 = vdwg.mxu0
  %v3873 = vadd.f32 %v3748, %v3870
  %3874 = vset.pattern.permute.xlu0 31
  %3875 = vperm.xlu0 %3874, %v16
  %v3876 = vpop.permute.xlu0 %3875
  %vm3877 = vcmp.eq.s32.totalorder %v3876, %v15
  %v3878 = vsel %vm3877, 1, 0
  %v3879 = vcvt.s32.f32 %v3878
  %3880 = vrot.lane.b32.xlu0 %v23, 66
  %v3881 = vpop.permute.xlu0 %3880
  %3882 = vrot.lane.b32.xlu0 %v24, 66
  %v3883 = vpop.permute.xlu0 %3882
  %3884 = vrot.lane.b32.xlu0 %v25, 66
  %v3885 = vpop.permute.xlu0 %3884
  %3886 = vrot.lane.b32.xlu0 %v26, 66
  %v3887 = vpop.permute.xlu0 %3886
  %3888 = vrot.lane.b32.xlu0 %v27, 66
  %v3889 = vpop.permute.xlu0 %3888
  %3890 = vrot.lane.b32.xlu0 %v28, 66
  %v3891 = vpop.permute.xlu0 %3890
  %3892 = vrot.lane.b32.xlu0 %v29, 66
  %v3893 = vpop.permute.xlu0 %3892
  %3894 = vrot.lane.b32.xlu0 %v30, 66
  %v3895 = vpop.permute.xlu0 %3894
  %3896 = vrot.lane.b32.xlu0 %v31, 66
  %v3897 = vpop.permute.xlu0 %3896
  %3898 = vrot.lane.b32.xlu0 %v32, 66
  %v3899 = vpop.permute.xlu0 %3898
  %3900 = vrot.lane.b32.xlu0 %v33, 66
  %v3901 = vpop.permute.xlu0 %3900
  %3902 = vrot.lane.b32.xlu0 %v34, 66
  %v3903 = vpop.permute.xlu0 %3902
  %3904 = vrot.lane.b32.xlu0 %v35, 66
  %v3905 = vpop.permute.xlu0 %3904
  %3906 = vrot.lane.b32.xlu0 %v36, 66
  %v3907 = vpop.permute.xlu0 %3906
  %3908 = vrot.lane.b32.xlu0 %v37, 66
  %v3909 = vpop.permute.xlu0 %3908
  %3910 = vrot.lane.b32.xlu0 %v38, 66
  %v3911 = vpop.permute.xlu0 %3910
  %3928 = vmatprep.subr.mxu0 0.0
  %3929 = vmatpush1.msra.mxu0 %v3881
  %3930 = vmatprep.subr.mxu0 0.0
  %3931 = vmatpush1.msra.mxu0 %v3883
  %3932 = vmatprep.subr.mxu0 0.0
  %3933 = vmatpush1.msra.mxu0 %v3885
  %3934 = vmatprep.subr.mxu0 0.0
  %3935 = vmatpush1.msra.mxu0 %v3887
  %3936 = vmatprep.subr.mxu0 0.0
  %3937 = vmatpush1.msra.mxu0 %v3889
  %3938 = vmatprep.subr.mxu0 0.0
  %3939 = vmatpush1.msra.mxu0 %v3891
  %3940 = vmatprep.subr.mxu0 0.0
  %3941 = vmatpush1.msra.mxu0 %v3893
  %3942 = vmatprep.subr.mxu0 0.0
  %3943 = vmatpush1.msra.mxu0 %v3895
  %3944 = vmatprep.subr.mxu0 0.0
  %3945 = vmatpush1.msra.mxu0 %v3897
  %3946 = vmatprep.subr.mxu0 0.0
  %3947 = vmatpush1.msra.mxu0 %v3899
  %3948 = vmatprep.subr.mxu0 0.0
  %3949 = vmatpush1.msra.mxu0 %v3901
  %3950 = vmatprep.subr.mxu0 0.0
  %3951 = vmatpush1.msra.mxu0 %v3903
  %3952 = vmatprep.subr.mxu0 0.0
  %3953 = vmatpush1.msra.mxu0 %v3905
  %3954 = vmatprep.subr.mxu0 0.0
  %3955 = vmatpush1.msra.mxu0 %v3907
  %3956 = vmatprep.subr.mxu0 0.0
  %3957 = vmatpush1.msra.mxu0 %v3909
  %3958 = vmatprep.subr.mxu0 0.0
  %3959 = vmatpush1.msra.mxu0 %v3911
  %3960 = vmatprep.subr.mxu0 0.0
  %3961 = vmatpush1.msra.mxu0 0.0
  %3962 = vmatprep.subr.mxu0 0.0
  %3963 = vmatpush1.msra.mxu0 0.0
  %3964 = vmatprep.subr.mxu0 0.0
  %3965 = vmatpush1.msra.mxu0 0.0
  %3966 = vmatprep.subr.mxu0 0.0
  %3967 = vmatpush1.msra.mxu0 0.0
  %3968 = vmatprep.subr.mxu0 0.0
  %3969 = vmatpush1.msra.mxu0 0.0
  %3970 = vmatprep.subr.mxu0 0.0
  %3971 = vmatpush1.msra.mxu0 0.0
  %3972 = vmatprep.subr.mxu0 0.0
  %3973 = vmatpush1.msra.mxu0 0.0
  %3974 = vmatprep.subr.mxu0 0.0
  %3975 = vmatpush1.msra.mxu0 0.0
  %3976 = vmatprep.subr.mxu0 0.0
  %3977 = vmatpush1.msra.mxu0 0.0
  %3978 = vmatprep.subr.mxu0 0.0
  %3979 = vmatpush1.msra.mxu0 0.0
  %3980 = vmatprep.subr.mxu0 0.0
  %3981 = vmatpush1.msra.mxu0 0.0
  %3982 = vmatprep.subr.mxu0 0.0
  %3983 = vmatpush1.msra.mxu0 0.0
  %3984 = vmatprep.subr.mxu0 0.0
  %3985 = vmatpush1.msra.mxu0 0.0
  %3986 = vmatprep.subr.mxu0 0.0
  %3987 = vmatpush1.msra.mxu0 0.0
  %3988 = vmatprep.subr.mxu0 0.0
  %3989 = vmatpush1.msra.mxu0 0.0
  %3990 = vmatprep.subr.mxu0 0.0
  %3991 = vmatpush1.msra.mxu0 0.0
  %3992 = vmatprep.mubr.f32.mxu0 0.0
  %3993 = vmatmul.mubr.f32.gmra.mrb[0].mxu0 %v3879
  %v3994 = vpop.f32.mrb[0].mxu0
  %v3995 = vadd.f32 0.0, %v3994
  %v3996 = vpop.f32.mrb[0].mxu0
  %3997 = vdwg.mxu0
  %v3998 = vadd.f32 %v3873, %v3995
  %3999 = vset.pattern.permute.xlu0 32
  %4000 = vperm.xlu0 %3999, %v16
  %v4001 = vpop.permute.xlu0 %4000
  %vm4002 = vcmp.eq.s32.totalorder %v4001, %v15
  %v4003 = vsel %vm4002, 1, 0
  %v4004 = vcvt.s32.f32 %v4003
  %4005 = vrot.lane.b32.xlu0 %v23, 64
  %v4006 = vpop.permute.xlu0 %4005
  %4007 = vrot.lane.b32.xlu0 %v24, 64
  %v4008 = vpop.permute.xlu0 %4007
  %4009 = vrot.lane.b32.xlu0 %v25, 64
  %v4010 = vpop.permute.xlu0 %4009
  %4011 = vrot.lane.b32.xlu0 %v26, 64
  %v4012 = vpop.permute.xlu0 %4011
  %4013 = vrot.lane.b32.xlu0 %v27, 64
  %v4014 = vpop.permute.xlu0 %4013
  %4015 = vrot.lane.b32.xlu0 %v28, 64
  %v4016 = vpop.permute.xlu0 %4015
  %4017 = vrot.lane.b32.xlu0 %v29, 64
  %v4018 = vpop.permute.xlu0 %4017
  %4019 = vrot.lane.b32.xlu0 %v30, 64
  %v4020 = vpop.permute.xlu0 %4019
  %4021 = vrot.lane.b32.xlu0 %v31, 64
  %v4022 = vpop.permute.xlu0 %4021
  %4023 = vrot.lane.b32.xlu0 %v32, 64
  %v4024 = vpop.permute.xlu0 %4023
  %4025 = vrot.lane.b32.xlu0 %v33, 64
  %v4026 = vpop.permute.xlu0 %4025
  %4027 = vrot.lane.b32.xlu0 %v34, 64
  %v4028 = vpop.permute.xlu0 %4027
  %4029 = vrot.lane.b32.xlu0 %v35, 64
  %v4030 = vpop.permute.xlu0 %4029
  %4031 = vrot.lane.b32.xlu0 %v36, 64
  %v4032 = vpop.permute.xlu0 %4031
  %4033 = vrot.lane.b32.xlu0 %v37, 64
  %v4034 = vpop.permute.xlu0 %4033
  %4035 = vrot.lane.b32.xlu0 %v38, 64
  %v4036 = vpop.permute.xlu0 %4035
  %4053 = vmatprep.subr.mxu0 0.0
  %4054 = vmatpush1.msra.mxu0 %v4006
  %4055 = vmatprep.subr.mxu0 0.0
  %4056 = vmatpush1.msra.mxu0 %v4008
  %4057 = vmatprep.subr.mxu0 0.0
  %4058 = vmatpush1.msra.mxu0 %v4010
  %4059 = vmatprep.subr.mxu0 0.0
  %4060 = vmatpush1.msra.mxu0 %v4012
  %4061 = vmatprep.subr.mxu0 0.0
  %4062 = vmatpush1.msra.mxu0 %v4014
  %4063 = vmatprep.subr.mxu0 0.0
  %4064 = vmatpush1.msra.mxu0 %v4016
  %4065 = vmatprep.subr.mxu0 0.0
  %4066 = vmatpush1.msra.mxu0 %v4018
  %4067 = vmatprep.subr.mxu0 0.0
  %4068 = vmatpush1.msra.mxu0 %v4020
  %4069 = vmatprep.subr.mxu0 0.0
  %4070 = vmatpush1.msra.mxu0 %v4022
  %4071 = vmatprep.subr.mxu0 0.0
  %4072 = vmatpush1.msra.mxu0 %v4024
  %4073 = vmatprep.subr.mxu0 0.0
  %4074 = vmatpush1.msra.mxu0 %v4026
  %4075 = vmatprep.subr.mxu0 0.0
  %4076 = vmatpush1.msra.mxu0 %v4028
  %4077 = vmatprep.subr.mxu0 0.0
  %4078 = vmatpush1.msra.mxu0 %v4030
  %4079 = vmatprep.subr.mxu0 0.0
  %4080 = vmatpush1.msra.mxu0 %v4032
  %4081 = vmatprep.subr.mxu0 0.0
  %4082 = vmatpush1.msra.mxu0 %v4034
  %4083 = vmatprep.subr.mxu0 0.0
  %4084 = vmatpush1.msra.mxu0 %v4036
  %4085 = vmatprep.subr.mxu0 0.0
  %4086 = vmatpush1.msra.mxu0 0.0
  %4087 = vmatprep.subr.mxu0 0.0
  %4088 = vmatpush1.msra.mxu0 0.0
  %4089 = vmatprep.subr.mxu0 0.0
  %4090 = vmatpush1.msra.mxu0 0.0
  %4091 = vmatprep.subr.mxu0 0.0
  %4092 = vmatpush1.msra.mxu0 0.0
  %4093 = vmatprep.subr.mxu0 0.0
  %4094 = vmatpush1.msra.mxu0 0.0
  %4095 = vmatprep.subr.mxu0 0.0
  %4096 = vmatpush1.msra.mxu0 0.0
  %4097 = vmatprep.subr.mxu0 0.0
  %4098 = vmatpush1.msra.mxu0 0.0
  %4099 = vmatprep.subr.mxu0 0.0
  %4100 = vmatpush1.msra.mxu0 0.0
  %4101 = vmatprep.subr.mxu0 0.0
  %4102 = vmatpush1.msra.mxu0 0.0
  %4103 = vmatprep.subr.mxu0 0.0
  %4104 = vmatpush1.msra.mxu0 0.0
  %4105 = vmatprep.subr.mxu0 0.0
  %4106 = vmatpush1.msra.mxu0 0.0
  %4107 = vmatprep.subr.mxu0 0.0
  %4108 = vmatpush1.msra.mxu0 0.0
  %4109 = vmatprep.subr.mxu0 0.0
  %4110 = vmatpush1.msra.mxu0 0.0
  %4111 = vmatprep.subr.mxu0 0.0
  %4112 = vmatpush1.msra.mxu0 0.0
  %4113 = vmatprep.subr.mxu0 0.0
  %4114 = vmatpush1.msra.mxu0 0.0
  %4115 = vmatprep.subr.mxu0 0.0
  %4116 = vmatpush1.msra.mxu0 0.0
  %4117 = vmatprep.mubr.f32.mxu0 0.0
  %4118 = vmatmul.mubr.f32.gmra.mrb[0].mxu0 %v4004
  %v4119 = vpop.f32.mrb[0].mxu0
  %v4120 = vadd.f32 0.0, %v4119
  %v4121 = vpop.f32.mrb[0].mxu0
  %4122 = vdwg.mxu0
  %v4123 = vadd.f32 %v3998, %v4120
  %4124 = vset.pattern.permute.xlu0 33
  %4125 = vperm.xlu0 %4124, %v16
  %v4126 = vpop.permute.xlu0 %4125
  %vm4127 = vcmp.eq.s32.totalorder %v4126, %v15
  %v4128 = vsel %vm4127, 1, 0
  %v4129 = vcvt.s32.f32 %v4128
  %4130 = vrot.lane.b32.xlu0 %v23, 62
  %v4131 = vpop.permute.xlu0 %4130
  %4132 = vrot.lane.b32.xlu0 %v24, 62
  %v4133 = vpop.permute.xlu0 %4132
  %4134 = vrot.lane.b32.xlu0 %v25, 62
  %v4135 = vpop.permute.xlu0 %4134
  %4136 = vrot.lane.b32.xlu0 %v26, 62
  %v4137 = vpop.permute.xlu0 %4136
  %4138 = vrot.lane.b32.xlu0 %v27, 62
  %v4139 = vpop.permute.xlu0 %4138
  %4140 = vrot.lane.b32.xlu0 %v28, 62
  %v4141 = vpop.permute.xlu0 %4140
  %4142 = vrot.lane.b32.xlu0 %v29, 62
  %v4143 = vpop.permute.xlu0 %4142
  %4144 = vrot.lane.b32.xlu0 %v30, 62
  %v4145 = vpop.permute.xlu0 %4144
  %4146 = vrot.lane.b32.xlu0 %v31, 62
  %v4147 = vpop.permute.xlu0 %4146
  %4148 = vrot.lane.b32.xlu0 %v32, 62
  %v4149 = vpop.permute.xlu0 %4148
  %4150 = vrot.lane.b32.xlu0 %v33, 62
  %v4151 = vpop.permute.xlu0 %4150
  %4152 = vrot.lane.b32.xlu0 %v34, 62
  %v4153 = vpop.permute.xlu0 %4152
  %4154 = vrot.lane.b32.xlu0 %v35, 62
  %v4155 = vpop.permute.xlu0 %4154
  %4156 = vrot.lane.b32.xlu0 %v36, 62
  %v4157 = vpop.permute.xlu0 %4156
  %4158 = vrot.lane.b32.xlu0 %v37, 62
  %v4159 = vpop.permute.xlu0 %4158
  %4160 = vrot.lane.b32.xlu0 %v38, 62
  %v4161 = vpop.permute.xlu0 %4160
  %4178 = vmatprep.subr.mxu0 0.0
  %4179 = vmatpush1.msra.mxu0 %v4131
  %4180 = vmatprep.subr.mxu0 0.0
  %4181 = vmatpush1.msra.mxu0 %v4133
  %4182 = vmatprep.subr.mxu0 0.0
  %4183 = vmatpush1.msra.mxu0 %v4135
  %4184 = vmatprep.subr.mxu0 0.0
  %4185 = vmatpush1.msra.mxu0 %v4137
  %4186 = vmatprep.subr.mxu0 0.0
  %4187 = vmatpush1.msra.mxu0 %v4139
  %4188 = vmatprep.subr.mxu0 0.0
  %4189 = vmatpush1.msra.mxu0 %v4141
  %4190 = vmatprep.subr.mxu0 0.0
  %4191 = vmatpush1.msra.mxu0 %v4143
  %4192 = vmatprep.subr.mxu0 0.0
  %4193 = vmatpush1.msra.mxu0 %v4145
  %4194 = vmatprep.subr.mxu0 0.0
  %4195 = vmatpush1.msra.mxu0 %v4147
  %4196 = vmatprep.subr.mxu0 0.0
  %4197 = vmatpush1.msra.mxu0 %v4149
  %4198 = vmatprep.subr.mxu0 0.0
  %4199 = vmatpush1.msra.mxu0 %v4151
  %4200 = vmatprep.subr.mxu0 0.0
  %4201 = vmatpush1.msra.mxu0 %v4153
  %4202 = vmatprep.subr.mxu0 0.0
  %4203 = vmatpush1.msra.mxu0 %v4155
  %4204 = vmatprep.subr.mxu0 0.0
  %4205 = vmatpush1.msra.mxu0 %v4157
  %4206 = vmatprep.subr.mxu0 0.0
  %4207 = vmatpush1.msra.mxu0 %v4159
  %4208 = vmatprep.subr.mxu0 0.0
  %4209 = vmatpush1.msra.mxu0 %v4161
  %4210 = vmatprep.subr.mxu0 0.0
  %4211 = vmatpush1.msra.mxu0 0.0
  %4212 = vmatprep.subr.mxu0 0.0
  %4213 = vmatpush1.msra.mxu0 0.0
  %4214 = vmatprep.subr.mxu0 0.0
  %4215 = vmatpush1.msra.mxu0 0.0
  %4216 = vmatprep.subr.mxu0 0.0
  %4217 = vmatpush1.msra.mxu0 0.0
  %4218 = vmatprep.subr.mxu0 0.0
  %4219 = vmatpush1.msra.mxu0 0.0
  %4220 = vmatprep.subr.mxu0 0.0
  %4221 = vmatpush1.msra.mxu0 0.0
  %4222 = vmatprep.subr.mxu0 0.0
  %4223 = vmatpush1.msra.mxu0 0.0
  %4224 = vmatprep.subr.mxu0 0.0
  %4225 = vmatpush1.msra.mxu0 0.0
  %4226 = vmatprep.subr.mxu0 0.0
  %4227 = vmatpush1.msra.mxu0 0.0
  %4228 = vmatprep.subr.mxu0 0.0
  %4229 = vmatpush1.msra.mxu0 0.0
  %4230 = vmatprep.subr.mxu0 0.0
  %4231 = vmatpush1.msra.mxu0 0.0
  %4232 = vmatprep.subr.mxu0 0.0
  %4233 = vmatpush1.msra.mxu0 0.0
  %4234 = vmatprep.subr.mxu0 0.0
  %4235 = vmatpush1.msra.mxu0 0.0
  %4236 = vmatprep.subr.mxu0 0.0
  %4237 = vmatpush1.msra.mxu0 0.0
  %4238 = vmatprep.subr.mxu0 0.0
  %4239 = vmatpush1.msra.mxu0 0.0
  %4240 = vmatprep.subr.mxu0 0.0
  %4241 = vmatpush1.msra.mxu0 0.0
  %4242 = vmatprep.mubr.f32.mxu0 0.0
  %4243 = vmatmul.mubr.f32.gmra.mrb[0].mxu0 %v4129
  %v4244 = vpop.f32.mrb[0].mxu0
  %v4245 = vadd.f32 0.0, %v4244
  %v4246 = vpop.f32.mrb[0].mxu0
  %4247 = vdwg.mxu0
  %v4248 = vadd.f32 %v4123, %v4245
  %4249 = vset.pattern.permute.xlu0 34
  %4250 = vperm.xlu0 %4249, %v16
  %v4251 = vpop.permute.xlu0 %4250
  %vm4252 = vcmp.eq.s32.totalorder %v4251, %v15
  %v4253 = vsel %vm4252, 1, 0
  %v4254 = vcvt.s32.f32 %v4253
  %4255 = vrot.lane.b32.xlu0 %v23, 60
  %v4256 = vpop.permute.xlu0 %4255
  %4257 = vrot.lane.b32.xlu0 %v24, 60
  %v4258 = vpop.permute.xlu0 %4257
  %4259 = vrot.lane.b32.xlu0 %v25, 60
  %v4260 = vpop.permute.xlu0 %4259
  %4261 = vrot.lane.b32.xlu0 %v26, 60
  %v4262 = vpop.permute.xlu0 %4261
  %4263 = vrot.lane.b32.xlu0 %v27, 60
  %v4264 = vpop.permute.xlu0 %4263
  %4265 = vrot.lane.b32.xlu0 %v28, 60
  %v4266 = vpop.permute.xlu0 %4265
  %4267 = vrot.lane.b32.xlu0 %v29, 60
  %v4268 = vpop.permute.xlu0 %4267
  %4269 = vrot.lane.b32.xlu0 %v30, 60
  %v4270 = vpop.permute.xlu0 %4269
  %4271 = vrot.lane.b32.xlu0 %v31, 60
  %v4272 = vpop.permute.xlu0 %4271
  %4273 = vrot.lane.b32.xlu0 %v32, 60
  %v4274 = vpop.permute.xlu0 %4273
  %4275 = vrot.lane.b32.xlu0 %v33, 60
  %v4276 = vpop.permute.xlu0 %4275
  %4277 = vrot.lane.b32.xlu0 %v34, 60
  %v4278 = vpop.permute.xlu0 %4277
  %4279 = vrot.lane.b32.xlu0 %v35, 60
  %v4280 = vpop.permute.xlu0 %4279
  %4281 = vrot.lane.b32.xlu0 %v36, 60
  %v4282 = vpop.permute.xlu0 %4281
  %4283 = vrot.lane.b32.xlu0 %v37, 60
  %v4284 = vpop.permute.xlu0 %4283
  %4285 = vrot.lane.b32.xlu0 %v38, 60
  %v4286 = vpop.permute.xlu0 %4285
  %4303 = vmatprep.subr.mxu0 0.0
  %4304 = vmatpush1.msra.mxu0 %v4256
  %4305 = vmatprep.subr.mxu0 0.0
  %4306 = vmatpush1.msra.mxu0 %v4258
  %4307 = vmatprep.subr.mxu0 0.0
  %4308 = vmatpush1.msra.mxu0 %v4260
  %4309 = vmatprep.subr.mxu0 0.0
  %4310 = vmatpush1.msra.mxu0 %v4262
  %4311 = vmatprep.subr.mxu0 0.0
  %4312 = vmatpush1.msra.mxu0 %v4264
  %4313 = vmatprep.subr.mxu0 0.0
  %4314 = vmatpush1.msra.mxu0 %v4266
  %4315 = vmatprep.subr.mxu0 0.0
  %4316 = vmatpush1.msra.mxu0 %v4268
  %4317 = vmatprep.subr.mxu0 0.0
  %4318 = vmatpush1.msra.mxu0 %v4270
  %4319 = vmatprep.subr.mxu0 0.0
  %4320 = vmatpush1.msra.mxu0 %v4272
  %4321 = vmatprep.subr.mxu0 0.0
  %4322 = vmatpush1.msra.mxu0 %v4274
  %4323 = vmatprep.subr.mxu0 0.0
  %4324 = vmatpush1.msra.mxu0 %v4276
  %4325 = vmatprep.subr.mxu0 0.0
  %4326 = vmatpush1.msra.mxu0 %v4278
  %4327 = vmatprep.subr.mxu0 0.0
  %4328 = vmatpush1.msra.mxu0 %v4280
  %4329 = vmatprep.subr.mxu0 0.0
  %4330 = vmatpush1.msra.mxu0 %v4282
  %4331 = vmatprep.subr.mxu0 0.0
  %4332 = vmatpush1.msra.mxu0 %v4284
  %4333 = vmatprep.subr.mxu0 0.0
  %4334 = vmatpush1.msra.mxu0 %v4286
  %4335 = vmatprep.subr.mxu0 0.0
  %4336 = vmatpush1.msra.mxu0 0.0
  %4337 = vmatprep.subr.mxu0 0.0
  %4338 = vmatpush1.msra.mxu0 0.0
  %4339 = vmatprep.subr.mxu0 0.0
  %4340 = vmatpush1.msra.mxu0 0.0
  %4341 = vmatprep.subr.mxu0 0.0
  %4342 = vmatpush1.msra.mxu0 0.0
  %4343 = vmatprep.subr.mxu0 0.0
  %4344 = vmatpush1.msra.mxu0 0.0
  %4345 = vmatprep.subr.mxu0 0.0
  %4346 = vmatpush1.msra.mxu0 0.0
  %4347 = vmatprep.subr.mxu0 0.0
  %4348 = vmatpush1.msra.mxu0 0.0
  %4349 = vmatprep.subr.mxu0 0.0
  %4350 = vmatpush1.msra.mxu0 0.0
  %4351 = vmatprep.subr.mxu0 0.0
  %4352 = vmatpush1.msra.mxu0 0.0
  %4353 = vmatprep.subr.mxu0 0.0
  %4354 = vmatpush1.msra.mxu0 0.0
  %4355 = vmatprep.subr.mxu0 0.0
  %4356 = vmatpush1.msra.mxu0 0.0
  %4357 = vmatprep.subr.mxu0 0.0
  %4358 = vmatpush1.msra.mxu0 0.0
  %4359 = vmatprep.subr.mxu0 0.0
  %4360 = vmatpush1.msra.mxu0 0.0
  %4361 = vmatprep.subr.mxu0 0.0
  %4362 = vmatpush1.msra.mxu0 0.0
  %4363 = vmatprep.subr.mxu0 0.0
  %4364 = vmatpush1.msra.mxu0 0.0
  %4365 = vmatprep.subr.mxu0 0.0
  %4366 = vmatpush1.msra.mxu0 0.0
  %4367 = vmatprep.mubr.f32.mxu0 0.0
  %4368 = vmatmul.mubr.f32.gmra.mrb[0].mxu0 %v4254
  %v4369 = vpop.f32.mrb[0].mxu0
  %v4370 = vadd.f32 0.0, %v4369
  %v4371 = vpop.f32.mrb[0].mxu0
  %4372 = vdwg.mxu0
  %v4373 = vadd.f32 %v4248, %v4370
  %4374 = vset.pattern.permute.xlu0 35
  %4375 = vperm.xlu0 %4374, %v16
  %v4376 = vpop.permute.xlu0 %4375
  %vm4377 = vcmp.eq.s32.totalorder %v4376, %v15
  %v4378 = vsel %vm4377, 1, 0
  %v4379 = vcvt.s32.f32 %v4378
  %4380 = vrot.lane.b32.xlu0 %v23, 58
  %v4381 = vpop.permute.xlu0 %4380
  %4382 = vrot.lane.b32.xlu0 %v24, 58
  %v4383 = vpop.permute.xlu0 %4382
  %4384 = vrot.lane.b32.xlu0 %v25, 58
  %v4385 = vpop.permute.xlu0 %4384
  %4386 = vrot.lane.b32.xlu0 %v26, 58
  %v4387 = vpop.permute.xlu0 %4386
  %4388 = vrot.lane.b32.xlu0 %v27, 58
  %v4389 = vpop.permute.xlu0 %4388
  %4390 = vrot.lane.b32.xlu0 %v28, 58
  %v4391 = vpop.permute.xlu0 %4390
  %4392 = vrot.lane.b32.xlu0 %v29, 58
  %v4393 = vpop.permute.xlu0 %4392
  %4394 = vrot.lane.b32.xlu0 %v30, 58
  %v4395 = vpop.permute.xlu0 %4394
  %4396 = vrot.lane.b32.xlu0 %v31, 58
  %v4397 = vpop.permute.xlu0 %4396
  %4398 = vrot.lane.b32.xlu0 %v32, 58
  %v4399 = vpop.permute.xlu0 %4398
  %4400 = vrot.lane.b32.xlu0 %v33, 58
  %v4401 = vpop.permute.xlu0 %4400
  %4402 = vrot.lane.b32.xlu0 %v34, 58
  %v4403 = vpop.permute.xlu0 %4402
  %4404 = vrot.lane.b32.xlu0 %v35, 58
  %v4405 = vpop.permute.xlu0 %4404
  %4406 = vrot.lane.b32.xlu0 %v36, 58
  %v4407 = vpop.permute.xlu0 %4406
  %4408 = vrot.lane.b32.xlu0 %v37, 58
  %v4409 = vpop.permute.xlu0 %4408
  %4410 = vrot.lane.b32.xlu0 %v38, 58
  %v4411 = vpop.permute.xlu0 %4410
  %4428 = vmatprep.subr.mxu0 0.0
  %4429 = vmatpush1.msra.mxu0 %v4381
  %4430 = vmatprep.subr.mxu0 0.0
  %4431 = vmatpush1.msra.mxu0 %v4383
  %4432 = vmatprep.subr.mxu0 0.0
  %4433 = vmatpush1.msra.mxu0 %v4385
  %4434 = vmatprep.subr.mxu0 0.0
  %4435 = vmatpush1.msra.mxu0 %v4387
  %4436 = vmatprep.subr.mxu0 0.0
  %4437 = vmatpush1.msra.mxu0 %v4389
  %4438 = vmatprep.subr.mxu0 0.0
  %4439 = vmatpush1.msra.mxu0 %v4391
  %4440 = vmatprep.subr.mxu0 0.0
  %4441 = vmatpush1.msra.mxu0 %v4393
  %4442 = vmatprep.subr.mxu0 0.0
  %4443 = vmatpush1.msra.mxu0 %v4395
  %4444 = vmatprep.subr.mxu0 0.0
  %4445 = vmatpush1.msra.mxu0 %v4397
  %4446 = vmatprep.subr.mxu0 0.0
  %4447 = vmatpush1.msra.mxu0 %v4399
  %4448 = vmatprep.subr.mxu0 0.0
  %4449 = vmatpush1.msra.mxu0 %v4401
  %4450 = vmatprep.subr.mxu0 0.0
  %4451 = vmatpush1.msra.mxu0 %v4403
  %4452 = vmatprep.subr.mxu0 0.0
  %4453 = vmatpush1.msra.mxu0 %v4405
  %4454 = vmatprep.subr.mxu0 0.0
  %4455 = vmatpush1.msra.mxu0 %v4407
  %4456 = vmatprep.subr.mxu0 0.0
  %4457 = vmatpush1.msra.mxu0 %v4409
  %4458 = vmatprep.subr.mxu0 0.0
  %4459 = vmatpush1.msra.mxu0 %v4411
  %4460 = vmatprep.subr.mxu0 0.0
  %4461 = vmatpush1.msra.mxu0 0.0
  %4462 = vmatprep.subr.mxu0 0.0
  %4463 = vmatpush1.msra.mxu0 0.0
  %4464 = vmatprep.subr.mxu0 0.0
  %4465 = vmatpush1.msra.mxu0 0.0
  %4466 = vmatprep.subr.mxu0 0.0
  %4467 = vmatpush1.msra.mxu0 0.0
  %4468 = vmatprep.subr.mxu0 0.0
  %4469 = vmatpush1.msra.mxu0 0.0
  %4470 = vmatprep.subr.mxu0 0.0
  %4471 = vmatpush1.msra.mxu0 0.0
  %4472 = vmatprep.subr.mxu0 0.0
  %4473 = vmatpush1.msra.mxu0 0.0
  %4474 = vmatprep.subr.mxu0 0.0
  %4475 = vmatpush1.msra.mxu0 0.0
  %4476 = vmatprep.subr.mxu0 0.0
  %4477 = vmatpush1.msra.mxu0 0.0
  %4478 = vmatprep.subr.mxu0 0.0
  %4479 = vmatpush1.msra.mxu0 0.0
  %4480 = vmatprep.subr.mxu0 0.0
  %4481 = vmatpush1.msra.mxu0 0.0
  %4482 = vmatprep.subr.mxu0 0.0
  %4483 = vmatpush1.msra.mxu0 0.0
  %4484 = vmatprep.subr.mxu0 0.0
  %4485 = vmatpush1.msra.mxu0 0.0
  %4486 = vmatprep.subr.mxu0 0.0
  %4487 = vmatpush1.msra.mxu0 0.0
  %4488 = vmatprep.subr.mxu0 0.0
  %4489 = vmatpush1.msra.mxu0 0.0
  %4490 = vmatprep.subr.mxu0 0.0
  %4491 = vmatpush1.msra.mxu0 0.0
  %4492 = vmatprep.mubr.f32.mxu0 0.0
  %4493 = vmatmul.mubr.f32.gmra.mrb[0].mxu0 %v4379
  %v4494 = vpop.f32.mrb[0].mxu0
  %v4495 = vadd.f32 0.0, %v4494
  %v4496 = vpop.f32.mrb[0].mxu0
  %4497 = vdwg.mxu0
  %v4498 = vadd.f32 %v4373, %v4495
  %4499 = vset.pattern.permute.xlu0 36
  %4500 = vperm.xlu0 %4499, %v16
  %v4501 = vpop.permute.xlu0 %4500
  %vm4502 = vcmp.eq.s32.totalorder %v4501, %v15
  %v4503 = vsel %vm4502, 1, 0
  %v4504 = vcvt.s32.f32 %v4503
  %4505 = vrot.lane.b32.xlu0 %v23, 56
  %v4506 = vpop.permute.xlu0 %4505
  %4507 = vrot.lane.b32.xlu0 %v24, 56
  %v4508 = vpop.permute.xlu0 %4507
  %4509 = vrot.lane.b32.xlu0 %v25, 56
  %v4510 = vpop.permute.xlu0 %4509
  %4511 = vrot.lane.b32.xlu0 %v26, 56
  %v4512 = vpop.permute.xlu0 %4511
  %4513 = vrot.lane.b32.xlu0 %v27, 56
  %v4514 = vpop.permute.xlu0 %4513
  %4515 = vrot.lane.b32.xlu0 %v28, 56
  %v4516 = vpop.permute.xlu0 %4515
  %4517 = vrot.lane.b32.xlu0 %v29, 56
  %v4518 = vpop.permute.xlu0 %4517
  %4519 = vrot.lane.b32.xlu0 %v30, 56
  %v4520 = vpop.permute.xlu0 %4519
  %4521 = vrot.lane.b32.xlu0 %v31, 56
  %v4522 = vpop.permute.xlu0 %4521
  %4523 = vrot.lane.b32.xlu0 %v32, 56
  %v4524 = vpop.permute.xlu0 %4523
  %4525 = vrot.lane.b32.xlu0 %v33, 56
  %v4526 = vpop.permute.xlu0 %4525
  %4527 = vrot.lane.b32.xlu0 %v34, 56
  %v4528 = vpop.permute.xlu0 %4527
  %4529 = vrot.lane.b32.xlu0 %v35, 56
  %v4530 = vpop.permute.xlu0 %4529
  %4531 = vrot.lane.b32.xlu0 %v36, 56
  %v4532 = vpop.permute.xlu0 %4531
  %4533 = vrot.lane.b32.xlu0 %v37, 56
  %v4534 = vpop.permute.xlu0 %4533
  %4535 = vrot.lane.b32.xlu0 %v38, 56
  %v4536 = vpop.permute.xlu0 %4535
  %4553 = vmatprep.subr.mxu0 0.0
  %4554 = vmatpush1.msra.mxu0 %v4506
  %4555 = vmatprep.subr.mxu0 0.0
  %4556 = vmatpush1.msra.mxu0 %v4508
  %4557 = vmatprep.subr.mxu0 0.0
  %4558 = vmatpush1.msra.mxu0 %v4510
  %4559 = vmatprep.subr.mxu0 0.0
  %4560 = vmatpush1.msra.mxu0 %v4512
  %4561 = vmatprep.subr.mxu0 0.0
  %4562 = vmatpush1.msra.mxu0 %v4514
  %4563 = vmatprep.subr.mxu0 0.0
  %4564 = vmatpush1.msra.mxu0 %v4516
  %4565 = vmatprep.subr.mxu0 0.0
  %4566 = vmatpush1.msra.mxu0 %v4518
  %4567 = vmatprep.subr.mxu0 0.0
  %4568 = vmatpush1.msra.mxu0 %v4520
  %4569 = vmatprep.subr.mxu0 0.0
  %4570 = vmatpush1.msra.mxu0 %v4522
  %4571 = vmatprep.subr.mxu0 0.0
  %4572 = vmatpush1.msra.mxu0 %v4524
  %4573 = vmatprep.subr.mxu0 0.0
  %4574 = vmatpush1.msra.mxu0 %v4526
  %4575 = vmatprep.subr.mxu0 0.0
  %4576 = vmatpush1.msra.mxu0 %v4528
  %4577 = vmatprep.subr.mxu0 0.0
  %4578 = vmatpush1.msra.mxu0 %v4530
  %4579 = vmatprep.subr.mxu0 0.0
  %4580 = vmatpush1.msra.mxu0 %v4532
  %4581 = vmatprep.subr.mxu0 0.0
  %4582 = vmatpush1.msra.mxu0 %v4534
  %4583 = vmatprep.subr.mxu0 0.0
  %4584 = vmatpush1.msra.mxu0 %v4536
  %4585 = vmatprep.subr.mxu0 0.0
  %4586 = vmatpush1.msra.mxu0 0.0
  %4587 = vmatprep.subr.mxu0 0.0
  %4588 = vmatpush1.msra.mxu0 0.0
  %4589 = vmatprep.subr.mxu0 0.0
  %4590 = vmatpush1.msra.mxu0 0.0
  %4591 = vmatprep.subr.mxu0 0.0
  %4592 = vmatpush1.msra.mxu0 0.0
  %4593 = vmatprep.subr.mxu0 0.0
  %4594 = vmatpush1.msra.mxu0 0.0
  %4595 = vmatprep.subr.mxu0 0.0
  %4596 = vmatpush1.msra.mxu0 0.0
  %4597 = vmatprep.subr.mxu0 0.0
  %4598 = vmatpush1.msra.mxu0 0.0
  %4599 = vmatprep.subr.mxu0 0.0
  %4600 = vmatpush1.msra.mxu0 0.0
  %4601 = vmatprep.subr.mxu0 0.0
  %4602 = vmatpush1.msra.mxu0 0.0
  %4603 = vmatprep.subr.mxu0 0.0
  %4604 = vmatpush1.msra.mxu0 0.0
  %4605 = vmatprep.subr.mxu0 0.0
  %4606 = vmatpush1.msra.mxu0 0.0
  %4607 = vmatprep.subr.mxu0 0.0
  %4608 = vmatpush1.msra.mxu0 0.0
  %4609 = vmatprep.subr.mxu0 0.0
  %4610 = vmatpush1.msra.mxu0 0.0
  %4611 = vmatprep.subr.mxu0 0.0
  %4612 = vmatpush1.msra.mxu0 0.0
  %4613 = vmatprep.subr.mxu0 0.0
  %4614 = vmatpush1.msra.mxu0 0.0
  %4615 = vmatprep.subr.mxu0 0.0
  %4616 = vmatpush1.msra.mxu0 0.0
  %4617 = vmatprep.mubr.f32.mxu0 0.0
  %4618 = vmatmul.mubr.f32.gmra.mrb[0].mxu0 %v4504
  %v4619 = vpop.f32.mrb[0].mxu0
  %v4620 = vadd.f32 0.0, %v4619
  %v4621 = vpop.f32.mrb[0].mxu0
  %4622 = vdwg.mxu0
  %v4623 = vadd.f32 %v4498, %v4620
  %4624 = vset.pattern.permute.xlu0 37
  %4625 = vperm.xlu0 %4624, %v16
  %v4626 = vpop.permute.xlu0 %4625
  %vm4627 = vcmp.eq.s32.totalorder %v4626, %v15
  %v4628 = vsel %vm4627, 1, 0
  %v4629 = vcvt.s32.f32 %v4628
  %4630 = vrot.lane.b32.xlu0 %v23, 54
  %v4631 = vpop.permute.xlu0 %4630
  %4632 = vrot.lane.b32.xlu0 %v24, 54
  %v4633 = vpop.permute.xlu0 %4632
  %4634 = vrot.lane.b32.xlu0 %v25, 54
  %v4635 = vpop.permute.xlu0 %4634
  %4636 = vrot.lane.b32.xlu0 %v26, 54
  %v4637 = vpop.permute.xlu0 %4636
  %4638 = vrot.lane.b32.xlu0 %v27, 54
  %v4639 = vpop.permute.xlu0 %4638
  %4640 = vrot.lane.b32.xlu0 %v28, 54
  %v4641 = vpop.permute.xlu0 %4640
  %4642 = vrot.lane.b32.xlu0 %v29, 54
  %v4643 = vpop.permute.xlu0 %4642
  %4644 = vrot.lane.b32.xlu0 %v30, 54
  %v4645 = vpop.permute.xlu0 %4644
  %4646 = vrot.lane.b32.xlu0 %v31, 54
  %v4647 = vpop.permute.xlu0 %4646
  %4648 = vrot.lane.b32.xlu0 %v32, 54
  %v4649 = vpop.permute.xlu0 %4648
  %4650 = vrot.lane.b32.xlu0 %v33, 54
  %v4651 = vpop.permute.xlu0 %4650
  %4652 = vrot.lane.b32.xlu0 %v34, 54
  %v4653 = vpop.permute.xlu0 %4652
  %4654 = vrot.lane.b32.xlu0 %v35, 54
  %v4655 = vpop.permute.xlu0 %4654
  %4656 = vrot.lane.b32.xlu0 %v36, 54
  %v4657 = vpop.permute.xlu0 %4656
  %4658 = vrot.lane.b32.xlu0 %v37, 54
  %v4659 = vpop.permute.xlu0 %4658
  %4660 = vrot.lane.b32.xlu0 %v38, 54
  %v4661 = vpop.permute.xlu0 %4660
  %4678 = vmatprep.subr.mxu0 0.0
  %4679 = vmatpush1.msra.mxu0 %v4631
  %4680 = vmatprep.subr.mxu0 0.0
  %4681 = vmatpush1.msra.mxu0 %v4633
  %4682 = vmatprep.subr.mxu0 0.0
  %4683 = vmatpush1.msra.mxu0 %v4635
  %4684 = vmatprep.subr.mxu0 0.0
  %4685 = vmatpush1.msra.mxu0 %v4637
  %4686 = vmatprep.subr.mxu0 0.0
  %4687 = vmatpush1.msra.mxu0 %v4639
  %4688 = vmatprep.subr.mxu0 0.0
  %4689 = vmatpush1.msra.mxu0 %v4641
  %4690 = vmatprep.subr.mxu0 0.0
  %4691 = vmatpush1.msra.mxu0 %v4643
  %4692 = vmatprep.subr.mxu0 0.0
  %4693 = vmatpush1.msra.mxu0 %v4645
  %4694 = vmatprep.subr.mxu0 0.0
  %4695 = vmatpush1.msra.mxu0 %v4647
  %4696 = vmatprep.subr.mxu0 0.0
  %4697 = vmatpush1.msra.mxu0 %v4649
  %4698 = vmatprep.subr.mxu0 0.0
  %4699 = vmatpush1.msra.mxu0 %v4651
  %4700 = vmatprep.subr.mxu0 0.0
  %4701 = vmatpush1.msra.mxu0 %v4653
  %4702 = vmatprep.subr.mxu0 0.0
  %4703 = vmatpush1.msra.mxu0 %v4655
  %4704 = vmatprep.subr.mxu0 0.0
  %4705 = vmatpush1.msra.mxu0 %v4657
  %4706 = vmatprep.subr.mxu0 0.0
  %4707 = vmatpush1.msra.mxu0 %v4659
  %4708 = vmatprep.subr.mxu0 0.0
  %4709 = vmatpush1.msra.mxu0 %v4661
  %4710 = vmatprep.subr.mxu0 0.0
  %4711 = vmatpush1.msra.mxu0 0.0
  %4712 = vmatprep.subr.mxu0 0.0
  %4713 = vmatpush1.msra.mxu0 0.0
  %4714 = vmatprep.subr.mxu0 0.0
  %4715 = vmatpush1.msra.mxu0 0.0
  %4716 = vmatprep.subr.mxu0 0.0
  %4717 = vmatpush1.msra.mxu0 0.0
  %4718 = vmatprep.subr.mxu0 0.0
  %4719 = vmatpush1.msra.mxu0 0.0
  %4720 = vmatprep.subr.mxu0 0.0
  %4721 = vmatpush1.msra.mxu0 0.0
  %4722 = vmatprep.subr.mxu0 0.0
  %4723 = vmatpush1.msra.mxu0 0.0
  %4724 = vmatprep.subr.mxu0 0.0
  %4725 = vmatpush1.msra.mxu0 0.0
  %4726 = vmatprep.subr.mxu0 0.0
  %4727 = vmatpush1.msra.mxu0 0.0
  %4728 = vmatprep.subr.mxu0 0.0
  %4729 = vmatpush1.msra.mxu0 0.0
  %4730 = vmatprep.subr.mxu0 0.0
  %4731 = vmatpush1.msra.mxu0 0.0
  %4732 = vmatprep.subr.mxu0 0.0
  %4733 = vmatpush1.msra.mxu0 0.0
  %4734 = vmatprep.subr.mxu0 0.0
  %4735 = vmatpush1.msra.mxu0 0.0
  %4736 = vmatprep.subr.mxu0 0.0
  %4737 = vmatpush1.msra.mxu0 0.0
  %4738 = vmatprep.subr.mxu0 0.0
  %4739 = vmatpush1.msra.mxu0 0.0
  %4740 = vmatprep.subr.mxu0 0.0
  %4741 = vmatpush1.msra.mxu0 0.0
  %4742 = vmatprep.mubr.f32.mxu0 0.0
  %4743 = vmatmul.mubr.f32.gmra.mrb[0].mxu0 %v4629
  %v4744 = vpop.f32.mrb[0].mxu0
  %v4745 = vadd.f32 0.0, %v4744
  %v4746 = vpop.f32.mrb[0].mxu0
  %4747 = vdwg.mxu0
  %v4748 = vadd.f32 %v4623, %v4745
  %4749 = vset.pattern.permute.xlu0 38
  %4750 = vperm.xlu0 %4749, %v16
  %v4751 = vpop.permute.xlu0 %4750
  %vm4752 = vcmp.eq.s32.totalorder %v4751, %v15
  %v4753 = vsel %vm4752, 1, 0
  %v4754 = vcvt.s32.f32 %v4753
  %4755 = vrot.lane.b32.xlu0 %v23, 52
  %v4756 = vpop.permute.xlu0 %4755
  %4757 = vrot.lane.b32.xlu0 %v24, 52
  %v4758 = vpop.permute.xlu0 %4757
  %4759 = vrot.lane.b32.xlu0 %v25, 52
  %v4760 = vpop.permute.xlu0 %4759
  %4761 = vrot.lane.b32.xlu0 %v26, 52
  %v4762 = vpop.permute.xlu0 %4761
  %4763 = vrot.lane.b32.xlu0 %v27, 52
  %v4764 = vpop.permute.xlu0 %4763
  %4765 = vrot.lane.b32.xlu0 %v28, 52
  %v4766 = vpop.permute.xlu0 %4765
  %4767 = vrot.lane.b32.xlu0 %v29, 52
  %v4768 = vpop.permute.xlu0 %4767
  %4769 = vrot.lane.b32.xlu0 %v30, 52
  %v4770 = vpop.permute.xlu0 %4769
  %4771 = vrot.lane.b32.xlu0 %v31, 52
  %v4772 = vpop.permute.xlu0 %4771
  %4773 = vrot.lane.b32.xlu0 %v32, 52
  %v4774 = vpop.permute.xlu0 %4773
  %4775 = vrot.lane.b32.xlu0 %v33, 52
  %v4776 = vpop.permute.xlu0 %4775
  %4777 = vrot.lane.b32.xlu0 %v34, 52
  %v4778 = vpop.permute.xlu0 %4777
  %4779 = vrot.lane.b32.xlu0 %v35, 52
  %v4780 = vpop.permute.xlu0 %4779
  %4781 = vrot.lane.b32.xlu0 %v36, 52
  %v4782 = vpop.permute.xlu0 %4781
  %4783 = vrot.lane.b32.xlu0 %v37, 52
  %v4784 = vpop.permute.xlu0 %4783
  %4785 = vrot.lane.b32.xlu0 %v38, 52
  %v4786 = vpop.permute.xlu0 %4785
  %4803 = vmatprep.subr.mxu0 0.0
  %4804 = vmatpush1.msra.mxu0 %v4756
  %4805 = vmatprep.subr.mxu0 0.0
  %4806 = vmatpush1.msra.mxu0 %v4758
  %4807 = vmatprep.subr.mxu0 0.0
  %4808 = vmatpush1.msra.mxu0 %v4760
  %4809 = vmatprep.subr.mxu0 0.0
  %4810 = vmatpush1.msra.mxu0 %v4762
  %4811 = vmatprep.subr.mxu0 0.0
  %4812 = vmatpush1.msra.mxu0 %v4764
  %4813 = vmatprep.subr.mxu0 0.0
  %4814 = vmatpush1.msra.mxu0 %v4766
  %4815 = vmatprep.subr.mxu0 0.0
  %4816 = vmatpush1.msra.mxu0 %v4768
  %4817 = vmatprep.subr.mxu0 0.0
  %4818 = vmatpush1.msra.mxu0 %v4770
  %4819 = vmatprep.subr.mxu0 0.0
  %4820 = vmatpush1.msra.mxu0 %v4772
  %4821 = vmatprep.subr.mxu0 0.0
  %4822 = vmatpush1.msra.mxu0 %v4774
  %4823 = vmatprep.subr.mxu0 0.0
  %4824 = vmatpush1.msra.mxu0 %v4776
  %4825 = vmatprep.subr.mxu0 0.0
  %4826 = vmatpush1.msra.mxu0 %v4778
  %4827 = vmatprep.subr.mxu0 0.0
  %4828 = vmatpush1.msra.mxu0 %v4780
  %4829 = vmatprep.subr.mxu0 0.0
  %4830 = vmatpush1.msra.mxu0 %v4782
  %4831 = vmatprep.subr.mxu0 0.0
  %4832 = vmatpush1.msra.mxu0 %v4784
  %4833 = vmatprep.subr.mxu0 0.0
  %4834 = vmatpush1.msra.mxu0 %v4786
  %4835 = vmatprep.subr.mxu0 0.0
  %4836 = vmatpush1.msra.mxu0 0.0
  %4837 = vmatprep.subr.mxu0 0.0
  %4838 = vmatpush1.msra.mxu0 0.0
  %4839 = vmatprep.subr.mxu0 0.0
  %4840 = vmatpush1.msra.mxu0 0.0
  %4841 = vmatprep.subr.mxu0 0.0
  %4842 = vmatpush1.msra.mxu0 0.0
  %4843 = vmatprep.subr.mxu0 0.0
  %4844 = vmatpush1.msra.mxu0 0.0
  %4845 = vmatprep.subr.mxu0 0.0
  %4846 = vmatpush1.msra.mxu0 0.0
  %4847 = vmatprep.subr.mxu0 0.0
  %4848 = vmatpush1.msra.mxu0 0.0
  %4849 = vmatprep.subr.mxu0 0.0
  %4850 = vmatpush1.msra.mxu0 0.0
  %4851 = vmatprep.subr.mxu0 0.0
  %4852 = vmatpush1.msra.mxu0 0.0
  %4853 = vmatprep.subr.mxu0 0.0
  %4854 = vmatpush1.msra.mxu0 0.0
  %4855 = vmatprep.subr.mxu0 0.0
  %4856 = vmatpush1.msra.mxu0 0.0
  %4857 = vmatprep.subr.mxu0 0.0
  %4858 = vmatpush1.msra.mxu0 0.0
  %4859 = vmatprep.subr.mxu0 0.0
  %4860 = vmatpush1.msra.mxu0 0.0
  %4861 = vmatprep.subr.mxu0 0.0
  %4862 = vmatpush1.msra.mxu0 0.0
  %4863 = vmatprep.subr.mxu0 0.0
  %4864 = vmatpush1.msra.mxu0 0.0
  %4865 = vmatprep.subr.mxu0 0.0
  %4866 = vmatpush1.msra.mxu0 0.0
  %4867 = vmatprep.mubr.f32.mxu0 0.0
  %4868 = vmatmul.mubr.f32.gmra.mrb[0].mxu0 %v4754
  %v4869 = vpop.f32.mrb[0].mxu0
  %v4870 = vadd.f32 0.0, %v4869
  %v4871 = vpop.f32.mrb[0].mxu0
  %4872 = vdwg.mxu0
  %v4873 = vadd.f32 %v4748, %v4870
  %4874 = vset.pattern.permute.xlu0 39
  %4875 = vperm.xlu0 %4874, %v16
  %v4876 = vpop.permute.xlu0 %4875
  %vm4877 = vcmp.eq.s32.totalorder %v4876, %v15
  %v4878 = vsel %vm4877, 1, 0
  %v4879 = vcvt.s32.f32 %v4878
  %4880 = vrot.lane.b32.xlu0 %v23, 50
  %v4881 = vpop.permute.xlu0 %4880
  %4882 = vrot.lane.b32.xlu0 %v24, 50
  %v4883 = vpop.permute.xlu0 %4882
  %4884 = vrot.lane.b32.xlu0 %v25, 50
  %v4885 = vpop.permute.xlu0 %4884
  %4886 = vrot.lane.b32.xlu0 %v26, 50
  %v4887 = vpop.permute.xlu0 %4886
  %4888 = vrot.lane.b32.xlu0 %v27, 50
  %v4889 = vpop.permute.xlu0 %4888
  %4890 = vrot.lane.b32.xlu0 %v28, 50
  %v4891 = vpop.permute.xlu0 %4890
  %4892 = vrot.lane.b32.xlu0 %v29, 50
  %v4893 = vpop.permute.xlu0 %4892
  %4894 = vrot.lane.b32.xlu0 %v30, 50
  %v4895 = vpop.permute.xlu0 %4894
  %4896 = vrot.lane.b32.xlu0 %v31, 50
  %v4897 = vpop.permute.xlu0 %4896
  %4898 = vrot.lane.b32.xlu0 %v32, 50
  %v4899 = vpop.permute.xlu0 %4898
  %4900 = vrot.lane.b32.xlu0 %v33, 50
  %v4901 = vpop.permute.xlu0 %4900
  %4902 = vrot.lane.b32.xlu0 %v34, 50
  %v4903 = vpop.permute.xlu0 %4902
  %4904 = vrot.lane.b32.xlu0 %v35, 50
  %v4905 = vpop.permute.xlu0 %4904
  %4906 = vrot.lane.b32.xlu0 %v36, 50
  %v4907 = vpop.permute.xlu0 %4906
  %4908 = vrot.lane.b32.xlu0 %v37, 50
  %v4909 = vpop.permute.xlu0 %4908
  %4910 = vrot.lane.b32.xlu0 %v38, 50
  %v4911 = vpop.permute.xlu0 %4910
  %4928 = vmatprep.subr.mxu0 0.0
  %4929 = vmatpush1.msra.mxu0 %v4881
  %4930 = vmatprep.subr.mxu0 0.0
  %4931 = vmatpush1.msra.mxu0 %v4883
  %4932 = vmatprep.subr.mxu0 0.0
  %4933 = vmatpush1.msra.mxu0 %v4885
  %4934 = vmatprep.subr.mxu0 0.0
  %4935 = vmatpush1.msra.mxu0 %v4887
  %4936 = vmatprep.subr.mxu0 0.0
  %4937 = vmatpush1.msra.mxu0 %v4889
  %4938 = vmatprep.subr.mxu0 0.0
  %4939 = vmatpush1.msra.mxu0 %v4891
  %4940 = vmatprep.subr.mxu0 0.0
  %4941 = vmatpush1.msra.mxu0 %v4893
  %4942 = vmatprep.subr.mxu0 0.0
  %4943 = vmatpush1.msra.mxu0 %v4895
  %4944 = vmatprep.subr.mxu0 0.0
  %4945 = vmatpush1.msra.mxu0 %v4897
  %4946 = vmatprep.subr.mxu0 0.0
  %4947 = vmatpush1.msra.mxu0 %v4899
  %4948 = vmatprep.subr.mxu0 0.0
  %4949 = vmatpush1.msra.mxu0 %v4901
  %4950 = vmatprep.subr.mxu0 0.0
  %4951 = vmatpush1.msra.mxu0 %v4903
  %4952 = vmatprep.subr.mxu0 0.0
  %4953 = vmatpush1.msra.mxu0 %v4905
  %4954 = vmatprep.subr.mxu0 0.0
  %4955 = vmatpush1.msra.mxu0 %v4907
  %4956 = vmatprep.subr.mxu0 0.0
  %4957 = vmatpush1.msra.mxu0 %v4909
  %4958 = vmatprep.subr.mxu0 0.0
  %4959 = vmatpush1.msra.mxu0 %v4911
  %4960 = vmatprep.subr.mxu0 0.0
  %4961 = vmatpush1.msra.mxu0 0.0
  %4962 = vmatprep.subr.mxu0 0.0
  %4963 = vmatpush1.msra.mxu0 0.0
  %4964 = vmatprep.subr.mxu0 0.0
  %4965 = vmatpush1.msra.mxu0 0.0
  %4966 = vmatprep.subr.mxu0 0.0
  %4967 = vmatpush1.msra.mxu0 0.0
  %4968 = vmatprep.subr.mxu0 0.0
  %4969 = vmatpush1.msra.mxu0 0.0
  %4970 = vmatprep.subr.mxu0 0.0
  %4971 = vmatpush1.msra.mxu0 0.0
  %4972 = vmatprep.subr.mxu0 0.0
  %4973 = vmatpush1.msra.mxu0 0.0
  %4974 = vmatprep.subr.mxu0 0.0
  %4975 = vmatpush1.msra.mxu0 0.0
  %4976 = vmatprep.subr.mxu0 0.0
  %4977 = vmatpush1.msra.mxu0 0.0
  %4978 = vmatprep.subr.mxu0 0.0
  %4979 = vmatpush1.msra.mxu0 0.0
  %4980 = vmatprep.subr.mxu0 0.0
  %4981 = vmatpush1.msra.mxu0 0.0
  %4982 = vmatprep.subr.mxu0 0.0
  %4983 = vmatpush1.msra.mxu0 0.0
  %4984 = vmatprep.subr.mxu0 0.0
  %4985 = vmatpush1.msra.mxu0 0.0
  %4986 = vmatprep.subr.mxu0 0.0
  %4987 = vmatpush1.msra.mxu0 0.0
  %4988 = vmatprep.subr.mxu0 0.0
  %4989 = vmatpush1.msra.mxu0 0.0
  %4990 = vmatprep.subr.mxu0 0.0
  %4991 = vmatpush1.msra.mxu0 0.0
  %4992 = vmatprep.mubr.f32.mxu0 0.0
  %4993 = vmatmul.mubr.f32.gmra.mrb[0].mxu0 %v4879
  %v4994 = vpop.f32.mrb[0].mxu0
  %v4995 = vadd.f32 0.0, %v4994
  %v4996 = vpop.f32.mrb[0].mxu0
  %4997 = vdwg.mxu0
  %v4998 = vadd.f32 %v4873, %v4995
  %4999 = vset.pattern.permute.xlu0 40
  %5000 = vperm.xlu0 %4999, %v16
  %v5001 = vpop.permute.xlu0 %5000
  %vm5002 = vcmp.eq.s32.totalorder %v5001, %v15
  %v5003 = vsel %vm5002, 1, 0
  %v5004 = vcvt.s32.f32 %v5003
  %5005 = vrot.lane.b32.xlu0 %v23, 48
  %v5006 = vpop.permute.xlu0 %5005
  %5007 = vrot.lane.b32.xlu0 %v24, 48
  %v5008 = vpop.permute.xlu0 %5007
  %5009 = vrot.lane.b32.xlu0 %v25, 48
  %v5010 = vpop.permute.xlu0 %5009
  %5011 = vrot.lane.b32.xlu0 %v26, 48
  %v5012 = vpop.permute.xlu0 %5011
  %5013 = vrot.lane.b32.xlu0 %v27, 48
  %v5014 = vpop.permute.xlu0 %5013
  %5015 = vrot.lane.b32.xlu0 %v28, 48
  %v5016 = vpop.permute.xlu0 %5015
  %5017 = vrot.lane.b32.xlu0 %v29, 48
  %v5018 = vpop.permute.xlu0 %5017
  %5019 = vrot.lane.b32.xlu0 %v30, 48
  %v5020 = vpop.permute.xlu0 %5019
  %5021 = vrot.lane.b32.xlu0 %v31, 48
  %v5022 = vpop.permute.xlu0 %5021
  %5023 = vrot.lane.b32.xlu0 %v32, 48
  %v5024 = vpop.permute.xlu0 %5023
  %5025 = vrot.lane.b32.xlu0 %v33, 48
  %v5026 = vpop.permute.xlu0 %5025
  %5027 = vrot.lane.b32.xlu0 %v34, 48
  %v5028 = vpop.permute.xlu0 %5027
  %5029 = vrot.lane.b32.xlu0 %v35, 48
  %v5030 = vpop.permute.xlu0 %5029
  %5031 = vrot.lane.b32.xlu0 %v36, 48
  %v5032 = vpop.permute.xlu0 %5031
  %5033 = vrot.lane.b32.xlu0 %v37, 48
  %v5034 = vpop.permute.xlu0 %5033
  %5035 = vrot.lane.b32.xlu0 %v38, 48
  %v5036 = vpop.permute.xlu0 %5035
  %5053 = vmatprep.subr.mxu0 0.0
  %5054 = vmatpush1.msra.mxu0 %v5006
  %5055 = vmatprep.subr.mxu0 0.0
  %5056 = vmatpush1.msra.mxu0 %v5008
  %5057 = vmatprep.subr.mxu0 0.0
  %5058 = vmatpush1.msra.mxu0 %v5010
  %5059 = vmatprep.subr.mxu0 0.0
  %5060 = vmatpush1.msra.mxu0 %v5012
  %5061 = vmatprep.subr.mxu0 0.0
  %5062 = vmatpush1.msra.mxu0 %v5014
  %5063 = vmatprep.subr.mxu0 0.0
  %5064 = vmatpush1.msra.mxu0 %v5016
  %5065 = vmatprep.subr.mxu0 0.0
  %5066 = vmatpush1.msra.mxu0 %v5018
  %5067 = vmatprep.subr.mxu0 0.0
  %5068 = vmatpush1.msra.mxu0 %v5020
  %5069 = vmatprep.subr.mxu0 0.0
  %5070 = vmatpush1.msra.mxu0 %v5022
  %5071 = vmatprep.subr.mxu0 0.0
  %5072 = vmatpush1.msra.mxu0 %v5024
  %5073 = vmatprep.subr.mxu0 0.0
  %5074 = vmatpush1.msra.mxu0 %v5026
  %5075 = vmatprep.subr.mxu0 0.0
  %5076 = vmatpush1.msra.mxu0 %v5028
  %5077 = vmatprep.subr.mxu0 0.0
  %5078 = vmatpush1.msra.mxu0 %v5030
  %5079 = vmatprep.subr.mxu0 0.0
  %5080 = vmatpush1.msra.mxu0 %v5032
  %5081 = vmatprep.subr.mxu0 0.0
  %5082 = vmatpush1.msra.mxu0 %v5034
  %5083 = vmatprep.subr.mxu0 0.0
  %5084 = vmatpush1.msra.mxu0 %v5036
  %5085 = vmatprep.subr.mxu0 0.0
  %5086 = vmatpush1.msra.mxu0 0.0
  %5087 = vmatprep.subr.mxu0 0.0
  %5088 = vmatpush1.msra.mxu0 0.0
  %5089 = vmatprep.subr.mxu0 0.0
  %5090 = vmatpush1.msra.mxu0 0.0
  %5091 = vmatprep.subr.mxu0 0.0
  %5092 = vmatpush1.msra.mxu0 0.0
  %5093 = vmatprep.subr.mxu0 0.0
  %5094 = vmatpush1.msra.mxu0 0.0
  %5095 = vmatprep.subr.mxu0 0.0
  %5096 = vmatpush1.msra.mxu0 0.0
  %5097 = vmatprep.subr.mxu0 0.0
  %5098 = vmatpush1.msra.mxu0 0.0
  %5099 = vmatprep.subr.mxu0 0.0
  %5100 = vmatpush1.msra.mxu0 0.0
  %5101 = vmatprep.subr.mxu0 0.0
  %5102 = vmatpush1.msra.mxu0 0.0
  %5103 = vmatprep.subr.mxu0 0.0
  %5104 = vmatpush1.msra.mxu0 0.0
  %5105 = vmatprep.subr.mxu0 0.0
  %5106 = vmatpush1.msra.mxu0 0.0
  %5107 = vmatprep.subr.mxu0 0.0
  %5108 = vmatpush1.msra.mxu0 0.0
  %5109 = vmatprep.subr.mxu0 0.0
  %5110 = vmatpush1.msra.mxu0 0.0
  %5111 = vmatprep.subr.mxu0 0.0
  %5112 = vmatpush1.msra.mxu0 0.0
  %5113 = vmatprep.subr.mxu0 0.0
  %5114 = vmatpush1.msra.mxu0 0.0
  %5115 = vmatprep.subr.mxu0 0.0
  %5116 = vmatpush1.msra.mxu0 0.0
  %5117 = vmatprep.mubr.f32.mxu0 0.0
  %5118 = vmatmul.mubr.f32.gmra.mrb[0].mxu0 %v5004
  %v5119 = vpop.f32.mrb[0].mxu0
  %v5120 = vadd.f32 0.0, %v5119
  %v5121 = vpop.f32.mrb[0].mxu0
  %5122 = vdwg.mxu0
  %v5123 = vadd.f32 %v4998, %v5120
  %5124 = vset.pattern.permute.xlu0 41
  %5125 = vperm.xlu0 %5124, %v16
  %v5126 = vpop.permute.xlu0 %5125
  %vm5127 = vcmp.eq.s32.totalorder %v5126, %v15
  %v5128 = vsel %vm5127, 1, 0
  %v5129 = vcvt.s32.f32 %v5128
  %5130 = vrot.lane.b32.xlu0 %v23, 46
  %v5131 = vpop.permute.xlu0 %5130
  %5132 = vrot.lane.b32.xlu0 %v24, 46
  %v5133 = vpop.permute.xlu0 %5132
  %5134 = vrot.lane.b32.xlu0 %v25, 46
  %v5135 = vpop.permute.xlu0 %5134
  %5136 = vrot.lane.b32.xlu0 %v26, 46
  %v5137 = vpop.permute.xlu0 %5136
  %5138 = vrot.lane.b32.xlu0 %v27, 46
  %v5139 = vpop.permute.xlu0 %5138
  %5140 = vrot.lane.b32.xlu0 %v28, 46
  %v5141 = vpop.permute.xlu0 %5140
  %5142 = vrot.lane.b32.xlu0 %v29, 46
  %v5143 = vpop.permute.xlu0 %5142
  %5144 = vrot.lane.b32.xlu0 %v30, 46
  %v5145 = vpop.permute.xlu0 %5144
  %5146 = vrot.lane.b32.xlu0 %v31, 46
  %v5147 = vpop.permute.xlu0 %5146
  %5148 = vrot.lane.b32.xlu0 %v32, 46
  %v5149 = vpop.permute.xlu0 %5148
  %5150 = vrot.lane.b32.xlu0 %v33, 46
  %v5151 = vpop.permute.xlu0 %5150
  %5152 = vrot.lane.b32.xlu0 %v34, 46
  %v5153 = vpop.permute.xlu0 %5152
  %5154 = vrot.lane.b32.xlu0 %v35, 46
  %v5155 = vpop.permute.xlu0 %5154
  %5156 = vrot.lane.b32.xlu0 %v36, 46
  %v5157 = vpop.permute.xlu0 %5156
  %5158 = vrot.lane.b32.xlu0 %v37, 46
  %v5159 = vpop.permute.xlu0 %5158
  %5160 = vrot.lane.b32.xlu0 %v38, 46
  %v5161 = vpop.permute.xlu0 %5160
  %5178 = vmatprep.subr.mxu0 0.0
  %5179 = vmatpush1.msra.mxu0 %v5131
  %5180 = vmatprep.subr.mxu0 0.0
  %5181 = vmatpush1.msra.mxu0 %v5133
  %5182 = vmatprep.subr.mxu0 0.0
  %5183 = vmatpush1.msra.mxu0 %v5135
  %5184 = vmatprep.subr.mxu0 0.0
  %5185 = vmatpush1.msra.mxu0 %v5137
  %5186 = vmatprep.subr.mxu0 0.0
  %5187 = vmatpush1.msra.mxu0 %v5139
  %5188 = vmatprep.subr.mxu0 0.0
  %5189 = vmatpush1.msra.mxu0 %v5141
  %5190 = vmatprep.subr.mxu0 0.0
  %5191 = vmatpush1.msra.mxu0 %v5143
  %5192 = vmatprep.subr.mxu0 0.0
  %5193 = vmatpush1.msra.mxu0 %v5145
  %5194 = vmatprep.subr.mxu0 0.0
  %5195 = vmatpush1.msra.mxu0 %v5147
  %5196 = vmatprep.subr.mxu0 0.0
  %5197 = vmatpush1.msra.mxu0 %v5149
  %5198 = vmatprep.subr.mxu0 0.0
  %5199 = vmatpush1.msra.mxu0 %v5151
  %5200 = vmatprep.subr.mxu0 0.0
  %5201 = vmatpush1.msra.mxu0 %v5153
  %5202 = vmatprep.subr.mxu0 0.0
  %5203 = vmatpush1.msra.mxu0 %v5155
  %5204 = vmatprep.subr.mxu0 0.0
  %5205 = vmatpush1.msra.mxu0 %v5157
  %5206 = vmatprep.subr.mxu0 0.0
  %5207 = vmatpush1.msra.mxu0 %v5159
  %5208 = vmatprep.subr.mxu0 0.0
  %5209 = vmatpush1.msra.mxu0 %v5161
  %5210 = vmatprep.subr.mxu0 0.0
  %5211 = vmatpush1.msra.mxu0 0.0
  %5212 = vmatprep.subr.mxu0 0.0
  %5213 = vmatpush1.msra.mxu0 0.0
  %5214 = vmatprep.subr.mxu0 0.0
  %5215 = vmatpush1.msra.mxu0 0.0
  %5216 = vmatprep.subr.mxu0 0.0
  %5217 = vmatpush1.msra.mxu0 0.0
  %5218 = vmatprep.subr.mxu0 0.0
  %5219 = vmatpush1.msra.mxu0 0.0
  %5220 = vmatprep.subr.mxu0 0.0
  %5221 = vmatpush1.msra.mxu0 0.0
  %5222 = vmatprep.subr.mxu0 0.0
  %5223 = vmatpush1.msra.mxu0 0.0
  %5224 = vmatprep.subr.mxu0 0.0
  %5225 = vmatpush1.msra.mxu0 0.0
  %5226 = vmatprep.subr.mxu0 0.0
  %5227 = vmatpush1.msra.mxu0 0.0
  %5228 = vmatprep.subr.mxu0 0.0
  %5229 = vmatpush1.msra.mxu0 0.0
  %5230 = vmatprep.subr.mxu0 0.0
  %5231 = vmatpush1.msra.mxu0 0.0
  %5232 = vmatprep.subr.mxu0 0.0
  %5233 = vmatpush1.msra.mxu0 0.0
  %5234 = vmatprep.subr.mxu0 0.0
  %5235 = vmatpush1.msra.mxu0 0.0
  %5236 = vmatprep.subr.mxu0 0.0
  %5237 = vmatpush1.msra.mxu0 0.0
  %5238 = vmatprep.subr.mxu0 0.0
  %5239 = vmatpush1.msra.mxu0 0.0
  %5240 = vmatprep.subr.mxu0 0.0
  %5241 = vmatpush1.msra.mxu0 0.0
  %5242 = vmatprep.mubr.f32.mxu0 0.0
  %5243 = vmatmul.mubr.f32.gmra.mrb[0].mxu0 %v5129
  %v5244 = vpop.f32.mrb[0].mxu0
  %v5245 = vadd.f32 0.0, %v5244
  %v5246 = vpop.f32.mrb[0].mxu0
  %5247 = vdwg.mxu0
  %v5248 = vadd.f32 %v5123, %v5245
  %5249 = vset.pattern.permute.xlu0 42
  %5250 = vperm.xlu0 %5249, %v16
  %v5251 = vpop.permute.xlu0 %5250
  %vm5252 = vcmp.eq.s32.totalorder %v5251, %v15
  %v5253 = vsel %vm5252, 1, 0
  %v5254 = vcvt.s32.f32 %v5253
  %5255 = vrot.lane.b32.xlu0 %v23, 44
  %v5256 = vpop.permute.xlu0 %5255
  %5257 = vrot.lane.b32.xlu0 %v24, 44
  %v5258 = vpop.permute.xlu0 %5257
  %5259 = vrot.lane.b32.xlu0 %v25, 44
  %v5260 = vpop.permute.xlu0 %5259
  %5261 = vrot.lane.b32.xlu0 %v26, 44
  %v5262 = vpop.permute.xlu0 %5261
  %5263 = vrot.lane.b32.xlu0 %v27, 44
  %v5264 = vpop.permute.xlu0 %5263
  %5265 = vrot.lane.b32.xlu0 %v28, 44
  %v5266 = vpop.permute.xlu0 %5265
  %5267 = vrot.lane.b32.xlu0 %v29, 44
  %v5268 = vpop.permute.xlu0 %5267
  %5269 = vrot.lane.b32.xlu0 %v30, 44
  %v5270 = vpop.permute.xlu0 %5269
  %5271 = vrot.lane.b32.xlu0 %v31, 44
  %v5272 = vpop.permute.xlu0 %5271
  %5273 = vrot.lane.b32.xlu0 %v32, 44
  %v5274 = vpop.permute.xlu0 %5273
  %5275 = vrot.lane.b32.xlu0 %v33, 44
  %v5276 = vpop.permute.xlu0 %5275
  %5277 = vrot.lane.b32.xlu0 %v34, 44
  %v5278 = vpop.permute.xlu0 %5277
  %5279 = vrot.lane.b32.xlu0 %v35, 44
  %v5280 = vpop.permute.xlu0 %5279
  %5281 = vrot.lane.b32.xlu0 %v36, 44
  %v5282 = vpop.permute.xlu0 %5281
  %5283 = vrot.lane.b32.xlu0 %v37, 44
  %v5284 = vpop.permute.xlu0 %5283
  %5285 = vrot.lane.b32.xlu0 %v38, 44
  %v5286 = vpop.permute.xlu0 %5285
  %5303 = vmatprep.subr.mxu0 0.0
  %5304 = vmatpush1.msra.mxu0 %v5256
  %5305 = vmatprep.subr.mxu0 0.0
  %5306 = vmatpush1.msra.mxu0 %v5258
  %5307 = vmatprep.subr.mxu0 0.0
  %5308 = vmatpush1.msra.mxu0 %v5260
  %5309 = vmatprep.subr.mxu0 0.0
  %5310 = vmatpush1.msra.mxu0 %v5262
  %5311 = vmatprep.subr.mxu0 0.0
  %5312 = vmatpush1.msra.mxu0 %v5264
  %5313 = vmatprep.subr.mxu0 0.0
  %5314 = vmatpush1.msra.mxu0 %v5266
  %5315 = vmatprep.subr.mxu0 0.0
  %5316 = vmatpush1.msra.mxu0 %v5268
  %5317 = vmatprep.subr.mxu0 0.0
  %5318 = vmatpush1.msra.mxu0 %v5270
  %5319 = vmatprep.subr.mxu0 0.0
  %5320 = vmatpush1.msra.mxu0 %v5272
  %5321 = vmatprep.subr.mxu0 0.0
  %5322 = vmatpush1.msra.mxu0 %v5274
  %5323 = vmatprep.subr.mxu0 0.0
  %5324 = vmatpush1.msra.mxu0 %v5276
  %5325 = vmatprep.subr.mxu0 0.0
  %5326 = vmatpush1.msra.mxu0 %v5278
  %5327 = vmatprep.subr.mxu0 0.0
  %5328 = vmatpush1.msra.mxu0 %v5280
  %5329 = vmatprep.subr.mxu0 0.0
  %5330 = vmatpush1.msra.mxu0 %v5282
  %5331 = vmatprep.subr.mxu0 0.0
  %5332 = vmatpush1.msra.mxu0 %v5284
  %5333 = vmatprep.subr.mxu0 0.0
  %5334 = vmatpush1.msra.mxu0 %v5286
  %5335 = vmatprep.subr.mxu0 0.0
  %5336 = vmatpush1.msra.mxu0 0.0
  %5337 = vmatprep.subr.mxu0 0.0
  %5338 = vmatpush1.msra.mxu0 0.0
  %5339 = vmatprep.subr.mxu0 0.0
  %5340 = vmatpush1.msra.mxu0 0.0
  %5341 = vmatprep.subr.mxu0 0.0
  %5342 = vmatpush1.msra.mxu0 0.0
  %5343 = vmatprep.subr.mxu0 0.0
  %5344 = vmatpush1.msra.mxu0 0.0
  %5345 = vmatprep.subr.mxu0 0.0
  %5346 = vmatpush1.msra.mxu0 0.0
  %5347 = vmatprep.subr.mxu0 0.0
  %5348 = vmatpush1.msra.mxu0 0.0
  %5349 = vmatprep.subr.mxu0 0.0
  %5350 = vmatpush1.msra.mxu0 0.0
  %5351 = vmatprep.subr.mxu0 0.0
  %5352 = vmatpush1.msra.mxu0 0.0
  %5353 = vmatprep.subr.mxu0 0.0
  %5354 = vmatpush1.msra.mxu0 0.0
  %5355 = vmatprep.subr.mxu0 0.0
  %5356 = vmatpush1.msra.mxu0 0.0
  %5357 = vmatprep.subr.mxu0 0.0
  %5358 = vmatpush1.msra.mxu0 0.0
  %5359 = vmatprep.subr.mxu0 0.0
  %5360 = vmatpush1.msra.mxu0 0.0
  %5361 = vmatprep.subr.mxu0 0.0
  %5362 = vmatpush1.msra.mxu0 0.0
  %5363 = vmatprep.subr.mxu0 0.0
  %5364 = vmatpush1.msra.mxu0 0.0
  %5365 = vmatprep.subr.mxu0 0.0
  %5366 = vmatpush1.msra.mxu0 0.0
  %5367 = vmatprep.mubr.f32.mxu0 0.0
  %5368 = vmatmul.mubr.f32.gmra.mrb[0].mxu0 %v5254
  %v5369 = vpop.f32.mrb[0].mxu0
  %v5370 = vadd.f32 0.0, %v5369
  %v5371 = vpop.f32.mrb[0].mxu0
  %5372 = vdwg.mxu0
  %v5373 = vadd.f32 %v5248, %v5370
  %5374 = vset.pattern.permute.xlu0 43
  %5375 = vperm.xlu0 %5374, %v16
  %v5376 = vpop.permute.xlu0 %5375
  %vm5377 = vcmp.eq.s32.totalorder %v5376, %v15
  %v5378 = vsel %vm5377, 1, 0
  %v5379 = vcvt.s32.f32 %v5378
  %5380 = vrot.lane.b32.xlu0 %v23, 42
  %v5381 = vpop.permute.xlu0 %5380
  %5382 = vrot.lane.b32.xlu0 %v24, 42
  %v5383 = vpop.permute.xlu0 %5382
  %5384 = vrot.lane.b32.xlu0 %v25, 42
  %v5385 = vpop.permute.xlu0 %5384
  %5386 = vrot.lane.b32.xlu0 %v26, 42
  %v5387 = vpop.permute.xlu0 %5386
  %5388 = vrot.lane.b32.xlu0 %v27, 42
  %v5389 = vpop.permute.xlu0 %5388
  %5390 = vrot.lane.b32.xlu0 %v28, 42
  %v5391 = vpop.permute.xlu0 %5390
  %5392 = vrot.lane.b32.xlu0 %v29, 42
  %v5393 = vpop.permute.xlu0 %5392
  %5394 = vrot.lane.b32.xlu0 %v30, 42
  %v5395 = vpop.permute.xlu0 %5394
  %5396 = vrot.lane.b32.xlu0 %v31, 42
  %v5397 = vpop.permute.xlu0 %5396
  %5398 = vrot.lane.b32.xlu0 %v32, 42
  %v5399 = vpop.permute.xlu0 %5398
  %5400 = vrot.lane.b32.xlu0 %v33, 42
  %v5401 = vpop.permute.xlu0 %5400
  %5402 = vrot.lane.b32.xlu0 %v34, 42
  %v5403 = vpop.permute.xlu0 %5402
  %5404 = vrot.lane.b32.xlu0 %v35, 42
  %v5405 = vpop.permute.xlu0 %5404
  %5406 = vrot.lane.b32.xlu0 %v36, 42
  %v5407 = vpop.permute.xlu0 %5406
  %5408 = vrot.lane.b32.xlu0 %v37, 42
  %v5409 = vpop.permute.xlu0 %5408
  %5410 = vrot.lane.b32.xlu0 %v38, 42
  %v5411 = vpop.permute.xlu0 %5410
  %5428 = vmatprep.subr.mxu0 0.0
  %5429 = vmatpush1.msra.mxu0 %v5381
  %5430 = vmatprep.subr.mxu0 0.0
  %5431 = vmatpush1.msra.mxu0 %v5383
  %5432 = vmatprep.subr.mxu0 0.0
  %5433 = vmatpush1.msra.mxu0 %v5385
  %5434 = vmatprep.subr.mxu0 0.0
  %5435 = vmatpush1.msra.mxu0 %v5387
  %5436 = vmatprep.subr.mxu0 0.0
  %5437 = vmatpush1.msra.mxu0 %v5389
  %5438 = vmatprep.subr.mxu0 0.0
  %5439 = vmatpush1.msra.mxu0 %v5391
  %5440 = vmatprep.subr.mxu0 0.0
  %5441 = vmatpush1.msra.mxu0 %v5393
  %5442 = vmatprep.subr.mxu0 0.0
  %5443 = vmatpush1.msra.mxu0 %v5395
  %5444 = vmatprep.subr.mxu0 0.0
  %5445 = vmatpush1.msra.mxu0 %v5397
  %5446 = vmatprep.subr.mxu0 0.0
  %5447 = vmatpush1.msra.mxu0 %v5399
  %5448 = vmatprep.subr.mxu0 0.0
  %5449 = vmatpush1.msra.mxu0 %v5401
  %5450 = vmatprep.subr.mxu0 0.0
  %5451 = vmatpush1.msra.mxu0 %v5403
  %5452 = vmatprep.subr.mxu0 0.0
  %5453 = vmatpush1.msra.mxu0 %v5405
  %5454 = vmatprep.subr.mxu0 0.0
  %5455 = vmatpush1.msra.mxu0 %v5407
  %5456 = vmatprep.subr.mxu0 0.0
  %5457 = vmatpush1.msra.mxu0 %v5409
  %5458 = vmatprep.subr.mxu0 0.0
  %5459 = vmatpush1.msra.mxu0 %v5411
  %5460 = vmatprep.subr.mxu0 0.0
  %5461 = vmatpush1.msra.mxu0 0.0
  %5462 = vmatprep.subr.mxu0 0.0
  %5463 = vmatpush1.msra.mxu0 0.0
  %5464 = vmatprep.subr.mxu0 0.0
  %5465 = vmatpush1.msra.mxu0 0.0
  %5466 = vmatprep.subr.mxu0 0.0
  %5467 = vmatpush1.msra.mxu0 0.0
  %5468 = vmatprep.subr.mxu0 0.0
  %5469 = vmatpush1.msra.mxu0 0.0
  %5470 = vmatprep.subr.mxu0 0.0
  %5471 = vmatpush1.msra.mxu0 0.0
  %5472 = vmatprep.subr.mxu0 0.0
  %5473 = vmatpush1.msra.mxu0 0.0
  %5474 = vmatprep.subr.mxu0 0.0
  %5475 = vmatpush1.msra.mxu0 0.0
  %5476 = vmatprep.subr.mxu0 0.0
  %5477 = vmatpush1.msra.mxu0 0.0
  %5478 = vmatprep.subr.mxu0 0.0
  %5479 = vmatpush1.msra.mxu0 0.0
  %5480 = vmatprep.subr.mxu0 0.0
  %5481 = vmatpush1.msra.mxu0 0.0
  %5482 = vmatprep.subr.mxu0 0.0
  %5483 = vmatpush1.msra.mxu0 0.0
  %5484 = vmatprep.subr.mxu0 0.0
  %5485 = vmatpush1.msra.mxu0 0.0
  %5486 = vmatprep.subr.mxu0 0.0
  %5487 = vmatpush1.msra.mxu0 0.0
  %5488 = vmatprep.subr.mxu0 0.0
  %5489 = vmatpush1.msra.mxu0 0.0
  %5490 = vmatprep.subr.mxu0 0.0
  %5491 = vmatpush1.msra.mxu0 0.0
  %5492 = vmatprep.mubr.f32.mxu0 0.0
  %5493 = vmatmul.mubr.f32.gmra.mrb[0].mxu0 %v5379
  %v5494 = vpop.f32.mrb[0].mxu0
  %v5495 = vadd.f32 0.0, %v5494
  %v5496 = vpop.f32.mrb[0].mxu0
  %5497 = vdwg.mxu0
  %v5498 = vadd.f32 %v5373, %v5495
  %5499 = vset.pattern.permute.xlu0 44
  %5500 = vperm.xlu0 %5499, %v16
  %v5501 = vpop.permute.xlu0 %5500
  %vm5502 = vcmp.eq.s32.totalorder %v5501, %v15
  %v5503 = vsel %vm5502, 1, 0
  %v5504 = vcvt.s32.f32 %v5503
  %5505 = vrot.lane.b32.xlu0 %v23, 40
  %v5506 = vpop.permute.xlu0 %5505
  %5507 = vrot.lane.b32.xlu0 %v24, 40
  %v5508 = vpop.permute.xlu0 %5507
  %5509 = vrot.lane.b32.xlu0 %v25, 40
  %v5510 = vpop.permute.xlu0 %5509
  %5511 = vrot.lane.b32.xlu0 %v26, 40
  %v5512 = vpop.permute.xlu0 %5511
  %5513 = vrot.lane.b32.xlu0 %v27, 40
  %v5514 = vpop.permute.xlu0 %5513
  %5515 = vrot.lane.b32.xlu0 %v28, 40
  %v5516 = vpop.permute.xlu0 %5515
  %5517 = vrot.lane.b32.xlu0 %v29, 40
  %v5518 = vpop.permute.xlu0 %5517
  %5519 = vrot.lane.b32.xlu0 %v30, 40
  %v5520 = vpop.permute.xlu0 %5519
  %5521 = vrot.lane.b32.xlu0 %v31, 40
  %v5522 = vpop.permute.xlu0 %5521
  %5523 = vrot.lane.b32.xlu0 %v32, 40
  %v5524 = vpop.permute.xlu0 %5523
  %5525 = vrot.lane.b32.xlu0 %v33, 40
  %v5526 = vpop.permute.xlu0 %5525
  %5527 = vrot.lane.b32.xlu0 %v34, 40
  %v5528 = vpop.permute.xlu0 %5527
  %5529 = vrot.lane.b32.xlu0 %v35, 40
  %v5530 = vpop.permute.xlu0 %5529
  %5531 = vrot.lane.b32.xlu0 %v36, 40
  %v5532 = vpop.permute.xlu0 %5531
  %5533 = vrot.lane.b32.xlu0 %v37, 40
  %v5534 = vpop.permute.xlu0 %5533
  %5535 = vrot.lane.b32.xlu0 %v38, 40
  %v5536 = vpop.permute.xlu0 %5535
  %5553 = vmatprep.subr.mxu0 0.0
  %5554 = vmatpush1.msra.mxu0 %v5506
  %5555 = vmatprep.subr.mxu0 0.0
  %5556 = vmatpush1.msra.mxu0 %v5508
  %5557 = vmatprep.subr.mxu0 0.0
  %5558 = vmatpush1.msra.mxu0 %v5510
  %5559 = vmatprep.subr.mxu0 0.0
  %5560 = vmatpush1.msra.mxu0 %v5512
  %5561 = vmatprep.subr.mxu0 0.0
  %5562 = vmatpush1.msra.mxu0 %v5514
  %5563 = vmatprep.subr.mxu0 0.0
  %5564 = vmatpush1.msra.mxu0 %v5516
  %5565 = vmatprep.subr.mxu0 0.0
  %5566 = vmatpush1.msra.mxu0 %v5518
  %5567 = vmatprep.subr.mxu0 0.0
  %5568 = vmatpush1.msra.mxu0 %v5520
  %5569 = vmatprep.subr.mxu0 0.0
  %5570 = vmatpush1.msra.mxu0 %v5522
  %5571 = vmatprep.subr.mxu0 0.0
  %5572 = vmatpush1.msra.mxu0 %v5524
  %5573 = vmatprep.subr.mxu0 0.0
  %5574 = vmatpush1.msra.mxu0 %v5526
  %5575 = vmatprep.subr.mxu0 0.0
  %5576 = vmatpush1.msra.mxu0 %v5528
  %5577 = vmatprep.subr.mxu0 0.0
  %5578 = vmatpush1.msra.mxu0 %v5530
  %5579 = vmatprep.subr.mxu0 0.0
  %5580 = vmatpush1.msra.mxu0 %v5532
  %5581 = vmatprep.subr.mxu0 0.0
  %5582 = vmatpush1.msra.mxu0 %v5534
  %5583 = vmatprep.subr.mxu0 0.0
  %5584 = vmatpush1.msra.mxu0 %v5536
  %5585 = vmatprep.subr.mxu0 0.0
  %5586 = vmatpush1.msra.mxu0 0.0
  %5587 = vmatprep.subr.mxu0 0.0
  %5588 = vmatpush1.msra.mxu0 0.0
  %5589 = vmatprep.subr.mxu0 0.0
  %5590 = vmatpush1.msra.mxu0 0.0
  %5591 = vmatprep.subr.mxu0 0.0
  %5592 = vmatpush1.msra.mxu0 0.0
  %5593 = vmatprep.subr.mxu0 0.0
  %5594 = vmatpush1.msra.mxu0 0.0
  %5595 = vmatprep.subr.mxu0 0.0
  %5596 = vmatpush1.msra.mxu0 0.0
  %5597 = vmatprep.subr.mxu0 0.0
  %5598 = vmatpush1.msra.mxu0 0.0
  %5599 = vmatprep.subr.mxu0 0.0
  %5600 = vmatpush1.msra.mxu0 0.0
  %5601 = vmatprep.subr.mxu0 0.0
  %5602 = vmatpush1.msra.mxu0 0.0
  %5603 = vmatprep.subr.mxu0 0.0
  %5604 = vmatpush1.msra.mxu0 0.0
  %5605 = vmatprep.subr.mxu0 0.0
  %5606 = vmatpush1.msra.mxu0 0.0
  %5607 = vmatprep.subr.mxu0 0.0
  %5608 = vmatpush1.msra.mxu0 0.0
  %5609 = vmatprep.subr.mxu0 0.0
  %5610 = vmatpush1.msra.mxu0 0.0
  %5611 = vmatprep.subr.mxu0 0.0
  %5612 = vmatpush1.msra.mxu0 0.0
  %5613 = vmatprep.subr.mxu0 0.0
  %5614 = vmatpush1.msra.mxu0 0.0
  %5615 = vmatprep.subr.mxu0 0.0
  %5616 = vmatpush1.msra.mxu0 0.0
  %5617 = vmatprep.mubr.f32.mxu0 0.0
  %5618 = vmatmul.mubr.f32.gmra.mrb[0].mxu0 %v5504
  %v5619 = vpop.f32.mrb[0].mxu0
  %v5620 = vadd.f32 0.0, %v5619
  %v5621 = vpop.f32.mrb[0].mxu0
  %5622 = vdwg.mxu0
  %v5623 = vadd.f32 %v5498, %v5620
  %5624 = vset.pattern.permute.xlu0 45
  %5625 = vperm.xlu0 %5624, %v16
  %v5626 = vpop.permute.xlu0 %5625
  %vm5627 = vcmp.eq.s32.totalorder %v5626, %v15
  %v5628 = vsel %vm5627, 1, 0
  %v5629 = vcvt.s32.f32 %v5628
  %5630 = vrot.lane.b32.xlu0 %v23, 38
  %v5631 = vpop.permute.xlu0 %5630
  %5632 = vrot.lane.b32.xlu0 %v24, 38
  %v5633 = vpop.permute.xlu0 %5632
  %5634 = vrot.lane.b32.xlu0 %v25, 38
  %v5635 = vpop.permute.xlu0 %5634
  %5636 = vrot.lane.b32.xlu0 %v26, 38
  %v5637 = vpop.permute.xlu0 %5636
  %5638 = vrot.lane.b32.xlu0 %v27, 38
  %v5639 = vpop.permute.xlu0 %5638
  %5640 = vrot.lane.b32.xlu0 %v28, 38
  %v5641 = vpop.permute.xlu0 %5640
  %5642 = vrot.lane.b32.xlu0 %v29, 38
  %v5643 = vpop.permute.xlu0 %5642
  %5644 = vrot.lane.b32.xlu0 %v30, 38
  %v5645 = vpop.permute.xlu0 %5644
  %5646 = vrot.lane.b32.xlu0 %v31, 38
  %v5647 = vpop.permute.xlu0 %5646
  %5648 = vrot.lane.b32.xlu0 %v32, 38
  %v5649 = vpop.permute.xlu0 %5648
  %5650 = vrot.lane.b32.xlu0 %v33, 38
  %v5651 = vpop.permute.xlu0 %5650
  %5652 = vrot.lane.b32.xlu0 %v34, 38
  %v5653 = vpop.permute.xlu0 %5652
  %5654 = vrot.lane.b32.xlu0 %v35, 38
  %v5655 = vpop.permute.xlu0 %5654
  %5656 = vrot.lane.b32.xlu0 %v36, 38
  %v5657 = vpop.permute.xlu0 %5656
  %5658 = vrot.lane.b32.xlu0 %v37, 38
  %v5659 = vpop.permute.xlu0 %5658
  %5660 = vrot.lane.b32.xlu0 %v38, 38
  %v5661 = vpop.permute.xlu0 %5660
  %5678 = vmatprep.subr.mxu0 0.0
  %5679 = vmatpush1.msra.mxu0 %v5631
  %5680 = vmatprep.subr.mxu0 0.0
  %5681 = vmatpush1.msra.mxu0 %v5633
  %5682 = vmatprep.subr.mxu0 0.0
  %5683 = vmatpush1.msra.mxu0 %v5635
  %5684 = vmatprep.subr.mxu0 0.0
  %5685 = vmatpush1.msra.mxu0 %v5637
  %5686 = vmatprep.subr.mxu0 0.0
  %5687 = vmatpush1.msra.mxu0 %v5639
  %5688 = vmatprep.subr.mxu0 0.0
  %5689 = vmatpush1.msra.mxu0 %v5641
  %5690 = vmatprep.subr.mxu0 0.0
  %5691 = vmatpush1.msra.mxu0 %v5643
  %5692 = vmatprep.subr.mxu0 0.0
  %5693 = vmatpush1.msra.mxu0 %v5645
  %5694 = vmatprep.subr.mxu0 0.0
  %5695 = vmatpush1.msra.mxu0 %v5647
  %5696 = vmatprep.subr.mxu0 0.0
  %5697 = vmatpush1.msra.mxu0 %v5649
  %5698 = vmatprep.subr.mxu0 0.0
  %5699 = vmatpush1.msra.mxu0 %v5651
  %5700 = vmatprep.subr.mxu0 0.0
  %5701 = vmatpush1.msra.mxu0 %v5653
  %5702 = vmatprep.subr.mxu0 0.0
  %5703 = vmatpush1.msra.mxu0 %v5655
  %5704 = vmatprep.subr.mxu0 0.0
  %5705 = vmatpush1.msra.mxu0 %v5657
  %5706 = vmatprep.subr.mxu0 0.0
  %5707 = vmatpush1.msra.mxu0 %v5659
  %5708 = vmatprep.subr.mxu0 0.0
  %5709 = vmatpush1.msra.mxu0 %v5661
  %5710 = vmatprep.subr.mxu0 0.0
  %5711 = vmatpush1.msra.mxu0 0.0
  %5712 = vmatprep.subr.mxu0 0.0
  %5713 = vmatpush1.msra.mxu0 0.0
  %5714 = vmatprep.subr.mxu0 0.0
  %5715 = vmatpush1.msra.mxu0 0.0
  %5716 = vmatprep.subr.mxu0 0.0
  %5717 = vmatpush1.msra.mxu0 0.0
  %5718 = vmatprep.subr.mxu0 0.0
  %5719 = vmatpush1.msra.mxu0 0.0
  %5720 = vmatprep.subr.mxu0 0.0
  %5721 = vmatpush1.msra.mxu0 0.0
  %5722 = vmatprep.subr.mxu0 0.0
  %5723 = vmatpush1.msra.mxu0 0.0
  %5724 = vmatprep.subr.mxu0 0.0
  %5725 = vmatpush1.msra.mxu0 0.0
  %5726 = vmatprep.subr.mxu0 0.0
  %5727 = vmatpush1.msra.mxu0 0.0
  %5728 = vmatprep.subr.mxu0 0.0
  %5729 = vmatpush1.msra.mxu0 0.0
  %5730 = vmatprep.subr.mxu0 0.0
  %5731 = vmatpush1.msra.mxu0 0.0
  %5732 = vmatprep.subr.mxu0 0.0
  %5733 = vmatpush1.msra.mxu0 0.0
  %5734 = vmatprep.subr.mxu0 0.0
  %5735 = vmatpush1.msra.mxu0 0.0
  %5736 = vmatprep.subr.mxu0 0.0
  %5737 = vmatpush1.msra.mxu0 0.0
  %5738 = vmatprep.subr.mxu0 0.0
  %5739 = vmatpush1.msra.mxu0 0.0
  %5740 = vmatprep.subr.mxu0 0.0
  %5741 = vmatpush1.msra.mxu0 0.0
  %5742 = vmatprep.mubr.f32.mxu0 0.0
  %5743 = vmatmul.mubr.f32.gmra.mrb[0].mxu0 %v5629
  %v5744 = vpop.f32.mrb[0].mxu0
  %v5745 = vadd.f32 0.0, %v5744
  %v5746 = vpop.f32.mrb[0].mxu0
  %5747 = vdwg.mxu0
  %v5748 = vadd.f32 %v5623, %v5745
  %5749 = vset.pattern.permute.xlu0 46
  %5750 = vperm.xlu0 %5749, %v16
  %v5751 = vpop.permute.xlu0 %5750
  %vm5752 = vcmp.eq.s32.totalorder %v5751, %v15
  %v5753 = vsel %vm5752, 1, 0
  %v5754 = vcvt.s32.f32 %v5753
  %5755 = vrot.lane.b32.xlu0 %v23, 36
  %v5756 = vpop.permute.xlu0 %5755
  %5757 = vrot.lane.b32.xlu0 %v24, 36
  %v5758 = vpop.permute.xlu0 %5757
  %5759 = vrot.lane.b32.xlu0 %v25, 36
  %v5760 = vpop.permute.xlu0 %5759
  %5761 = vrot.lane.b32.xlu0 %v26, 36
  %v5762 = vpop.permute.xlu0 %5761
  %5763 = vrot.lane.b32.xlu0 %v27, 36
  %v5764 = vpop.permute.xlu0 %5763
  %5765 = vrot.lane.b32.xlu0 %v28, 36
  %v5766 = vpop.permute.xlu0 %5765
  %5767 = vrot.lane.b32.xlu0 %v29, 36
  %v5768 = vpop.permute.xlu0 %5767
  %5769 = vrot.lane.b32.xlu0 %v30, 36
  %v5770 = vpop.permute.xlu0 %5769
  %5771 = vrot.lane.b32.xlu0 %v31, 36
  %v5772 = vpop.permute.xlu0 %5771
  %5773 = vrot.lane.b32.xlu0 %v32, 36
  %v5774 = vpop.permute.xlu0 %5773
  %5775 = vrot.lane.b32.xlu0 %v33, 36
  %v5776 = vpop.permute.xlu0 %5775
  %5777 = vrot.lane.b32.xlu0 %v34, 36
  %v5778 = vpop.permute.xlu0 %5777
  %5779 = vrot.lane.b32.xlu0 %v35, 36
  %v5780 = vpop.permute.xlu0 %5779
  %5781 = vrot.lane.b32.xlu0 %v36, 36
  %v5782 = vpop.permute.xlu0 %5781
  %5783 = vrot.lane.b32.xlu0 %v37, 36
  %v5784 = vpop.permute.xlu0 %5783
  %5785 = vrot.lane.b32.xlu0 %v38, 36
  %v5786 = vpop.permute.xlu0 %5785
  %5803 = vmatprep.subr.mxu0 0.0
  %5804 = vmatpush1.msra.mxu0 %v5756
  %5805 = vmatprep.subr.mxu0 0.0
  %5806 = vmatpush1.msra.mxu0 %v5758
  %5807 = vmatprep.subr.mxu0 0.0
  %5808 = vmatpush1.msra.mxu0 %v5760
  %5809 = vmatprep.subr.mxu0 0.0
  %5810 = vmatpush1.msra.mxu0 %v5762
  %5811 = vmatprep.subr.mxu0 0.0
  %5812 = vmatpush1.msra.mxu0 %v5764
  %5813 = vmatprep.subr.mxu0 0.0
  %5814 = vmatpush1.msra.mxu0 %v5766
  %5815 = vmatprep.subr.mxu0 0.0
  %5816 = vmatpush1.msra.mxu0 %v5768
  %5817 = vmatprep.subr.mxu0 0.0
  %5818 = vmatpush1.msra.mxu0 %v5770
  %5819 = vmatprep.subr.mxu0 0.0
  %5820 = vmatpush1.msra.mxu0 %v5772
  %5821 = vmatprep.subr.mxu0 0.0
  %5822 = vmatpush1.msra.mxu0 %v5774
  %5823 = vmatprep.subr.mxu0 0.0
  %5824 = vmatpush1.msra.mxu0 %v5776
  %5825 = vmatprep.subr.mxu0 0.0
  %5826 = vmatpush1.msra.mxu0 %v5778
  %5827 = vmatprep.subr.mxu0 0.0
  %5828 = vmatpush1.msra.mxu0 %v5780
  %5829 = vmatprep.subr.mxu0 0.0
  %5830 = vmatpush1.msra.mxu0 %v5782
  %5831 = vmatprep.subr.mxu0 0.0
  %5832 = vmatpush1.msra.mxu0 %v5784
  %5833 = vmatprep.subr.mxu0 0.0
  %5834 = vmatpush1.msra.mxu0 %v5786
  %5835 = vmatprep.subr.mxu0 0.0
  %5836 = vmatpush1.msra.mxu0 0.0
  %5837 = vmatprep.subr.mxu0 0.0
  %5838 = vmatpush1.msra.mxu0 0.0
  %5839 = vmatprep.subr.mxu0 0.0
  %5840 = vmatpush1.msra.mxu0 0.0
  %5841 = vmatprep.subr.mxu0 0.0
  %5842 = vmatpush1.msra.mxu0 0.0
  %5843 = vmatprep.subr.mxu0 0.0
  %5844 = vmatpush1.msra.mxu0 0.0
  %5845 = vmatprep.subr.mxu0 0.0
  %5846 = vmatpush1.msra.mxu0 0.0
  %5847 = vmatprep.subr.mxu0 0.0
  %5848 = vmatpush1.msra.mxu0 0.0
  %5849 = vmatprep.subr.mxu0 0.0
  %5850 = vmatpush1.msra.mxu0 0.0
  %5851 = vmatprep.subr.mxu0 0.0
  %5852 = vmatpush1.msra.mxu0 0.0
  %5853 = vmatprep.subr.mxu0 0.0
  %5854 = vmatpush1.msra.mxu0 0.0
  %5855 = vmatprep.subr.mxu0 0.0
  %5856 = vmatpush1.msra.mxu0 0.0
  %5857 = vmatprep.subr.mxu0 0.0
  %5858 = vmatpush1.msra.mxu0 0.0
  %5859 = vmatprep.subr.mxu0 0.0
  %5860 = vmatpush1.msra.mxu0 0.0
  %5861 = vmatprep.subr.mxu0 0.0
  %5862 = vmatpush1.msra.mxu0 0.0
  %5863 = vmatprep.subr.mxu0 0.0
  %5864 = vmatpush1.msra.mxu0 0.0
  %5865 = vmatprep.subr.mxu0 0.0
  %5866 = vmatpush1.msra.mxu0 0.0
  %5867 = vmatprep.mubr.f32.mxu0 0.0
  %5868 = vmatmul.mubr.f32.gmra.mrb[0].mxu0 %v5754
  %v5869 = vpop.f32.mrb[0].mxu0
  %v5870 = vadd.f32 0.0, %v5869
  %v5871 = vpop.f32.mrb[0].mxu0
  %5872 = vdwg.mxu0
  %v5873 = vadd.f32 %v5748, %v5870
  %5874 = vset.pattern.permute.xlu0 47
  %5875 = vperm.xlu0 %5874, %v16
  %v5876 = vpop.permute.xlu0 %5875
  %vm5877 = vcmp.eq.s32.totalorder %v5876, %v15
  %v5878 = vsel %vm5877, 1, 0
  %v5879 = vcvt.s32.f32 %v5878
  %5880 = vrot.lane.b32.xlu0 %v23, 34
  %v5881 = vpop.permute.xlu0 %5880
  %5882 = vrot.lane.b32.xlu0 %v24, 34
  %v5883 = vpop.permute.xlu0 %5882
  %5884 = vrot.lane.b32.xlu0 %v25, 34
  %v5885 = vpop.permute.xlu0 %5884
  %5886 = vrot.lane.b32.xlu0 %v26, 34
  %v5887 = vpop.permute.xlu0 %5886
  %5888 = vrot.lane.b32.xlu0 %v27, 34
  %v5889 = vpop.permute.xlu0 %5888
  %5890 = vrot.lane.b32.xlu0 %v28, 34
  %v5891 = vpop.permute.xlu0 %5890
  %5892 = vrot.lane.b32.xlu0 %v29, 34
  %v5893 = vpop.permute.xlu0 %5892
  %5894 = vrot.lane.b32.xlu0 %v30, 34
  %v5895 = vpop.permute.xlu0 %5894
  %5896 = vrot.lane.b32.xlu0 %v31, 34
  %v5897 = vpop.permute.xlu0 %5896
  %5898 = vrot.lane.b32.xlu0 %v32, 34
  %v5899 = vpop.permute.xlu0 %5898
  %5900 = vrot.lane.b32.xlu0 %v33, 34
  %v5901 = vpop.permute.xlu0 %5900
  %5902 = vrot.lane.b32.xlu0 %v34, 34
  %v5903 = vpop.permute.xlu0 %5902
  %5904 = vrot.lane.b32.xlu0 %v35, 34
  %v5905 = vpop.permute.xlu0 %5904
  %5906 = vrot.lane.b32.xlu0 %v36, 34
  %v5907 = vpop.permute.xlu0 %5906
  %5908 = vrot.lane.b32.xlu0 %v37, 34
  %v5909 = vpop.permute.xlu0 %5908
  %5910 = vrot.lane.b32.xlu0 %v38, 34
  %v5911 = vpop.permute.xlu0 %5910
  %5928 = vmatprep.subr.mxu0 0.0
  %5929 = vmatpush1.msra.mxu0 %v5881
  %5930 = vmatprep.subr.mxu0 0.0
  %5931 = vmatpush1.msra.mxu0 %v5883
  %5932 = vmatprep.subr.mxu0 0.0
  %5933 = vmatpush1.msra.mxu0 %v5885
  %5934 = vmatprep.subr.mxu0 0.0
  %5935 = vmatpush1.msra.mxu0 %v5887
  %5936 = vmatprep.subr.mxu0 0.0
  %5937 = vmatpush1.msra.mxu0 %v5889
  %5938 = vmatprep.subr.mxu0 0.0
  %5939 = vmatpush1.msra.mxu0 %v5891
  %5940 = vmatprep.subr.mxu0 0.0
  %5941 = vmatpush1.msra.mxu0 %v5893
  %5942 = vmatprep.subr.mxu0 0.0
  %5943 = vmatpush1.msra.mxu0 %v5895
  %5944 = vmatprep.subr.mxu0 0.0
  %5945 = vmatpush1.msra.mxu0 %v5897
  %5946 = vmatprep.subr.mxu0 0.0
  %5947 = vmatpush1.msra.mxu0 %v5899
  %5948 = vmatprep.subr.mxu0 0.0
  %5949 = vmatpush1.msra.mxu0 %v5901
  %5950 = vmatprep.subr.mxu0 0.0
  %5951 = vmatpush1.msra.mxu0 %v5903
  %5952 = vmatprep.subr.mxu0 0.0
  %5953 = vmatpush1.msra.mxu0 %v5905
  %5954 = vmatprep.subr.mxu0 0.0
  %5955 = vmatpush1.msra.mxu0 %v5907
  %5956 = vmatprep.subr.mxu0 0.0
  %5957 = vmatpush1.msra.mxu0 %v5909
  %5958 = vmatprep.subr.mxu0 0.0
  %5959 = vmatpush1.msra.mxu0 %v5911
  %5960 = vmatprep.subr.mxu0 0.0
  %5961 = vmatpush1.msra.mxu0 0.0
  %5962 = vmatprep.subr.mxu0 0.0
  %5963 = vmatpush1.msra.mxu0 0.0
  %5964 = vmatprep.subr.mxu0 0.0
  %5965 = vmatpush1.msra.mxu0 0.0
  %5966 = vmatprep.subr.mxu0 0.0
  %5967 = vmatpush1.msra.mxu0 0.0
  %5968 = vmatprep.subr.mxu0 0.0
  %5969 = vmatpush1.msra.mxu0 0.0
  %5970 = vmatprep.subr.mxu0 0.0
  %5971 = vmatpush1.msra.mxu0 0.0
  %5972 = vmatprep.subr.mxu0 0.0
  %5973 = vmatpush1.msra.mxu0 0.0
  %5974 = vmatprep.subr.mxu0 0.0
  %5975 = vmatpush1.msra.mxu0 0.0
  %5976 = vmatprep.subr.mxu0 0.0
  %5977 = vmatpush1.msra.mxu0 0.0
  %5978 = vmatprep.subr.mxu0 0.0
  %5979 = vmatpush1.msra.mxu0 0.0
  %5980 = vmatprep.subr.mxu0 0.0
  %5981 = vmatpush1.msra.mxu0 0.0
  %5982 = vmatprep.subr.mxu0 0.0
  %5983 = vmatpush1.msra.mxu0 0.0
  %5984 = vmatprep.subr.mxu0 0.0
  %5985 = vmatpush1.msra.mxu0 0.0
  %5986 = vmatprep.subr.mxu0 0.0
  %5987 = vmatpush1.msra.mxu0 0.0
  %5988 = vmatprep.subr.mxu0 0.0
  %5989 = vmatpush1.msra.mxu0 0.0
  %5990 = vmatprep.subr.mxu0 0.0
  %5991 = vmatpush1.msra.mxu0 0.0
  %5992 = vmatprep.mubr.f32.mxu0 0.0
  %5993 = vmatmul.mubr.f32.gmra.mrb[0].mxu0 %v5879
  %v5994 = vpop.f32.mrb[0].mxu0
  %v5995 = vadd.f32 0.0, %v5994
  %v5996 = vpop.f32.mrb[0].mxu0
  %5997 = vdwg.mxu0
  %v5998 = vadd.f32 %v5873, %v5995
  %5999 = vset.pattern.permute.xlu0 48
  %6000 = vperm.xlu0 %5999, %v16
  %v6001 = vpop.permute.xlu0 %6000
  %vm6002 = vcmp.eq.s32.totalorder %v6001, %v15
  %v6003 = vsel %vm6002, 1, 0
  %v6004 = vcvt.s32.f32 %v6003
  %6005 = vrot.lane.b32.xlu0 %v23, 32
  %v6006 = vpop.permute.xlu0 %6005
  %6007 = vrot.lane.b32.xlu0 %v24, 32
  %v6008 = vpop.permute.xlu0 %6007
  %6009 = vrot.lane.b32.xlu0 %v25, 32
  %v6010 = vpop.permute.xlu0 %6009
  %6011 = vrot.lane.b32.xlu0 %v26, 32
  %v6012 = vpop.permute.xlu0 %6011
  %6013 = vrot.lane.b32.xlu0 %v27, 32
  %v6014 = vpop.permute.xlu0 %6013
  %6015 = vrot.lane.b32.xlu0 %v28, 32
  %v6016 = vpop.permute.xlu0 %6015
  %6017 = vrot.lane.b32.xlu0 %v29, 32
  %v6018 = vpop.permute.xlu0 %6017
  %6019 = vrot.lane.b32.xlu0 %v30, 32
  %v6020 = vpop.permute.xlu0 %6019
  %6021 = vrot.lane.b32.xlu0 %v31, 32
  %v6022 = vpop.permute.xlu0 %6021
  %6023 = vrot.lane.b32.xlu0 %v32, 32
  %v6024 = vpop.permute.xlu0 %6023
  %6025 = vrot.lane.b32.xlu0 %v33, 32
  %v6026 = vpop.permute.xlu0 %6025
  %6027 = vrot.lane.b32.xlu0 %v34, 32
  %v6028 = vpop.permute.xlu0 %6027
  %6029 = vrot.lane.b32.xlu0 %v35, 32
  %v6030 = vpop.permute.xlu0 %6029
  %6031 = vrot.lane.b32.xlu0 %v36, 32
  %v6032 = vpop.permute.xlu0 %6031
  %6033 = vrot.lane.b32.xlu0 %v37, 32
  %v6034 = vpop.permute.xlu0 %6033
  %6035 = vrot.lane.b32.xlu0 %v38, 32
  %v6036 = vpop.permute.xlu0 %6035
  %6053 = vmatprep.subr.mxu0 0.0
  %6054 = vmatpush1.msra.mxu0 %v6006
  %6055 = vmatprep.subr.mxu0 0.0
  %6056 = vmatpush1.msra.mxu0 %v6008
  %6057 = vmatprep.subr.mxu0 0.0
  %6058 = vmatpush1.msra.mxu0 %v6010
  %6059 = vmatprep.subr.mxu0 0.0
  %6060 = vmatpush1.msra.mxu0 %v6012
  %6061 = vmatprep.subr.mxu0 0.0
  %6062 = vmatpush1.msra.mxu0 %v6014
  %6063 = vmatprep.subr.mxu0 0.0
  %6064 = vmatpush1.msra.mxu0 %v6016
  %6065 = vmatprep.subr.mxu0 0.0
  %6066 = vmatpush1.msra.mxu0 %v6018
  %6067 = vmatprep.subr.mxu0 0.0
  %6068 = vmatpush1.msra.mxu0 %v6020
  %6069 = vmatprep.subr.mxu0 0.0
  %6070 = vmatpush1.msra.mxu0 %v6022
  %6071 = vmatprep.subr.mxu0 0.0
  %6072 = vmatpush1.msra.mxu0 %v6024
  %6073 = vmatprep.subr.mxu0 0.0
  %6074 = vmatpush1.msra.mxu0 %v6026
  %6075 = vmatprep.subr.mxu0 0.0
  %6076 = vmatpush1.msra.mxu0 %v6028
  %6077 = vmatprep.subr.mxu0 0.0
  %6078 = vmatpush1.msra.mxu0 %v6030
  %6079 = vmatprep.subr.mxu0 0.0
  %6080 = vmatpush1.msra.mxu0 %v6032
  %6081 = vmatprep.subr.mxu0 0.0
  %6082 = vmatpush1.msra.mxu0 %v6034
  %6083 = vmatprep.subr.mxu0 0.0
  %6084 = vmatpush1.msra.mxu0 %v6036
  %6085 = vmatprep.subr.mxu0 0.0
  %6086 = vmatpush1.msra.mxu0 0.0
  %6087 = vmatprep.subr.mxu0 0.0
  %6088 = vmatpush1.msra.mxu0 0.0
  %6089 = vmatprep.subr.mxu0 0.0
  %6090 = vmatpush1.msra.mxu0 0.0
  %6091 = vmatprep.subr.mxu0 0.0
  %6092 = vmatpush1.msra.mxu0 0.0
  %6093 = vmatprep.subr.mxu0 0.0
  %6094 = vmatpush1.msra.mxu0 0.0
  %6095 = vmatprep.subr.mxu0 0.0
  %6096 = vmatpush1.msra.mxu0 0.0
  %6097 = vmatprep.subr.mxu0 0.0
  %6098 = vmatpush1.msra.mxu0 0.0
  %6099 = vmatprep.subr.mxu0 0.0
  %6100 = vmatpush1.msra.mxu0 0.0
  %6101 = vmatprep.subr.mxu0 0.0
  %6102 = vmatpush1.msra.mxu0 0.0
  %6103 = vmatprep.subr.mxu0 0.0
  %6104 = vmatpush1.msra.mxu0 0.0
  %6105 = vmatprep.subr.mxu0 0.0
  %6106 = vmatpush1.msra.mxu0 0.0
  %6107 = vmatprep.subr.mxu0 0.0
  %6108 = vmatpush1.msra.mxu0 0.0
  %6109 = vmatprep.subr.mxu0 0.0
  %6110 = vmatpush1.msra.mxu0 0.0
  %6111 = vmatprep.subr.mxu0 0.0
  %6112 = vmatpush1.msra.mxu0 0.0
  %6113 = vmatprep.subr.mxu0 0.0
  %6114 = vmatpush1.msra.mxu0 0.0
  %6115 = vmatprep.subr.mxu0 0.0
  %6116 = vmatpush1.msra.mxu0 0.0
  %6117 = vmatprep.mubr.f32.mxu0 0.0
  %6118 = vmatmul.mubr.f32.gmra.mrb[0].mxu0 %v6004
  %v6119 = vpop.f32.mrb[0].mxu0
  %v6120 = vadd.f32 0.0, %v6119
  %v6121 = vpop.f32.mrb[0].mxu0
  %6122 = vdwg.mxu0
  %v6123 = vadd.f32 %v5998, %v6120
  %6124 = vset.pattern.permute.xlu0 49
  %6125 = vperm.xlu0 %6124, %v16
  %v6126 = vpop.permute.xlu0 %6125
  %vm6127 = vcmp.eq.s32.totalorder %v6126, %v15
  %v6128 = vsel %vm6127, 1, 0
  %v6129 = vcvt.s32.f32 %v6128
  %6130 = vrot.lane.b32.xlu0 %v23, 30
  %v6131 = vpop.permute.xlu0 %6130
  %6132 = vrot.lane.b32.xlu0 %v24, 30
  %v6133 = vpop.permute.xlu0 %6132
  %6134 = vrot.lane.b32.xlu0 %v25, 30
  %v6135 = vpop.permute.xlu0 %6134
  %6136 = vrot.lane.b32.xlu0 %v26, 30
  %v6137 = vpop.permute.xlu0 %6136
  %6138 = vrot.lane.b32.xlu0 %v27, 30
  %v6139 = vpop.permute.xlu0 %6138
  %6140 = vrot.lane.b32.xlu0 %v28, 30
  %v6141 = vpop.permute.xlu0 %6140
  %6142 = vrot.lane.b32.xlu0 %v29, 30
  %v6143 = vpop.permute.xlu0 %6142
  %6144 = vrot.lane.b32.xlu0 %v30, 30
  %v6145 = vpop.permute.xlu0 %6144
  %6146 = vrot.lane.b32.xlu0 %v31, 30
  %v6147 = vpop.permute.xlu0 %6146
  %6148 = vrot.lane.b32.xlu0 %v32, 30
  %v6149 = vpop.permute.xlu0 %6148
  %6150 = vrot.lane.b32.xlu0 %v33, 30
  %v6151 = vpop.permute.xlu0 %6150
  %6152 = vrot.lane.b32.xlu0 %v34, 30
  %v6153 = vpop.permute.xlu0 %6152
  %6154 = vrot.lane.b32.xlu0 %v35, 30
  %v6155 = vpop.permute.xlu0 %6154
  %6156 = vrot.lane.b32.xlu0 %v36, 30
  %v6157 = vpop.permute.xlu0 %6156
  %6158 = vrot.lane.b32.xlu0 %v37, 30
  %v6159 = vpop.permute.xlu0 %6158
  %6160 = vrot.lane.b32.xlu0 %v38, 30
  %v6161 = vpop.permute.xlu0 %6160
  %6178 = vmatprep.subr.mxu0 0.0
  %6179 = vmatpush1.msra.mxu0 %v6131
  %6180 = vmatprep.subr.mxu0 0.0
  %6181 = vmatpush1.msra.mxu0 %v6133
  %6182 = vmatprep.subr.mxu0 0.0
  %6183 = vmatpush1.msra.mxu0 %v6135
  %6184 = vmatprep.subr.mxu0 0.0
  %6185 = vmatpush1.msra.mxu0 %v6137
  %6186 = vmatprep.subr.mxu0 0.0
  %6187 = vmatpush1.msra.mxu0 %v6139
  %6188 = vmatprep.subr.mxu0 0.0
  %6189 = vmatpush1.msra.mxu0 %v6141
  %6190 = vmatprep.subr.mxu0 0.0
  %6191 = vmatpush1.msra.mxu0 %v6143
  %6192 = vmatprep.subr.mxu0 0.0
  %6193 = vmatpush1.msra.mxu0 %v6145
  %6194 = vmatprep.subr.mxu0 0.0
  %6195 = vmatpush1.msra.mxu0 %v6147
  %6196 = vmatprep.subr.mxu0 0.0
  %6197 = vmatpush1.msra.mxu0 %v6149
  %6198 = vmatprep.subr.mxu0 0.0
  %6199 = vmatpush1.msra.mxu0 %v6151
  %6200 = vmatprep.subr.mxu0 0.0
  %6201 = vmatpush1.msra.mxu0 %v6153
  %6202 = vmatprep.subr.mxu0 0.0
  %6203 = vmatpush1.msra.mxu0 %v6155
  %6204 = vmatprep.subr.mxu0 0.0
  %6205 = vmatpush1.msra.mxu0 %v6157
  %6206 = vmatprep.subr.mxu0 0.0
  %6207 = vmatpush1.msra.mxu0 %v6159
  %6208 = vmatprep.subr.mxu0 0.0
  %6209 = vmatpush1.msra.mxu0 %v6161
  %6210 = vmatprep.subr.mxu0 0.0
  %6211 = vmatpush1.msra.mxu0 0.0
  %6212 = vmatprep.subr.mxu0 0.0
  %6213 = vmatpush1.msra.mxu0 0.0
  %6214 = vmatprep.subr.mxu0 0.0
  %6215 = vmatpush1.msra.mxu0 0.0
  %6216 = vmatprep.subr.mxu0 0.0
  %6217 = vmatpush1.msra.mxu0 0.0
  %6218 = vmatprep.subr.mxu0 0.0
  %6219 = vmatpush1.msra.mxu0 0.0
  %6220 = vmatprep.subr.mxu0 0.0
  %6221 = vmatpush1.msra.mxu0 0.0
  %6222 = vmatprep.subr.mxu0 0.0
  %6223 = vmatpush1.msra.mxu0 0.0
  %6224 = vmatprep.subr.mxu0 0.0
  %6225 = vmatpush1.msra.mxu0 0.0
  %6226 = vmatprep.subr.mxu0 0.0
  %6227 = vmatpush1.msra.mxu0 0.0
  %6228 = vmatprep.subr.mxu0 0.0
  %6229 = vmatpush1.msra.mxu0 0.0
  %6230 = vmatprep.subr.mxu0 0.0
  %6231 = vmatpush1.msra.mxu0 0.0
  %6232 = vmatprep.subr.mxu0 0.0
  %6233 = vmatpush1.msra.mxu0 0.0
  %6234 = vmatprep.subr.mxu0 0.0
  %6235 = vmatpush1.msra.mxu0 0.0
  %6236 = vmatprep.subr.mxu0 0.0
  %6237 = vmatpush1.msra.mxu0 0.0
  %6238 = vmatprep.subr.mxu0 0.0
  %6239 = vmatpush1.msra.mxu0 0.0
  %6240 = vmatprep.subr.mxu0 0.0
  %6241 = vmatpush1.msra.mxu0 0.0
  %6242 = vmatprep.mubr.f32.mxu0 0.0
  %6243 = vmatmul.mubr.f32.gmra.mrb[0].mxu0 %v6129
  %v6244 = vpop.f32.mrb[0].mxu0
  %v6245 = vadd.f32 0.0, %v6244
  %v6246 = vpop.f32.mrb[0].mxu0
  %6247 = vdwg.mxu0
  %v6248 = vadd.f32 %v6123, %v6245
  %v6249 = vld [vmem:[%s2] sm:$0x1]
  %v6251 = vlaneseq
  %v6252 = vshrl.u32 %v6251, 7
  %v6253 = vsub.s32 0, %v6252
  %v6254 = vrot.slane %v6249, %v6253
  %v6256 = vadd.f32 %v6248, %v6254
  %vm6257 = vcmask 15360
  %6258 = vst.msk [vmem:[%s3] sm:$0xff] %vm6257, %v6256
  // Predicated region
  $region14: #{tpu_custom_call.1} parent=0 // pred_check
    _
  $region15: #{tpu_custom_call.1} parent=0 // pred_check_branch
    %6260 = sbr.rel (0) target = $region17
  $region16: #{tpu_custom_call.1} parent=0 // pred_region
    _
  $region17: #{tpu_custom_call.1} parent=0 // pred_fallthru
    _
  // Predicated region
  $region18: #{tpu_custom_call.1} parent=0 // pred_check
    _
  $region19: #{tpu_custom_call.1} parent=0 // pred_check_branch
    %6262 = sbr.rel (0) target = $region21
  $region20: #{tpu_custom_call.1} parent=0 // pred_region
    _
  $region21: #{tpu_custom_call.1} parent=0 // pred_fallthru
    _

</llo_original>
